<compile_context>
chip_gen: v6e
topology: v6e:2x2x1
jax: 0.10.0
libtpu: 0.0.40
codegen_flags: <defaults>
</compile_context>

<pallas_src>
import functools

import jax
import jax.numpy as jnp
from jax import lax
from jax.experimental import pallas as pl
from jax.experimental.pallas import tpu as pltpu


# ----------------------------- kernel helpers ------------------------------

def _ct(a, b):
    # a @ b.T without materializing a transpose (contract last dims, MXU).
    return lax.dot_general(a, b, (((1,), (1,)), ((), ())),
                           preferred_element_type=jnp.float32)


# ------------------------------- kernels -----------------------------------

def rho_emb_kernel(a_ref, g_ref):
    """G = E(L) E(L)^T / trace(L L^H)  -- real 2d x 2d embedding of rho."""
    a = a_ref[...]                                      # (2d, 2d)
    # trace(L L^H) = ||L||_F^2 = 0.5 * ||E(L)||_F^2 : VPU work on the input,
    # independent of the MXU result.
    ssq = jnp.sum(a * a, axis=1, keepdims=True)         # (2d, 1)
    ssq = jnp.sum(ssq, axis=0, keepdims=True)           # (1, 1)
    inv = 2.0 / ssq                                     # exact divide (1 scalar)
    g_ref[...] = _ct(a, a) * inv                        # E(L)E(L)^T = E(L L^H)


def recon_quad_kernel(u_ref, sw_ref, qr_ref, qi_ref, out_ref):
    """loss = Re tr(|rho_pt| Q), |rho_pt| rebuilt from the eigh of E(rho_pt).

    Only the first d columns of T = U |w| U^T are needed:
      T[:, :d] = (U * |w|) @ U[:d, :]^T,  Cr = T[:d, :d], Ci = T[d:, :d].
    All slices are sublane-only (multiples of 8); no lane slicing.
    """
    d = qr_ref.shape[0]
    u = u_ref[...]                                      # (2d, 2d)
    sw = sw_ref[...]                                    # (1, 2d)
    t_half = _ct(u * sw, u[:d, :])                      # (2d, d)
    cr = t_half[:d, :]                                  # Re(|rho_pt|)
    ci = t_half[d:, :]                                  # Im(|rho_pt|)
    acc = cr * qr_ref[...] + ci * qi_ref[...]
    row = jnp.sum(acc, axis=1, keepdims=True)           # (d, 1)
    out_ref[...] = jnp.sum(row, axis=0, keepdims=True)  # (1, 1)


# ------------------------------ wrappers ------------------------------------

def make_rho_embedding(a_emb):
    bsz, n, _ = a_emb.shape
    return pl.pallas_call(
        rho_emb_kernel,
        out_shape=jax.ShapeDtypeStruct((bsz, n, n), jnp.float32),
        grid=(bsz,),
        in_specs=[pl.BlockSpec((None, n, n), lambda b: (b, 0, 0))],
        out_specs=pl.BlockSpec((None, n, n), lambda b: (b, 0, 0)),
        compiler_params=pltpu.CompilerParams(dimension_semantics=("parallel",)),
    )(a_emb)


def recon_quad(u, sw, qr, qi):
    bsz, n, _ = u.shape
    d = qr.shape[-1]
    return pl.pallas_call(
        recon_quad_kernel,
        out_shape=jax.ShapeDtypeStruct((bsz, 1, 1), jnp.float32),
        grid=(bsz,),
        in_specs=[pl.BlockSpec((None, n, n), lambda b: (b, 0, 0)),
                  pl.BlockSpec((None, 1, n), lambda b: (b, 0, 0)),
                  pl.BlockSpec((None, d, d), lambda b: (b, 0, 0)),
                  pl.BlockSpec((None, d, d), lambda b: (b, 0, 0))],
        out_specs=pl.BlockSpec((None, 1, 1), lambda b: (b, 0, 0)),
        compiler_params=pltpu.CompilerParams(dimension_semantics=("parallel",)),
    )(u, sw, qr, qi)


def partial_transpose(m, dim_a, dim_b):
    """Batched partial transpose over the B factor of a (B, dA*dB, dA*dB) array."""
    bsz = m.shape[0]
    d = dim_a * dim_b
    m5 = m.reshape(bsz, dim_a, dim_b, dim_a, dim_b)
    return jnp.transpose(m5, (0, 1, 4, 3, 2)).reshape(bsz, d, d)


@functools.partial(jax.jit, static_argnums=(4, 5))
def forward(lr, li, psi_r, psi_i, dim_a, dim_b):
    """Batched forward: lr/li (B,d,d) Cholesky factors, psi_r/psi_i (B,d)."""
    bsz = lr.shape[0]
    d = dim_a * dim_b

    # Real 2d x 2d embedding of L (cheap XLA glue; feeds one stacked matmul).
    a_emb = jnp.concatenate(
        [jnp.concatenate([lr, -li], axis=-1),
         jnp.concatenate([li, lr], axis=-1)], axis=-2)             # (B, 2d, 2d)

    # --- Pallas kernel 1: G = E(L) E(L)^T / tr(L L^H) = E(rho) ------------
    g = make_rho_embedding(a_emb)

    # TODO(synk): partial transposes are pure index permutations with no clean
    # Mosaic lowering at this layout; they stay as tiny XLA glue under the jit.
    # Embedding row index = (r*dimA + a)*dimB + b, so PT of the embedding is a
    # partial transpose with dims (2*dimA, dimB): S = E(rho_pt), exactly
    # symmetric by construction.
    s = partial_transpose(g, 2 * dim_a, dim_b)

    # TODO(synk): Hermitian eigendecomposition has no Pallas equivalent; done
    # with batched jnp.linalg.eigh in XLA (the wall-clock dominator).
    w, u = jnp.linalg.eigh(s)
    sw = jnp.abs(w).reshape(bsz, 1, 2 * d).astype(jnp.float32)     # |spectrum|
    u = u.astype(jnp.float32)

    # psi = theta/||theta||, Q = PT(psi psi^H).  tr(PT(C) P) = tr(C PT(P))
    # moves the outer PT onto the rank-1 projector instead of the 2d x 2d recon.
    inv_norm = lax.rsqrt(jnp.sum(psi_r * psi_r + psi_i * psi_i,
                                 axis=-1, keepdims=True))
    pr = psi_r * inv_norm
    pi = psi_i * inv_norm
    proj_r = pr[:, :, None] * pr[:, None, :] + pi[:, :, None] * pi[:, None, :]
    proj_i = pi[:, :, None] * pr[:, None, :] - pr[:, :, None] * pi[:, None, :]
    q_r = partial_transpose(proj_r, dim_a, dim_b)
    q_i = partial_transpose(proj_i, dim_a, dim_b)

    # --- Pallas kernel 2: half spectral recon + quadratic-form reduce -----
    loss = recon_quad(u, sw, q_r, q_i)                             # (B, 1, 1)
    return loss.reshape(bsz)


# -------------------------------- main --------------------------------------

if __name__ == "__main__":
    dimA, dimB = 4, 8
    d = dimA * dimB
    batch = 8            # independent search restarts (one module forward each)

    key = jax.random.PRNGKey(0)
    k1, k2, k3, k4 = jax.random.split(key, 4)

    # Trace1PSD cholesky-style parameters: L lower-triangular, softplus diag.
    raw_r = jax.random.normal(k1, (batch, d, d), jnp.float32) * 0.3
    raw_i = jax.random.normal(k2, (batch, d, d), jnp.float32) * 0.3
    diag = jax.nn.softplus(jnp.diagonal(raw_r, axis1=-2, axis2=-1))
    lr = jnp.tril(raw_r, k=-1) + diag[..., None] * jnp.eye(d, dtype=jnp.float32)
    li = jnp.tril(raw_i, k=-1)

    # Sphere manifold raw parameters (normalised inside forward).
    psi_r = jax.random.normal(k3, (batch, d), jnp.float32)
    psi_i = jax.random.normal(k4, (batch, d), jnp.float32)

    loss = forward(lr, li, psi_r, psi_i, dimA, dimB)
    jax.block_until_ready(loss)
    print("KERNEL_OK")
</pallas_src>

<mosaic_0001>
module attributes {stable_mosaic.version = 11 : i64} {
  func.func @rho_emb_kernel(%arg0: i32, %arg1: memref<1x64x64xf32, #tpu.memory_space<vmem>>, %arg2: memref<1x64x64xf32, #tpu.memory_space<vmem>>) attributes {dimension_semantics = [#tpu.dimension_semantics<parallel>], iteration_bounds = array<i64: 8>, scalar_prefetch = 0 : i64, scratch_operands = 0 : i64, tpu.core_type = #tpu.core_type<tc>, window_params = [{transform_indices = @transform_0, window_bounds = array<i64: 1, 64, 64>}, {transform_indices = @transform_1, window_bounds = array<i64: 1, 64, 64>}]} {
    %c0 = arith.constant 0 : index
    %c0_0 = arith.constant 0 : index
    %c0_1 = arith.constant 0 : index
    %0 = vector.load %arg1[%c0, %c0_0, %c0_1] : memref<1x64x64xf32, #tpu.memory_space<vmem>>, vector<1x64x64xf32>
    %1 = vector.shape_cast %0 : vector<1x64x64xf32> to vector<64x64xf32>
    %2 = arith.mulf %1, %1 : vector<64x64xf32>
    %cst = arith.constant dense<0.000000e+00> : vector<64xf32>
    %3 = vector.multi_reduction <add>, %2, %cst [1] : vector<64x64xf32> to vector<64xf32>
    %4 = vector.shape_cast %3 : vector<64xf32> to vector<64x1xf32>
    %cst_2 = arith.constant dense<0.000000e+00> : vector<1xf32>
    %5 = vector.multi_reduction <add>, %4, %cst_2 [0] : vector<64x1xf32> to vector<1xf32>
    %6 = vector.shape_cast %5 : vector<1xf32> to vector<1x1xf32>
    %cst_3 = arith.constant 2.000000e+00 : f32
    %7 = vector.broadcast %cst_3 : f32 to vector<1x1xf32>
    %8 = arith.divf %7, %6 : vector<1x1xf32>
    %cst_4 = arith.constant dense<0.000000e+00> : vector<64x64xf32>
    %9 = tpu.matmul %1, %1, %cst_4 {dimension_numbers = #tpu.dot_dimension_numbers<[1], [1], [0], [0], [0, 0, 1, 0], [], []>} : vector<64x64xf32>, vector<64x64xf32>, vector<64x64xf32> -> vector<64x64xf32>
    %10 = vector.broadcast %8 : vector<1x1xf32> to vector<64x64xf32>
    %11 = arith.mulf %9, %10 : vector<64x64xf32>
    %c0_5 = arith.constant 0 : index
    %c0_6 = arith.constant 0 : index
    %c0_7 = arith.constant 0 : index
    %12 = vector.load %arg2[%c0_5, %c0_6, %c0_7] : memref<1x64x64xf32, #tpu.memory_space<vmem>>, vector<1x64x64xf32>
    %13 = vector.shape_cast %12 : vector<1x64x64xf32> to vector<64x64xf32>
    %14 = vector.shape_cast %11 : vector<64x64xf32> to vector<1x64x64xf32>
    tpu.vector_store %arg2[%c0_5, %c0_6, %c0_7], %14 {strides = array<i32>} : memref<1x64x64xf32, #tpu.memory_space<vmem>>, vector<1x64x64xf32>,
    return
  }
  func.func @transform_0(%arg0: i32) -> (i32, i32, i32) {
    %c0_i32 = arith.constant 0 : i32
    %c0_i32_0 = arith.constant 0 : i32
    %c0_i32_1 = arith.constant 0 : i32
    return %arg0, %c0_i32, %c0_i32_0 : i32, i32, i32
  }
  func.func @transform_1(%arg0: i32) -> (i32, i32, i32) {
    %c0_i32 = arith.constant 0 : i32
    %c0_i32_0 = arith.constant 0 : i32
    %c0_i32_1 = arith.constant 0 : i32
    return %arg0, %c0_i32, %c0_i32_0 : i32, i32, i32
  }
}

module attributes {stable_mosaic.version = 11 : i64} {
  func.func @recon_quad_kernel(%arg0: i32, %arg1: memref<1x64x64xf32, #tpu.memory_space<vmem>>, %arg2: memref<1x1x64xf32, #tpu.memory_space<vmem>>, %arg3: memref<1x32x32xf32, #tpu.memory_space<vmem>>, %arg4: memref<1x32x32xf32, #tpu.memory_space<vmem>>, %arg5: memref<1x1x1xf32, #tpu.memory_space<vmem>>) attributes {dimension_semantics = [#tpu.dimension_semantics<parallel>], iteration_bounds = array<i64: 8>, scalar_prefetch = 0 : i64, scratch_operands = 0 : i64, tpu.core_type = #tpu.core_type<tc>, window_params = [{transform_indices = @transform_0, window_bounds = array<i64: 1, 64, 64>}, {transform_indices = @transform_1, window_bounds = array<i64: 1, 1, 64>}, {transform_indices = @transform_2, window_bounds = array<i64: 1, 32, 32>}, {transform_indices = @transform_3, window_bounds = array<i64: 1, 32, 32>}, {transform_indices = @transform_4, window_bounds = array<i64: 1, 1, 1>}]} {
    %c0 = arith.constant 0 : index
    %c0_0 = arith.constant 0 : index
    %c0_1 = arith.constant 0 : index
    %0 = vector.load %arg1[%c0, %c0_0, %c0_1] : memref<1x64x64xf32, #tpu.memory_space<vmem>>, vector<1x64x64xf32>
    %1 = vector.shape_cast %0 : vector<1x64x64xf32> to vector<64x64xf32>
    %c0_2 = arith.constant 0 : index
    %c0_3 = arith.constant 0 : index
    %c0_4 = arith.constant 0 : index
    %2 = vector.load %arg2[%c0_2, %c0_3, %c0_4] : memref<1x1x64xf32, #tpu.memory_space<vmem>>, vector<1x1x64xf32>
    %3 = vector.shape_cast %2 : vector<1x1x64xf32> to vector<1x64xf32>
    %4 = vector.broadcast %3 : vector<1x64xf32> to vector<64x64xf32>
    %5 = arith.mulf %1, %4 : vector<64x64xf32>
    %6 = vector.extract_strided_slice %1 {offsets = [0, 0], sizes = [32, 64], strides = [1, 1]} : vector<64x64xf32> to vector<32x64xf32>
    %cst = arith.constant dense<0.000000e+00> : vector<64x32xf32>
    %7 = tpu.matmul %5, %6, %cst {dimension_numbers = #tpu.dot_dimension_numbers<[1], [1], [0], [0], [0, 0, 1, 0], [], []>} : vector<64x64xf32>, vector<32x64xf32>, vector<64x32xf32> -> vector<64x32xf32>
    %8 = vector.extract_strided_slice %7 {offsets = [0, 0], sizes = [32, 32], strides = [1, 1]} : vector<64x32xf32> to vector<32x32xf32>
    %9 = vector.extract_strided_slice %7 {offsets = [32, 0], sizes = [32, 32], strides = [1, 1]} : vector<64x32xf32> to vector<32x32xf32>
    %c0_5 = arith.constant 0 : index
    %c0_6 = arith.constant 0 : index
    %c0_7 = arith.constant 0 : index
    %10 = vector.load %arg3[%c0_5, %c0_6, %c0_7] : memref<1x32x32xf32, #tpu.memory_space<vmem>>, vector<1x32x32xf32>
    %11 = vector.shape_cast %10 : vector<1x32x32xf32> to vector<32x32xf32>
    %12 = arith.mulf %8, %11 : vector<32x32xf32>
    %c0_8 = arith.constant 0 : index
    %c0_9 = arith.constant 0 : index
    %c0_10 = arith.constant 0 : index
    %13 = vector.load %arg4[%c0_8, %c0_9, %c0_10] : memref<1x32x32xf32, #tpu.memory_space<vmem>>, vector<1x32x32xf32>
    %14 = vector.shape_cast %13 : vector<1x32x32xf32> to vector<32x32xf32>
    %15 = arith.mulf %9, %14 : vector<32x32xf32>
    %16 = arith.addf %12, %15 : vector<32x32xf32>
    %cst_11 = arith.constant dense<0.000000e+00> : vector<32xf32>
    %17 = vector.multi_reduction <add>, %16, %cst_11 [1] : vector<32x32xf32> to vector<32xf32>
    %18 = vector.shape_cast %17 : vector<32xf32> to vector<32x1xf32>
    %cst_12 = arith.constant dense<0.000000e+00> : vector<1xf32>
    %19 = vector.multi_reduction <add>, %18, %cst_12 [0] : vector<32x1xf32> to vector<1xf32>
    %20 = vector.shape_cast %19 : vector<1xf32> to vector<1x1xf32>
    %c0_13 = arith.constant 0 : index
    %c0_14 = arith.constant 0 : index
    %c0_15 = arith.constant 0 : index
    %21 = vector.load %arg5[%c0_13, %c0_14, %c0_15] : memref<1x1x1xf32, #tpu.memory_space<vmem>>, vector<1x1x1xf32>
    %22 = vector.shape_cast %21 : vector<1x1x1xf32> to vector<1x1xf32>
    %23 = vector.shape_cast %20 : vector<1x1xf32> to vector<1x1x1xf32>
    tpu.vector_store %arg5[%c0_13, %c0_14, %c0_15], %23 {strides = array<i32>} : memref<1x1x1xf32, #tpu.memory_space<vmem>>, vector<1x1x1xf32>,
    return
  }
  func.func @transform_0(%arg0: i32) -> (i32, i32, i32) {
    %c0_i32 = arith.constant 0 : i32
    %c0_i32_0 = arith.constant 0 : i32
    %c0_i32_1 = arith.constant 0 : i32
    return %arg0, %c0_i32, %c0_i32_0 : i32, i32, i32
  }
  func.func @transform_1(%arg0: i32) -> (i32, i32, i32) {
    %c0_i32 = arith.constant 0 : i32
    %c0_i32_0 = arith.constant 0 : i32
    %c0_i32_1 = arith.constant 0 : i32
    return %arg0, %c0_i32, %c0_i32_0 : i32, i32, i32
  }
  func.func @transform_2(%arg0: i32) -> (i32, i32, i32) {
    %c0_i32 = arith.constant 0 : i32
    %c0_i32_0 = arith.constant 0 : i32
    %c0_i32_1 = arith.constant 0 : i32
    return %arg0, %c0_i32, %c0_i32_0 : i32, i32, i32
  }
  func.func @transform_3(%arg0: i32) -> (i32, i32, i32) {
    %c0_i32 = arith.constant 0 : i32
    %c0_i32_0 = arith.constant 0 : i32
    %c0_i32_1 = arith.constant 0 : i32
    return %arg0, %c0_i32, %c0_i32_0 : i32, i32, i32
  }
  func.func @transform_4(%arg0: i32) -> (i32, i32, i32) {
    %c0_i32 = arith.constant 0 : i32
    %c0_i32_0 = arith.constant 0 : i32
    %c0_i32_1 = arith.constant 0 : i32
    return %arg0, %c0_i32, %c0_i32_0 : i32, i32, i32
  }
}

</mosaic_0001>

<llo_original>
// kernel: neg.1
$region0: #{neg.1}
  #allocation2 [shape = 's32[1]{0}', space=sflag, size = 0x4, scoped, tag = 'scoped memory for neg.1']
  %s0 = inlined_call_operand.hbm [shape: f32[8,32,32], index: 0, kind: input, shape index: {}]
  %s1 = inlined_call_operand.vmem [shape: f32[8,32,32], index: 1, kind: output, shape index: {}]
  $region1: #{neg.1} parent=0
    #allocation0 [shape = 'u8[131072]{0}', space=vmem, size = 0x20000, scoped, tag = 'operand span for operand 0']
    #allocation1 [shape = 's32[1]{0}', space=sflag, size = 0x4, scoped, tag = 'scoped memory for neg.1']
    %2 = vsyncpa [#allocation1], 0
    %s4 = ssub.s32 4096, 4096
    %5 = vsyncadd [#allocation1], %s4
    %s6 = sshll.u32 [#allocation0], 4
    %s7 = int_to_ptr.vmem [resolvable:$true] %s6
    %12 = dma.hbm_to_vmem [thread:$0]  %s0, 4096, %s7, [#allocation1], 128, 128, 8
    %13 = dma.done [#allocation1], 4096
    %v14 = vld [vmem:[#allocation0] sm:$0xff]
    %15 = xla_tuple %v14
    %16 = xla_tuple %15
    %v17 = vxor.u32 %v14, 2147483648
    %18 = xla_tuple %v17
    %19 = vst [vmem:[%s1] sm:$0xff] %v17
    %s20 = scalar_lea.vmem [#allocation0], 32
    %v21 = vld [vmem:[%s20] sm:$0xff]
    %22 = xla_tuple %v21
    %23 = xla_tuple %22
    %v24 = vxor.u32 %v21, 2147483648
    %25 = xla_tuple %v24
    %s26 = scalar_lea.vmem %s1, 32
    %27 = vst [vmem:[%s26] sm:$0xff] %v24
    %s28 = scalar_lea.vmem [#allocation0], 64
    %v29 = vld [vmem:[%s28] sm:$0xff]
    %30 = xla_tuple %v29
    %31 = xla_tuple %30
    %v32 = vxor.u32 %v29, 2147483648
    %33 = xla_tuple %v32
    %s34 = scalar_lea.vmem %s1, 64
    %35 = vst [vmem:[%s34] sm:$0xff] %v32
    %s36 = scalar_lea.vmem [#allocation0], 96
    %v37 = vld [vmem:[%s36] sm:$0xff]
    %38 = xla_tuple %v37
    %39 = xla_tuple %38
    %v40 = vxor.u32 %v37, 2147483648
    %41 = xla_tuple %v40
    %s42 = scalar_lea.vmem %s1, 96
    %43 = vst [vmem:[%s42] sm:$0xff] %v40
    %s44 = scalar_lea.vmem [#allocation0], 128
    %v45 = vld [vmem:[%s44] sm:$0xff]
    %46 = xla_tuple %v45
    %47 = xla_tuple %46
    %v48 = vxor.u32 %v45, 2147483648
    %49 = xla_tuple %v48
    %s50 = scalar_lea.vmem %s1, 128
    %51 = vst [vmem:[%s50] sm:$0xff] %v48
    %s52 = scalar_lea.vmem [#allocation0], 160
    %v53 = vld [vmem:[%s52] sm:$0xff]
    %54 = xla_tuple %v53
    %55 = xla_tuple %54
    %v56 = vxor.u32 %v53, 2147483648
    %57 = xla_tuple %v56
    %s58 = scalar_lea.vmem %s1, 160
    %59 = vst [vmem:[%s58] sm:$0xff] %v56
    %s60 = scalar_lea.vmem [#allocation0], 192
    %v61 = vld [vmem:[%s60] sm:$0xff]
    %62 = xla_tuple %v61
    %63 = xla_tuple %62
    %v64 = vxor.u32 %v61, 2147483648
    %65 = xla_tuple %v64
    %s66 = scalar_lea.vmem %s1, 192
    %67 = vst [vmem:[%s66] sm:$0xff] %v64
    %s68 = scalar_lea.vmem [#allocation0], 224
    %v69 = vld [vmem:[%s68] sm:$0xff]
    %70 = xla_tuple %v69
    %71 = xla_tuple %70
    %v72 = vxor.u32 %v69, 2147483648
    %73 = xla_tuple %v72
    %s74 = scalar_lea.vmem %s1, 224
    %75 = vst [vmem:[%s74] sm:$0xff] %v72
    %s76 = scalar_lea.vmem [#allocation0], 8
    %v77 = vld [vmem:[%s76] sm:$0xff]
    %78 = xla_tuple %v77
    %79 = xla_tuple %78
    %v80 = vxor.u32 %v77, 2147483648
    %81 = xla_tuple %v80
    %s82 = scalar_lea.vmem %s1, 8
    %83 = vst [vmem:[%s82] sm:$0xff] %v80
    %s84 = scalar_lea.vmem [#allocation0], 40
    %v85 = vld [vmem:[%s84] sm:$0xff]
    %86 = xla_tuple %v85
    %87 = xla_tuple %86
    %v88 = vxor.u32 %v85, 2147483648
    %89 = xla_tuple %v88
    %s90 = scalar_lea.vmem %s1, 40
    %91 = vst [vmem:[%s90] sm:$0xff] %v88
    %s92 = scalar_lea.vmem [#allocation0], 72
    %v93 = vld [vmem:[%s92] sm:$0xff]
    %94 = xla_tuple %v93
    %95 = xla_tuple %94
    %v96 = vxor.u32 %v93, 2147483648
    %97 = xla_tuple %v96
    %s98 = scalar_lea.vmem %s1, 72
    %99 = vst [vmem:[%s98] sm:$0xff] %v96
    %s100 = scalar_lea.vmem [#allocation0], 104
    %v101 = vld [vmem:[%s100] sm:$0xff]
    %102 = xla_tuple %v101
    %103 = xla_tuple %102
    %v104 = vxor.u32 %v101, 2147483648
    %105 = xla_tuple %v104
    %s106 = scalar_lea.vmem %s1, 104
    %107 = vst [vmem:[%s106] sm:$0xff] %v104
    %s108 = scalar_lea.vmem [#allocation0], 136
    %v109 = vld [vmem:[%s108] sm:$0xff]
    %110 = xla_tuple %v109
    %111 = xla_tuple %110
    %v112 = vxor.u32 %v109, 2147483648
    %113 = xla_tuple %v112
    %s114 = scalar_lea.vmem %s1, 136
    %115 = vst [vmem:[%s114] sm:$0xff] %v112
    %s116 = scalar_lea.vmem [#allocation0], 168
    %v117 = vld [vmem:[%s116] sm:$0xff]
    %118 = xla_tuple %v117
    %119 = xla_tuple %118
    %v120 = vxor.u32 %v117, 2147483648
    %121 = xla_tuple %v120
    %s122 = scalar_lea.vmem %s1, 168
    %123 = vst [vmem:[%s122] sm:$0xff] %v120
    %s124 = scalar_lea.vmem [#allocation0], 200
    %v125 = vld [vmem:[%s124] sm:$0xff]
    %126 = xla_tuple %v125
    %127 = xla_tuple %126
    %v128 = vxor.u32 %v125, 2147483648
    %129 = xla_tuple %v128
    %s130 = scalar_lea.vmem %s1, 200
    %131 = vst [vmem:[%s130] sm:$0xff] %v128
    %s132 = scalar_lea.vmem [#allocation0], 232
    %v133 = vld [vmem:[%s132] sm:$0xff]
    %134 = xla_tuple %v133
    %135 = xla_tuple %134
    %v136 = vxor.u32 %v133, 2147483648
    %137 = xla_tuple %v136
    %s138 = scalar_lea.vmem %s1, 232
    %139 = vst [vmem:[%s138] sm:$0xff] %v136
    %s140 = scalar_lea.vmem [#allocation0], 16
    %v141 = vld [vmem:[%s140] sm:$0xff]
    %142 = xla_tuple %v141
    %143 = xla_tuple %142
    %v144 = vxor.u32 %v141, 2147483648
    %145 = xla_tuple %v144
    %s146 = scalar_lea.vmem %s1, 16
    %147 = vst [vmem:[%s146] sm:$0xff] %v144
    %s148 = scalar_lea.vmem [#allocation0], 48
    %v149 = vld [vmem:[%s148] sm:$0xff]
    %150 = xla_tuple %v149
    %151 = xla_tuple %150
    %v152 = vxor.u32 %v149, 2147483648
    %153 = xla_tuple %v152
    %s154 = scalar_lea.vmem %s1, 48
    %155 = vst [vmem:[%s154] sm:$0xff] %v152
    %s156 = scalar_lea.vmem [#allocation0], 80
    %v157 = vld [vmem:[%s156] sm:$0xff]
    %158 = xla_tuple %v157
    %159 = xla_tuple %158
    %v160 = vxor.u32 %v157, 2147483648
    %161 = xla_tuple %v160
    %s162 = scalar_lea.vmem %s1, 80
    %163 = vst [vmem:[%s162] sm:$0xff] %v160
    %s164 = scalar_lea.vmem [#allocation0], 112
    %v165 = vld [vmem:[%s164] sm:$0xff]
    %166 = xla_tuple %v165
    %167 = xla_tuple %166
    %v168 = vxor.u32 %v165, 2147483648
    %169 = xla_tuple %v168
    %s170 = scalar_lea.vmem %s1, 112
    %171 = vst [vmem:[%s170] sm:$0xff] %v168
    %s172 = scalar_lea.vmem [#allocation0], 144
    %v173 = vld [vmem:[%s172] sm:$0xff]
    %174 = xla_tuple %v173
    %175 = xla_tuple %174
    %v176 = vxor.u32 %v173, 2147483648
    %177 = xla_tuple %v176
    %s178 = scalar_lea.vmem %s1, 144
    %179 = vst [vmem:[%s178] sm:$0xff] %v176
    %s180 = scalar_lea.vmem [#allocation0], 176
    %v181 = vld [vmem:[%s180] sm:$0xff]
    %182 = xla_tuple %v181
    %183 = xla_tuple %182
    %v184 = vxor.u32 %v181, 2147483648
    %185 = xla_tuple %v184
    %s186 = scalar_lea.vmem %s1, 176
    %187 = vst [vmem:[%s186] sm:$0xff] %v184
    %s188 = scalar_lea.vmem [#allocation0], 208
    %v189 = vld [vmem:[%s188] sm:$0xff]
    %190 = xla_tuple %v189
    %191 = xla_tuple %190
    %v192 = vxor.u32 %v189, 2147483648
    %193 = xla_tuple %v192
    %s194 = scalar_lea.vmem %s1, 208
    %195 = vst [vmem:[%s194] sm:$0xff] %v192
    %s196 = scalar_lea.vmem [#allocation0], 240
    %v197 = vld [vmem:[%s196] sm:$0xff]
    %198 = xla_tuple %v197
    %199 = xla_tuple %198
    %v200 = vxor.u32 %v197, 2147483648
    %201 = xla_tuple %v200
    %s202 = scalar_lea.vmem %s1, 240
    %203 = vst [vmem:[%s202] sm:$0xff] %v200
    %s204 = scalar_lea.vmem [#allocation0], 24
    %v205 = vld [vmem:[%s204] sm:$0xff]
    %206 = xla_tuple %v205
    %207 = xla_tuple %206
    %v208 = vxor.u32 %v205, 2147483648
    %209 = xla_tuple %v208
    %s210 = scalar_lea.vmem %s1, 24
    %211 = vst [vmem:[%s210] sm:$0xff] %v208
    %s212 = scalar_lea.vmem [#allocation0], 56
    %v213 = vld [vmem:[%s212] sm:$0xff]
    %214 = xla_tuple %v213
    %215 = xla_tuple %214
    %v216 = vxor.u32 %v213, 2147483648
    %217 = xla_tuple %v216
    %s218 = scalar_lea.vmem %s1, 56
    %219 = vst [vmem:[%s218] sm:$0xff] %v216
    %s220 = scalar_lea.vmem [#allocation0], 88
    %v221 = vld [vmem:[%s220] sm:$0xff]
    %222 = xla_tuple %v221
    %223 = xla_tuple %222
    %v224 = vxor.u32 %v221, 2147483648
    %225 = xla_tuple %v224
    %s226 = scalar_lea.vmem %s1, 88
    %227 = vst [vmem:[%s226] sm:$0xff] %v224
    %s228 = scalar_lea.vmem [#allocation0], 120
    %v229 = vld [vmem:[%s228] sm:$0xff]
    %230 = xla_tuple %v229
    %231 = xla_tuple %230
    %v232 = vxor.u32 %v229, 2147483648
    %233 = xla_tuple %v232
    %s234 = scalar_lea.vmem %s1, 120
    %235 = vst [vmem:[%s234] sm:$0xff] %v232
    %s236 = scalar_lea.vmem [#allocation0], 152
    %v237 = vld [vmem:[%s236] sm:$0xff]
    %238 = xla_tuple %v237
    %239 = xla_tuple %238
    %v240 = vxor.u32 %v237, 2147483648
    %241 = xla_tuple %v240
    %s242 = scalar_lea.vmem %s1, 152
    %243 = vst [vmem:[%s242] sm:$0xff] %v240
    %s244 = scalar_lea.vmem [#allocation0], 184
    %v245 = vld [vmem:[%s244] sm:$0xff]
    %246 = xla_tuple %v245
    %247 = xla_tuple %246
    %v248 = vxor.u32 %v245, 2147483648
    %249 = xla_tuple %v248
    %s250 = scalar_lea.vmem %s1, 184
    %251 = vst [vmem:[%s250] sm:$0xff] %v248
    %s252 = scalar_lea.vmem [#allocation0], 216
    %v253 = vld [vmem:[%s252] sm:$0xff]
    %254 = xla_tuple %v253
    %255 = xla_tuple %254
    %v256 = vxor.u32 %v253, 2147483648
    %257 = xla_tuple %v256
    %s258 = scalar_lea.vmem %s1, 216
    %259 = vst [vmem:[%s258] sm:$0xff] %v256
    %s260 = scalar_lea.vmem [#allocation0], 248
    %v261 = vld [vmem:[%s260] sm:$0xff]
    %262 = xla_tuple %v261
    %263 = xla_tuple %262
    %v264 = vxor.u32 %v261, 2147483648
    %265 = xla_tuple %v264
    %s266 = scalar_lea.vmem %s1, 248
    %267 = vst [vmem:[%s266] sm:$0xff] %v264
    %268 = vsyncpa [#allocation1], 1

// kernel: forward.2
$region0: #{forward.2}
  #allocation0 [shape = 'u32[]', space=smem, size = 0x4, offset = 0x4, fixed_abs, tag = 'smem constant byte address 0x4 - core index']
  #allocation1 [shape = 'u32[144,128]{1,0:T(1,128)}', space=vmem, size = 0x12000, scoped, tag = 'internal scratch']
  %s0 = inlined_call_operand.vmem [shape: f32[8,64,64], index: 0, kind: input, shape index: {}]
  %s1 = inlined_call_operand.vmem [shape: f32[8,64,64], index: 1, kind: output, shape index: {}]
  %s2 = sld [smem:[#allocation0]]
  $region37: #{forward.2} parent=0
    _
  %s4 = ssub.s32 1, %s2
  %s5 = scalar_select 0, %s4, %s2
  loop: start=0, step=1, limit=10
  $region2: #{forward.2} parent=0 // loop_pre_header
    _
  $region3: #{forward.2} parent=0 // loop_header
    %s7 = sphi 0, %s11
    %p8 = scmp.ge.s32.totalorder %s7, 10
    %s17 = sphi 0, %s19
    %s20 = sphi 0, %s17
    %s21 = sphi 0, %s20
    %s37 = sphi 0, %s21
    %s43 = sphi 0, %s45
    %s46 = sphi 0, %s43
    %s47 = sphi 0, %s46
    %s63 = sphi 0, %s47
  $region4: #{forward.2} parent=0 // loop_header_branch
    %10 = sbr.rel (%p8) target = $region8
  $region5: #{forward.2} parent=0 // loop_body
    %s12 = ssub.s32 %s7, 1
    %s13 = ssub.s32 %s7, 2
    %s14 = sadd.s32 %s7, 1
    %s15 = ssub.s32 %s7, %s14
    %p16 = scmp.eq.s32.totalorder %s15, 0
    %s18 = sadd.s32 %s17, 1
    %s19 = scalar_select %p16, %s17, %s18
    %p22 = pneg %p16
    %p23 = scmp.eq.s32.totalorder %s7, 7
    %p24 = por %p22, %p23
    %p25 = scmp.ne.s32.totalorder %s17, %s20
    %p26 = scmp.eq.s32.totalorder %s7, 0
    %p27 = por %p25, %p26
    %p28 = scmp.ne.s32.totalorder %s17, %s20
    %p29 = scmp.eq.s32.totalorder %s12, 7
    %p30 = por %p28, %p29
    %p31 = scmp.ne.s32.totalorder %s20, %s21
    %p32 = scmp.eq.s32.totalorder %s12, 0
    %p33 = por %p31, %p32
    %p34 = scmp.ne.s32.totalorder %s20, %s21
    %p35 = scmp.eq.s32.totalorder %s13, 7
    %p36 = por %p34, %p35
    %p38 = scmp.ne.s32.totalorder %s21, %s37
    %p39 = scmp.eq.s32.totalorder %s13, 0
    %p40 = por %p38, %p39
    %s41 = ssub.s32 %s7, %s14
    %p42 = scmp.eq.s32.totalorder %s41, 0
    %s44 = sadd.s32 %s43, 1
    %s45 = scalar_select %p42, %s43, %s44
    %p48 = pneg %p42
    %p49 = scmp.eq.s32.totalorder %s7, 7
    %p50 = por %p48, %p49
    %p51 = scmp.ne.s32.totalorder %s43, %s46
    %p52 = scmp.eq.s32.totalorder %s7, 0
    %p53 = por %p51, %p52
    %p54 = scmp.ne.s32.totalorder %s43, %s46
    %p55 = scmp.eq.s32.totalorder %s12, 7
    %p56 = por %p54, %p55
    %p57 = scmp.ne.s32.totalorder %s46, %s47
    %p58 = scmp.eq.s32.totalorder %s12, 0
    %p59 = por %p57, %p58
    %p60 = scmp.ne.s32.totalorder %s46, %s47
    %p61 = scmp.eq.s32.totalorder %s13, 7
    %p62 = por %p60, %p61
    %p64 = scmp.ne.s32.totalorder %s47, %s63
    %p65 = scmp.eq.s32.totalorder %s13, 0
    %p66 = por %p64, %p65
    %p67 = scmp.le.s32.totalorder 1, %s7
    %p68 = scmp.lt.s32.totalorder %s7, 9
    %p69 = pnand %p67, %p68
    %p70 = pneg %p69
    // Predicated region
    $region9: #{forward.2} parent=5 // pred_check
      _
    $region10: #{forward.2} parent=5 // pred_check_branch
      %72 = sbr.rel (%p69) target = $region12
    $region11: #{forward.2} parent=5 // pred_region
      %s73 = ssub.s32 %s7, 1
    $region12: #{forward.2} parent=5 // pred_fallthru
      _
    %p74 = scmp.lt.s32.totalorder %s7, 8
    // Predicated region
    $region13: #{forward.2} parent=5 // pred_check
      %p75 = pneg %p74
    $region14: #{forward.2} parent=5 // pred_check_branch
      %77 = sbr.rel (%p75) target = $region16
    $region15: #{forward.2} parent=5 // pred_region
      // Predicated region
      $region17: #{forward.2} parent=15 // pred_check
        %p78 = pneg %p27
      $region18: #{forward.2} parent=15 // pred_check_branch
        %80 = sbr.rel (%p78) target = $region20
      $region19: #{forward.2} parent=15 // pred_region
        %p81 = scmp.lt.s32.totalorder %s7, 7
        %s82 = scalar_select %p81, %s7, 7
        %s83 = smul.addr %s82, 8
        %s84 = smul.addr %s83, 8
        %s85 = scalar_lea.vmem %s0, %s84
      $region20: #{forward.2} parent=15 // pred_fallthru
        _
    $region16: #{forward.2} parent=5 // pred_fallthru
      _
    %p86 = scmp.le.s32.totalorder 1, %s7
    %p87 = scmp.lt.s32.totalorder %s7, 9
    %p88 = pnand %p86, %p87
    %p89 = pneg %p88
    // Predicated region
    $region21: #{forward.2} parent=5 // pred_check
      _
    $region22: #{forward.2} parent=5 // pred_check_branch
      %91 = sbr.rel (%p88) target = $region24
    $region23: #{forward.2} parent=5 // pred_region
      %s92 = ssub.s32 %s7, 1
      %p93 = scmp.lt.s32.totalorder %s12, 7
      %s94 = scalar_select %p93, %s12, 7
      %s95 = smul.addr %s94, 8
      %s96 = smul.addr %s95, 8
      %s97 = scalar_lea.vmem %s0, %s96
      %p98 = pneg %p33
      %p99 = pneg %p30
      %p100 = pneg %p59
      %p101 = pneg %p56
      %p102 = scmp.lt.s32.totalorder %s12, 7
      %s103 = scalar_select %p102, %s12, 7
      %s104 = smul.addr %s103, 8
      %s105 = smul.addr %s104, 8
      %s106 = scalar_lea.vmem %s1, %s105
      %p107 = scmp.lt.s32.totalorder %s12, 7
      %s108 = scalar_select %p107, %s12, 7
      %s109 = smul.addr %s108, 8
      %s110 = smul.addr %s109, 8
      %s111 = scalar_lea.vmem %s0, %s110
      %p112 = scmp.lt.s32.totalorder %s12, 7
      %s113 = scalar_select %p112, %s12, 7
      %s114 = smul.addr %s113, 8
      %s115 = smul.addr %s114, 8
      %s116 = scalar_lea.vmem %s1, %s115
      %v117 = vld [vmem:[%s111] sm:$0xff]
      %v118 = vld [vmem:[%s111 + $0x8] sm:$0xff]
      %v119 = vld [vmem:[%s111 + $0x10] sm:$0xff]
      %v120 = vld [vmem:[%s111 + $0x18] sm:$0xff]
      %v121 = vld [vmem:[%s111 + $0x20] sm:$0xff]
      %v122 = vld [vmem:[%s111 + $0x28] sm:$0xff]
      %v123 = vld [vmem:[%s111 + $0x30] sm:$0xff]
      %v124 = vld [vmem:[%s111 + $0x38] sm:$0xff]
      %v125 = vmul.f32 %v117, %v117
      %v126 = vmul.f32 %v118, %v118
      %v127 = vmul.f32 %v119, %v119
      %v128 = vmul.f32 %v120, %v120
      %v129 = vmul.f32 %v121, %v121
      %v130 = vmul.f32 %v122, %v122
      %v131 = vmul.f32 %v123, %v123
      %v132 = vmul.f32 %v124, %v124
      %vm133 = vcmask 523264
      %v134 = vsel %vm133, %v125, 0.0
      %135 = vadd.xlane.f32.xlu0 %v134
      %v136 = vpop.xlane.xlu0 %135
      %v137 = vsel %vm133, %v126, 0.0
      %138 = vadd.xlane.f32.xlu0 %v137
      %v139 = vpop.xlane.xlu0 %138
      %v140 = vsel %vm133, %v127, 0.0
      %141 = vadd.xlane.f32.xlu0 %v140
      %v142 = vpop.xlane.xlu0 %141
      %v143 = vsel %vm133, %v128, 0.0
      %144 = vadd.xlane.f32.xlu0 %v143
      %v145 = vpop.xlane.xlu0 %144
      %v146 = vsel %vm133, %v129, 0.0
      %147 = vadd.xlane.f32.xlu0 %v146
      %v148 = vpop.xlane.xlu0 %147
      %v149 = vsel %vm133, %v130, 0.0
      %150 = vadd.xlane.f32.xlu0 %v149
      %v151 = vpop.xlane.xlu0 %150
      %v152 = vsel %vm133, %v131, 0.0
      %153 = vadd.xlane.f32.xlu0 %v152
      %v154 = vpop.xlane.xlu0 %153
      %v155 = vsel %vm133, %v132, 0.0
      %156 = vadd.xlane.f32.xlu0 %v155
      %v157 = vpop.xlane.xlu0 %156
      %v158 = vadd.f32 %v136, %v139
      %v159 = vadd.f32 %v158, %v142
      %v160 = vadd.f32 %v159, %v145
      %v161 = vadd.f32 %v160, %v148
      %v162 = vadd.f32 %v161, %v151
      %v163 = vadd.f32 %v162, %v154
      %v164 = vadd.f32 %v163, %v157
      %v165 = vrot.slane %v164, 4
      %v166 = vadd.f32 %v164, %v165
      %v167 = vrot.slane %v166, 2
      %v168 = vadd.f32 %v166, %v167
      %v169 = vrot.slane %v168, 1
      %v170 = vadd.f32 %v168, %v169
      %v171 = vrcp.pop %v170
      %v172 = vmul.f32 2.0, %v171
      %v174 = vsel %vm133, %v117, 0
      %v177 = vsel %vm133, %v118, 0
      %v180 = vsel %vm133, %v119, 0
      %v183 = vsel %vm133, %v120, 0
      %v186 = vsel %vm133, %v121, 0
      %v189 = vsel %vm133, %v122, 0
      %v192 = vsel %vm133, %v123, 0
      %v195 = vsel %vm133, %v124, 0
      %197 = vmatprep.subr.mxu0 0.0
      %198 = vmatpush1.xpose.msra.mxu0 0.0
      %199 = vmatprep.subr.mxu0 0.0
      %200 = vmatpush1.xpose.msra.mxu0 0.0
      %201 = vmatprep.subr.mxu0 0.0
      %202 = vmatpush1.xpose.msra.mxu0 0.0
      %203 = vmatprep.subr.mxu0 0.0
      %204 = vmatpush1.xpose.msra.mxu0 0.0
      %205 = vmatprep.subr.mxu0 0.0
      %206 = vmatpush1.xpose.msra.mxu0 0.0
      %207 = vmatprep.subr.mxu0 0.0
      %208 = vmatpush1.xpose.msra.mxu0 0.0
      %209 = vmatprep.subr.mxu0 0.0
      %210 = vmatpush1.xpose.msra.mxu0 0.0
      %211 = vmatprep.subr.mxu0 0.0
      %212 = vmatpush1.xpose.msra.mxu0 0.0
      %213 = vmatprep.subr.mxu0 0.0
      %214 = vmatpush1.xpose.msra.mxu0 %v195
      %215 = vmatprep.subr.mxu0 0.0
      %216 = vmatpush1.xpose.msra.mxu0 %v192
      %217 = vmatprep.subr.mxu0 0.0
      %218 = vmatpush1.xpose.msra.mxu0 %v189
      %219 = vmatprep.subr.mxu0 0.0
      %220 = vmatpush1.xpose.msra.mxu0 %v186
      %221 = vmatprep.subr.mxu0 0.0
      %222 = vmatpush1.xpose.msra.mxu0 %v183
      %223 = vmatprep.subr.mxu0 0.0
      %224 = vmatpush1.xpose.msra.mxu0 %v180
      %225 = vmatprep.subr.mxu0 0.0
      %226 = vmatpush1.xpose.msra.mxu0 %v177
      %227 = vmatprep.subr.mxu0 0.0
      %228 = vmatpush1.xpose.msra.mxu0 %v174
      %229 = vmatprep.subr.mxu0 0.0
      %230 = vmatpush2.xpose.msra.mxu0 0.0
      %231 = vmatprep.subr.mxu0 0.0
      %232 = vmatpush2.xpose.msra.mxu0 0.0
      %233 = vmatprep.subr.mxu0 0.0
      %234 = vmatpush2.xpose.msra.mxu0 0.0
      %235 = vmatprep.subr.mxu0 0.0
      %236 = vmatpush2.xpose.msra.mxu0 0.0
      %237 = vmatprep.subr.mxu0 0.0
      %238 = vmatpush2.xpose.msra.mxu0 0.0
      %239 = vmatprep.subr.mxu0 0.0
      %240 = vmatpush2.xpose.msra.mxu0 0.0
      %241 = vmatprep.subr.mxu0 0.0
      %242 = vmatpush2.xpose.msra.mxu0 0.0
      %243 = vmatprep.subr.mxu0 0.0
      %244 = vmatpush2.xpose.msra.mxu0 0.0
      %245 = vmatprep.subr.mxu0 0.0
      %246 = vmatpush2.xpose.msra.mxu0 0.0
      %247 = vmatprep.subr.mxu0 0.0
      %248 = vmatpush2.xpose.msra.mxu0 0.0
      %249 = vmatprep.subr.mxu0 0.0
      %250 = vmatpush2.xpose.msra.mxu0 0.0
      %251 = vmatprep.subr.mxu0 0.0
      %252 = vmatpush2.xpose.msra.mxu0 0.0
      %253 = vmatprep.subr.mxu0 0.0
      %254 = vmatpush2.xpose.msra.mxu0 0.0
      %255 = vmatprep.subr.mxu0 0.0
      %256 = vmatpush2.xpose.msra.mxu0 0.0
      %257 = vmatprep.subr.mxu0 0.0
      %258 = vmatpush2.xpose.msra.mxu0 0.0
      %259 = vmatprep.subr.mxu0 0.0
      %260 = vmatpush2.xpose.msra.mxu0 0.0
      %261 = vmatprep.mubr.f32.mxu0 0.0
      %262 = vmatmul.mubr.f32.gmra.mxu0 %v174
      %v263 = vpop.f32.mrf.mxu0
      %v264 = vadd.f32 0.0, %v263
      %v265 = vpop.f32.mrf.mxu0
      %266 = vmatprep.mubr.f32.mxu0 0.0
      %267 = vmatmul.mubr.f32.gmra.mxu0 %v177
      %v268 = vpop.f32.mrf.mxu0
      %v269 = vadd.f32 0.0, %v268
      %v270 = vpop.f32.mrf.mxu0
      %271 = vmatprep.mubr.f32.mxu0 0.0
      %272 = vmatmul.mubr.f32.gmra.mxu0 %v180
      %v273 = vpop.f32.mrf.mxu0
      %v274 = vadd.f32 0.0, %v273
      %v275 = vpop.f32.mrf.mxu0
      %276 = vmatprep.mubr.f32.mxu0 0.0
      %277 = vmatmul.mubr.f32.gmra.mxu0 %v183
      %v278 = vpop.f32.mrf.mxu0
      %v279 = vadd.f32 0.0, %v278
      %v280 = vpop.f32.mrf.mxu0
      %281 = vmatprep.mubr.f32.mxu0 0.0
      %282 = vmatmul.mubr.f32.gmra.mxu0 %v186
      %v283 = vpop.f32.mrf.mxu0
      %v284 = vadd.f32 0.0, %v283
      %v285 = vpop.f32.mrf.mxu0
      %286 = vmatprep.mubr.f32.mxu0 0.0
      %287 = vmatmul.mubr.f32.gmra.mxu0 %v189
      %v288 = vpop.f32.mrf.mxu0
      %v289 = vadd.f32 0.0, %v288
      %v290 = vpop.f32.mrf.mxu0
      %291 = vmatprep.mubr.f32.mxu0 0.0
      %292 = vmatmul.mubr.f32.gmra.mxu0 %v192
      %v293 = vpop.f32.mrf.mxu0
      %v294 = vadd.f32 0.0, %v293
      %v295 = vpop.f32.mrf.mxu0
      %296 = vmatprep.mubr.f32.mxu0 0.0
      %297 = vmatmul.mubr.f32.gmra.mxu0 %v195
      %v298 = vpop.f32.mrf.mxu0
      %v299 = vadd.f32 0.0, %v298
      %v300 = vpop.f32.mrf.mxu0
      %301 = vdwg.mxu0
      %v302 = vmul.f32 %v264, %v172
      %v303 = vmul.f32 %v269, %v172
      %v304 = vmul.f32 %v274, %v172
      %v305 = vmul.f32 %v279, %v172
      %v306 = vmul.f32 %v284, %v172
      %v307 = vmul.f32 %v289, %v172
      %v308 = vmul.f32 %v294, %v172
      %v309 = vmul.f32 %v299, %v172
      %310 = vst.msk [vmem:[%s116] sm:$0xff] %vm133, %v302
      %311 = vst.msk [vmem:[%s116 + $0x8] sm:$0xff] %vm133, %v303
      %312 = vst.msk [vmem:[%s116 + $0x10] sm:$0xff] %vm133, %v304
      %313 = vst.msk [vmem:[%s116 + $0x18] sm:$0xff] %vm133, %v305
      %314 = vst.msk [vmem:[%s116 + $0x20] sm:$0xff] %vm133, %v306
      %315 = vst.msk [vmem:[%s116 + $0x28] sm:$0xff] %vm133, %v307
      %316 = vst.msk [vmem:[%s116 + $0x30] sm:$0xff] %vm133, %v308
      %317 = vst.msk [vmem:[%s116 + $0x38] sm:$0xff] %vm133, %v309
      %p318 = scmp.lt.s32.totalorder %s12, 7
      %s319 = scalar_select %p318, %s12, 7
      %s320 = smul.addr %s319, 8
      %s321 = smul.addr %s320, 8
      %s322 = scalar_lea.vmem %s1, %s321
      // Predicated region
      $region25: #{forward.2} parent=23 // pred_check
        %p323 = pneg %p56
      $region26: #{forward.2} parent=23 // pred_check_branch
        %325 = sbr.rel (%p323) target = $region28
      $region27: #{forward.2} parent=23 // pred_region
        _
      $region28: #{forward.2} parent=23 // pred_fallthru
        _
    $region24: #{forward.2} parent=5 // pred_fallthru
      _
    %p326 = scmp.le.s32.totalorder 2, %s7
    // Predicated region
    $region29: #{forward.2} parent=5 // pred_check
      %p327 = pneg %p326
    $region30: #{forward.2} parent=5 // pred_check_branch
      %329 = sbr.rel (%p327) target = $region32
    $region31: #{forward.2} parent=5 // pred_region
      %s330 = ssub.s32 %s7, 2
      // Predicated region
      $region33: #{forward.2} parent=31 // pred_check
        %p331 = pneg %p62
      $region34: #{forward.2} parent=31 // pred_check_branch
        %333 = sbr.rel (%p331) target = $region36
      $region35: #{forward.2} parent=31 // pred_region
        %p334 = scmp.lt.s32.totalorder %s13, 7
        %s335 = scalar_select %p334, %s13, 7
        %s336 = smul.addr %s335, 8
        %s337 = smul.addr %s336, 8
        %s338 = scalar_lea.vmem %s1, %s337
      $region36: #{forward.2} parent=31 // pred_fallthru
        _
    $region32: #{forward.2} parent=5 // pred_fallthru
      _
  $region6: #{forward.2} parent=0 // loop_footer
    %s11 = sadd.s32 1, %s7
  $region7: #{forward.2} parent=0 // loop_footer_branch
    %6 = sbr.rel target = $region3
  $region8: #{forward.2} parent=0 // loop_exit
    _

// kernel: custom-call.2
$region0: #{custom-call.2}
  %s0 = inlined_call_operand.vmem [shape: f32[8,32,32], index: 0, kind: input, shape index: {}]
  %s1 = inlined_call_operand.vmem [shape: f32[8,32,32], index: 1, kind: input, shape index: {}]
  %s2 = inlined_call_operand.vmem [shape: f32[8,32,32], index: 2, kind: input, shape index: {}]
  %s3 = inlined_call_operand.vmem [shape: f32[8,32,32], index: 3, kind: input, shape index: {}]
  %s4 = inlined_call_operand.vmem [shape: f32[8,32], index: 4, kind: output, shape index: {0}]
  %s5 = inlined_call_operand.vmem [shape: f32[8,32], index: 5, kind: output, shape index: {1}]
  %s6 = inlined_call_operand.vmem [shape: f32[8,32,32], index: 6, kind: output, shape index: {2}]
  %s7 = inlined_call_operand.vmem [shape: f32[8,32,32], index: 7, kind: output, shape index: {3}]
  %s8 = inlined_call_operand.vmem [shape: f32[8,32,32], index: 8, kind: output, shape index: {4}]
  %s9 = inlined_call_operand.vmem [shape: f32[8,32,32], index: 9, kind: output, shape index: {5}]
  %10 = xla_tuple %s4, %s5, %s6, %s7, %s8, %s9
  $region1: #{custom-call.2} parent=0
    #allocation0 [shape = 'u8[32768]{0}', space=vmem, size = 0x8000, scoped, tag = 'operand span for operand 0']
    #allocation1 [shape = 'u8[32768]{0}', space=vmem, size = 0x8000, scoped, tag = 'operand span for operand 1']
    #allocation2 [shape = 'u8[32768]{0}', space=vmem, size = 0x8000, scoped, tag = 'operand span for operand 2']
    #allocation3 [shape = 'u8[32768]{0}', space=vmem, size = 0x8000, scoped, tag = 'operand span for operand 3']
    #allocation4 [shape = 'u8[8192]{0}', space=vmem, size = 0x2000, scoped, tag = 'operand span for operand 4']
    #allocation5 [shape = 'u8[8192]{0}', space=vmem, size = 0x2000, scoped, tag = 'operand span for operand 5']
    #allocation6 [shape = 'u8[32768]{0}', space=vmem, size = 0x8000, scoped, tag = 'operand span for operand 6']
    #allocation7 [shape = 'u8[32768]{0}', space=vmem, size = 0x8000, scoped, tag = 'operand span for operand 7']
    #allocation8 [shape = 'u8[32768]{0}', space=vmem, size = 0x8000, scoped, tag = 'operand span for operand 8']
    #allocation9 [shape = 'u8[32768]{0}', space=vmem, size = 0x8000, scoped, tag = 'operand span for operand 9']
    loop: start=0, step=1, limit=10
    $region2: #{custom-call.2} parent=1 // loop_pre_header
      _
    $region3: #{custom-call.2} parent=1 // loop_header
      %s12 = sphi 0, %s16
      %p13 = scmp.ge.s32.totalorder %s12, 10
      %s24 = sphi 0, %s26
      %s27 = sphi 0, %s24
      %s28 = sphi 0, %s27
      %s44 = sphi 0, %s28
      %s52 = sphi 0, %s54
      %s55 = sphi 0, %s52
      %s56 = sphi 0, %s55
      %s72 = sphi 0, %s56
    $region4: #{custom-call.2} parent=1 // loop_header_branch
      %15 = sbr.rel (%p13) target = $region8
    $region5: #{custom-call.2} parent=1 // loop_body
      %s17 = ssub.s32 %s12, 1
      %s18 = ssub.s32 %s12, 2
      %s19 = sadd.s32 %s12, 1
      %s20 = sshrl.u32 %s12, 3
      %s21 = sshrl.u32 %s19, 3
      %s22 = ssub.s32 %s20, %s21
      %p23 = scmp.eq.s32.totalorder %s22, 0
      %s25 = sadd.s32 %s24, 1
      %s26 = scalar_select %p23, %s24, %s25
      %p29 = pneg %p23
      %p30 = scmp.eq.s32.totalorder %s12, 7
      %p31 = por %p29, %p30
      %p32 = scmp.ne.s32.totalorder %s24, %s27
      %p33 = scmp.eq.s32.totalorder %s12, 0
      %p34 = por %p32, %p33
      %p35 = scmp.ne.s32.totalorder %s24, %s27
      %p36 = scmp.eq.s32.totalorder %s17, 7
      %p37 = por %p35, %p36
      %p38 = scmp.ne.s32.totalorder %s27, %s28
      %p39 = scmp.eq.s32.totalorder %s17, 0
      %p40 = por %p38, %p39
      %p41 = scmp.ne.s32.totalorder %s27, %s28
      %p42 = scmp.eq.s32.totalorder %s18, 7
      %p43 = por %p41, %p42
      %p45 = scmp.ne.s32.totalorder %s28, %s44
      %p46 = scmp.eq.s32.totalorder %s18, 0
      %p47 = por %p45, %p46
      %s48 = sshrl.u32 %s12, 3
      %s49 = sshrl.u32 %s19, 3
      %s50 = ssub.s32 %s48, %s49
      %p51 = scmp.eq.s32.totalorder %s50, 0
      %s53 = sadd.s32 %s52, 1
      %s54 = scalar_select %p51, %s52, %s53
      %p57 = pneg %p51
      %p58 = scmp.eq.s32.totalorder %s12, 7
      %p59 = por %p57, %p58
      %p60 = scmp.ne.s32.totalorder %s52, %s55
      %p61 = scmp.eq.s32.totalorder %s12, 0
      %p62 = por %p60, %p61
      %p63 = scmp.ne.s32.totalorder %s52, %s55
      %p64 = scmp.eq.s32.totalorder %s17, 7
      %p65 = por %p63, %p64
      %p66 = scmp.ne.s32.totalorder %s55, %s56
      %p67 = scmp.eq.s32.totalorder %s17, 0
      %p68 = por %p66, %p67
      %p69 = scmp.ne.s32.totalorder %s55, %s56
      %p70 = scmp.eq.s32.totalorder %s18, 7
      %p71 = por %p69, %p70
      %p73 = scmp.ne.s32.totalorder %s56, %s72
      %p74 = scmp.eq.s32.totalorder %s18, 0
      %p75 = por %p73, %p74
      %p76 = scmp.le.s32.totalorder 1, %s12
      %p77 = scmp.lt.s32.totalorder %s12, 9
      %p78 = pnand %p76, %p77
      %p79 = pneg %p78
      // Predicated region
      $region9: #{custom-call.2} parent=5 // pred_check
        _
      $region10: #{custom-call.2} parent=5 // pred_check_branch
        %81 = sbr.rel (%p78) target = $region12
      $region11: #{custom-call.2} parent=5 // pred_region
        %s82 = ssub.s32 %s12, 1
      $region12: #{custom-call.2} parent=5 // pred_fallthru
        _
      %p83 = scmp.lt.s32.totalorder %s12, 8
      // Predicated region
      $region13: #{custom-call.2} parent=5 // pred_check
        %p84 = pneg %p83
      $region14: #{custom-call.2} parent=5 // pred_check_branch
        %86 = sbr.rel (%p84) target = $region16
      $region15: #{custom-call.2} parent=5 // pred_region
        %s87 = sand.u32 %s12, 1
        %s88 = sand.u32 %s12, 1
        %s89 = smul.addr %s88, 32
        %s90 = scalar_lea.vmem [#allocation0], %s89
        %s91 = smul.addr %s12, 32
        %s92 = scalar_lea.vmem %s0, %s91
        // Predicated region
        $region17: #{custom-call.2} parent=15 // pred_check
          _
        $region18: #{custom-call.2} parent=15 // pred_check_branch
          %94 = sbr.rel (0) target = $region20
        $region19: #{custom-call.2} parent=15 // pred_region
          // Predicated region
          $region21: #{custom-call.2} parent=19 // pred_check
            _
          $region22: #{custom-call.2} parent=19 // pred_check_branch
            %96 = sbr.rel (0) target = $region24
          $region23: #{custom-call.2} parent=19 // pred_region
            loop: start=0, step=1, limit=1
            $region25: #{custom-call.2} parent=23 // loop_pre_header
              _
            $region26: #{custom-call.2} parent=23 // loop_header
              %s98 = sphi 0, %s102
              %p99 = scmp.ge.s32.totalorder %s98, 1
              %s103 = sphi %s92, %s92
              %s104 = sphi %s90, %s90
            $region27: #{custom-call.2} parent=23 // loop_header_branch
              %101 = sbr.rel (%p99) target = $region31
            $region28: #{custom-call.2} parent=23 // loop_body
              %v105 = vld [vmem:[%s103] sm:$0xff]
              %106 = vst [vmem:[%s104] sm:$0xff] %v105
              %v107 = vld [vmem:[%s103 + $0x8] sm:$0xff]
              %108 = vst [vmem:[%s104 + $0x8] sm:$0xff] %v107
              %v109 = vld [vmem:[%s103 + $0x10] sm:$0xff]
              %110 = vst [vmem:[%s104 + $0x10] sm:$0xff] %v109
              %v111 = vld [vmem:[%s103 + $0x18] sm:$0xff]
              %112 = vst [vmem:[%s104 + $0x18] sm:$0xff] %v111
            $region29: #{custom-call.2} parent=23 // loop_footer
              %s102 = sadd.s32 1, %s98
            $region30: #{custom-call.2} parent=23 // loop_footer_branch
              %97 = sbr.rel target = $region26
            $region31: #{custom-call.2} parent=23 // loop_exit
              _
          $region24: #{custom-call.2} parent=19 // pred_fallthru
            _
          // Predicated region
          $region32: #{custom-call.2} parent=19 // pred_check
            _
          $region33: #{custom-call.2} parent=19 // pred_check_branch
            %114 = sbr.rel target = $region35
          $region34: #{custom-call.2} parent=19 // pred_region
            _
          $region35: #{custom-call.2} parent=19 // pred_fallthru
            _
        $region20: #{custom-call.2} parent=15 // pred_fallthru
          _
        %115 = vnop
        %s116 = sand.u32 %s12, 1
        %s117 = sand.u32 %s12, 1
        %s118 = smul.addr %s117, 32
        %s119 = scalar_lea.vmem [#allocation1], %s118
        %s120 = smul.addr %s12, 32
        %s121 = scalar_lea.vmem %s1, %s120
        // Predicated region
        $region36: #{custom-call.2} parent=15 // pred_check
          _
        $region37: #{custom-call.2} parent=15 // pred_check_branch
          %123 = sbr.rel (0) target = $region39
        $region38: #{custom-call.2} parent=15 // pred_region
          // Predicated region
          $region40: #{custom-call.2} parent=38 // pred_check
            _
          $region41: #{custom-call.2} parent=38 // pred_check_branch
            %125 = sbr.rel (0) target = $region43
          $region42: #{custom-call.2} parent=38 // pred_region
            loop: start=0, step=1, limit=1
            $region44: #{custom-call.2} parent=42 // loop_pre_header
              _
            $region45: #{custom-call.2} parent=42 // loop_header
              %s127 = sphi 0, %s131
              %p128 = scmp.ge.s32.totalorder %s127, 1
              %s132 = sphi %s121, %s121
              %s133 = sphi %s119, %s119
            $region46: #{custom-call.2} parent=42 // loop_header_branch
              %130 = sbr.rel (%p128) target = $region50
            $region47: #{custom-call.2} parent=42 // loop_body
              %v134 = vld [vmem:[%s132] sm:$0xff]
              %135 = vst [vmem:[%s133] sm:$0xff] %v134
              %v136 = vld [vmem:[%s132 + $0x8] sm:$0xff]
              %137 = vst [vmem:[%s133 + $0x8] sm:$0xff] %v136
              %v138 = vld [vmem:[%s132 + $0x10] sm:$0xff]
              %139 = vst [vmem:[%s133 + $0x10] sm:$0xff] %v138
              %v140 = vld [vmem:[%s132 + $0x18] sm:$0xff]
              %141 = vst [vmem:[%s133 + $0x18] sm:$0xff] %v140
            $region48: #{custom-call.2} parent=42 // loop_footer
              %s131 = sadd.s32 1, %s127
            $region49: #{custom-call.2} parent=42 // loop_footer_branch
              %126 = sbr.rel target = $region45
            $region50: #{custom-call.2} parent=42 // loop_exit
              _
          $region43: #{custom-call.2} parent=38 // pred_fallthru
            _
          // Predicated region
          $region51: #{custom-call.2} parent=38 // pred_check
            _
          $region52: #{custom-call.2} parent=38 // pred_check_branch
            %143 = sbr.rel target = $region54
          $region53: #{custom-call.2} parent=38 // pred_region
            _
          $region54: #{custom-call.2} parent=38 // pred_fallthru
            _
        $region39: #{custom-call.2} parent=15 // pred_fallthru
          _
        %144 = vnop
        %s145 = sand.u32 %s12, 1
        %s146 = sand.u32 %s12, 1
        %s147 = smul.addr %s146, 32
        %s148 = scalar_lea.vmem [#allocation2], %s147
        %s149 = smul.addr %s12, 32
        %s150 = scalar_lea.vmem %s2, %s149
        // Predicated region
        $region55: #{custom-call.2} parent=15 // pred_check
          _
        $region56: #{custom-call.2} parent=15 // pred_check_branch
          %152 = sbr.rel (0) target = $region58
        $region57: #{custom-call.2} parent=15 // pred_region
          // Predicated region
          $region59: #{custom-call.2} parent=57 // pred_check
            _
          $region60: #{custom-call.2} parent=57 // pred_check_branch
            %154 = sbr.rel (0) target = $region62
          $region61: #{custom-call.2} parent=57 // pred_region
            loop: start=0, step=1, limit=1
            $region63: #{custom-call.2} parent=61 // loop_pre_header
              _
            $region64: #{custom-call.2} parent=61 // loop_header
              %s156 = sphi 0, %s160
              %p157 = scmp.ge.s32.totalorder %s156, 1
              %s161 = sphi %s150, %s150
              %s162 = sphi %s148, %s148
            $region65: #{custom-call.2} parent=61 // loop_header_branch
              %159 = sbr.rel (%p157) target = $region69
            $region66: #{custom-call.2} parent=61 // loop_body
              %v163 = vld [vmem:[%s161] sm:$0xff]
              %164 = vst [vmem:[%s162] sm:$0xff] %v163
              %v165 = vld [vmem:[%s161 + $0x8] sm:$0xff]
              %166 = vst [vmem:[%s162 + $0x8] sm:$0xff] %v165
              %v167 = vld [vmem:[%s161 + $0x10] sm:$0xff]
              %168 = vst [vmem:[%s162 + $0x10] sm:$0xff] %v167
              %v169 = vld [vmem:[%s161 + $0x18] sm:$0xff]
              %170 = vst [vmem:[%s162 + $0x18] sm:$0xff] %v169
            $region67: #{custom-call.2} parent=61 // loop_footer
              %s160 = sadd.s32 1, %s156
            $region68: #{custom-call.2} parent=61 // loop_footer_branch
              %155 = sbr.rel target = $region64
            $region69: #{custom-call.2} parent=61 // loop_exit
              _
          $region62: #{custom-call.2} parent=57 // pred_fallthru
            _
          // Predicated region
          $region70: #{custom-call.2} parent=57 // pred_check
            _
          $region71: #{custom-call.2} parent=57 // pred_check_branch
            %172 = sbr.rel target = $region73
          $region72: #{custom-call.2} parent=57 // pred_region
            _
          $region73: #{custom-call.2} parent=57 // pred_fallthru
            _
        $region58: #{custom-call.2} parent=15 // pred_fallthru
          _
        %173 = vnop
        %s174 = sand.u32 %s12, 1
        %s175 = sand.u32 %s12, 1
        %s176 = smul.addr %s175, 32
        %s177 = scalar_lea.vmem [#allocation3], %s176
        %s178 = smul.addr %s12, 32
        %s179 = scalar_lea.vmem %s3, %s178
        // Predicated region
        $region74: #{custom-call.2} parent=15 // pred_check
          _
        $region75: #{custom-call.2} parent=15 // pred_check_branch
          %181 = sbr.rel (0) target = $region77
        $region76: #{custom-call.2} parent=15 // pred_region
          // Predicated region
          $region78: #{custom-call.2} parent=76 // pred_check
            _
          $region79: #{custom-call.2} parent=76 // pred_check_branch
            %183 = sbr.rel (0) target = $region81
          $region80: #{custom-call.2} parent=76 // pred_region
            loop: start=0, step=1, limit=1
            $region82: #{custom-call.2} parent=80 // loop_pre_header
              _
            $region83: #{custom-call.2} parent=80 // loop_header
              %s185 = sphi 0, %s189
              %p186 = scmp.ge.s32.totalorder %s185, 1
              %s190 = sphi %s179, %s179
              %s191 = sphi %s177, %s177
            $region84: #{custom-call.2} parent=80 // loop_header_branch
              %188 = sbr.rel (%p186) target = $region88
            $region85: #{custom-call.2} parent=80 // loop_body
              %v192 = vld [vmem:[%s190] sm:$0xff]
              %193 = vst [vmem:[%s191] sm:$0xff] %v192
              %v194 = vld [vmem:[%s190 + $0x8] sm:$0xff]
              %195 = vst [vmem:[%s191 + $0x8] sm:$0xff] %v194
              %v196 = vld [vmem:[%s190 + $0x10] sm:$0xff]
              %197 = vst [vmem:[%s191 + $0x10] sm:$0xff] %v196
              %v198 = vld [vmem:[%s190 + $0x18] sm:$0xff]
              %199 = vst [vmem:[%s191 + $0x18] sm:$0xff] %v198
            $region86: #{custom-call.2} parent=80 // loop_footer
              %s189 = sadd.s32 1, %s185
            $region87: #{custom-call.2} parent=80 // loop_footer_branch
              %184 = sbr.rel target = $region83
            $region88: #{custom-call.2} parent=80 // loop_exit
              _
          $region81: #{custom-call.2} parent=76 // pred_fallthru
            _
          // Predicated region
          $region89: #{custom-call.2} parent=76 // pred_check
            _
          $region90: #{custom-call.2} parent=76 // pred_check_branch
            %201 = sbr.rel target = $region92
          $region91: #{custom-call.2} parent=76 // pred_region
            _
          $region92: #{custom-call.2} parent=76 // pred_fallthru
            _
        $region77: #{custom-call.2} parent=15 // pred_fallthru
          _
        %202 = vnop
      $region16: #{custom-call.2} parent=5 // pred_fallthru
        _
      %p203 = scmp.le.s32.totalorder 1, %s12
      %p204 = scmp.lt.s32.totalorder %s12, 9
      %p205 = pnand %p203, %p204
      %p206 = pneg %p205
      // Predicated region
      $region93: #{custom-call.2} parent=5 // pred_check
        _
      $region94: #{custom-call.2} parent=5 // pred_check_branch
        %208 = sbr.rel (%p205) target = $region96
      $region95: #{custom-call.2} parent=5 // pred_region
        #allocation10 [shape = 'f32[32,32]{1,0}', space=vmem, size = 0x4000, scoped, tag = 'a top-left matrix']
        #allocation11 [shape = 'f32[32,32]{1,0}', space=vmem, size = 0x4000, scoped, tag = 'a top-right matrix']
        #allocation12 [shape = 'f32[32,32]{1,0}', space=vmem, size = 0x4000, scoped, tag = 'a bottom-left matrix']
        #allocation13 [shape = 'f32[32,32]{1,0}', space=vmem, size = 0x4000, scoped, tag = 'a bottom-right matrix']
        %s209 = ssub.s32 %s12, 1
        %s210 = sand.u32 %s17, 1
        %s211 = sand.u32 %s17, 1
        %s212 = smul.addr %s211, 32
        %s213 = scalar_lea.vmem [#allocation0], %s212
        %s214 = sand.u32 %s17, 1
        %s215 = sand.u32 %s17, 1
        %s216 = smul.addr %s215, 32
        %s217 = scalar_lea.vmem [#allocation1], %s216
        %s218 = sand.u32 %s17, 1
        %s219 = sand.u32 %s17, 1
        %s220 = smul.addr %s219, 32
        %s221 = scalar_lea.vmem [#allocation2], %s220
        %s222 = sand.u32 %s17, 1
        %s223 = sand.u32 %s17, 1
        %s224 = smul.addr %s223, 32
        %s225 = scalar_lea.vmem [#allocation3], %s224
        %s226 = sand.u32 %s17, 1
        %s227 = sand.u32 %s17, 1
        %s228 = smul.addr %s227, 32
        %s229 = scalar_lea.vmem [#allocation0], %s228
        %s230 = sand.u32 %s17, 1
        %s231 = sand.u32 %s17, 1
        %s232 = smul.addr %s231, 32
        %s233 = scalar_lea.vmem [#allocation1], %s232
        %s234 = sand.u32 %s17, 1
        %s235 = sand.u32 %s17, 1
        %s236 = smul.addr %s235, 32
        %s237 = scalar_lea.vmem [#allocation2], %s236
        %s238 = sand.u32 %s17, 1
        %s239 = sand.u32 %s17, 1
        %s240 = smul.addr %s239, 32
        %s241 = scalar_lea.vmem [#allocation3], %s240
        %p242 = pneg %p40
        %p243 = pneg %p37
        %s244 = sand.u32 %s27, 1
        %s245 = sand.u32 %s27, 1
        %s246 = smul.addr %s245, 8
        %s247 = scalar_lea.vmem [#allocation4], %s246
        %p248 = pneg %p68
        %p249 = pneg %p65
        %s250 = sand.u32 %s55, 1
        %s251 = sand.u32 %s55, 1
        %s252 = smul.addr %s251, 8
        %s253 = scalar_lea.vmem [#allocation5], %s252
        %s254 = sand.u32 %s17, 1
        %s255 = sand.u32 %s17, 1
        %s256 = smul.addr %s255, 32
        %s257 = scalar_lea.vmem [#allocation6], %s256
        %s258 = sand.u32 %s17, 1
        %s259 = sand.u32 %s17, 1
        %s260 = smul.addr %s259, 32
        %s261 = scalar_lea.vmem [#allocation7], %s260
        %s262 = sand.u32 %s17, 1
        %s263 = sand.u32 %s17, 1
        %s264 = smul.addr %s263, 32
        %s265 = scalar_lea.vmem [#allocation8], %s264
        %s266 = sand.u32 %s17, 1
        %s267 = sand.u32 %s17, 1
        %s268 = smul.addr %s267, 32
        %s269 = scalar_lea.vmem [#allocation9], %s268
        %s270 = sshrl.u32 %s17, 3
        %s271 = sshrl.u32 %s17, 3
        %s272 = smov [#allocation10]
        %v273 = vld [vmem:[%s213] sm:$0xff]
        %274 = vst [vmem:[%s272] sm:$0xff] %v273
        %s275 = scalar_lea.vmem %s272, 8
        %s276 = scalar_lea.vmem %s213, 8 [#allocation0]
        %v277 = vld [vmem:[%s276] sm:$0xff]
        %278 = vst [vmem:[%s275] sm:$0xff] %v277
        %s279 = scalar_lea.vmem %s272, 16
        %s280 = scalar_lea.vmem %s213, 16 [#allocation0]
        %v281 = vld [vmem:[%s280] sm:$0xff]
        %282 = vst [vmem:[%s279] sm:$0xff] %v281
        %s283 = scalar_lea.vmem %s272, 24
        %s284 = scalar_lea.vmem %s213, 24 [#allocation0]
        %v285 = vld [vmem:[%s284] sm:$0xff]
        %286 = vst [vmem:[%s283] sm:$0xff] %v285
        %s287 = smov [#allocation11]
        %v288 = vld [vmem:[%s217] sm:$0xff]
        %289 = vst [vmem:[%s287] sm:$0xff] %v288
        %s290 = scalar_lea.vmem %s287, 8
        %s291 = scalar_lea.vmem %s217, 8 [#allocation1]
        %v292 = vld [vmem:[%s291] sm:$0xff]
        %293 = vst [vmem:[%s290] sm:$0xff] %v292
        %s294 = scalar_lea.vmem %s287, 16
        %s295 = scalar_lea.vmem %s217, 16 [#allocation1]
        %v296 = vld [vmem:[%s295] sm:$0xff]
        %297 = vst [vmem:[%s294] sm:$0xff] %v296
        %s298 = scalar_lea.vmem %s287, 24
        %s299 = scalar_lea.vmem %s217, 24 [#allocation1]
        %v300 = vld [vmem:[%s299] sm:$0xff]
        %301 = vst [vmem:[%s298] sm:$0xff] %v300
        %s302 = smov [#allocation12]
        %v303 = vld [vmem:[%s221] sm:$0xff]
        %304 = vst [vmem:[%s302] sm:$0xff] %v303
        %s305 = scalar_lea.vmem %s302, 8
        %s306 = scalar_lea.vmem %s221, 8 [#allocation2]
        %v307 = vld [vmem:[%s306] sm:$0xff]
        %308 = vst [vmem:[%s305] sm:$0xff] %v307
        %s309 = scalar_lea.vmem %s302, 16
        %s310 = scalar_lea.vmem %s221, 16 [#allocation2]
        %v311 = vld [vmem:[%s310] sm:$0xff]
        %312 = vst [vmem:[%s309] sm:$0xff] %v311
        %s313 = scalar_lea.vmem %s302, 24
        %s314 = scalar_lea.vmem %s221, 24 [#allocation2]
        %v315 = vld [vmem:[%s314] sm:$0xff]
        %316 = vst [vmem:[%s313] sm:$0xff] %v315
        %s317 = smov [#allocation13]
        %v318 = vld [vmem:[%s225] sm:$0xff]
        %319 = vst [vmem:[%s317] sm:$0xff] %v318
        %s320 = scalar_lea.vmem %s317, 8
        %s321 = scalar_lea.vmem %s225, 8 [#allocation3]
        %v322 = vld [vmem:[%s321] sm:$0xff]
        %323 = vst [vmem:[%s320] sm:$0xff] %v322
        %s324 = scalar_lea.vmem %s317, 16
        %s325 = scalar_lea.vmem %s225, 16 [#allocation3]
        %v326 = vld [vmem:[%s325] sm:$0xff]
        %327 = vst [vmem:[%s324] sm:$0xff] %v326
        %s328 = scalar_lea.vmem %s317, 24
        %s329 = scalar_lea.vmem %s225, 24 [#allocation3]
        %v330 = vld [vmem:[%s329] sm:$0xff]
        %331 = vst [vmem:[%s328] sm:$0xff] %v330
        %332 = vst [vmem:[%s257] sm:$0xff] 0.0
        %s333 = scalar_lea.vmem %s257, 8 [#allocation6]
        %334 = vst [vmem:[%s333] sm:$0xff] 0.0
        %s335 = scalar_lea.vmem %s257, 16 [#allocation6]
        %336 = vst [vmem:[%s335] sm:$0xff] 0.0
        %s337 = scalar_lea.vmem %s257, 24 [#allocation6]
        %338 = vst [vmem:[%s337] sm:$0xff] 0.0
        %339 = vst [vmem:[%s261] sm:$0xff] 0.0
        %s340 = scalar_lea.vmem %s261, 8 [#allocation7]
        %341 = vst [vmem:[%s340] sm:$0xff] 0.0
        %s342 = scalar_lea.vmem %s261, 16 [#allocation7]
        %343 = vst [vmem:[%s342] sm:$0xff] 0.0
        %s344 = scalar_lea.vmem %s261, 24 [#allocation7]
        %345 = vst [vmem:[%s344] sm:$0xff] 0.0
        %346 = vst [vmem:[%s265] sm:$0xff] 0.0
        %s347 = scalar_lea.vmem %s265, 8 [#allocation8]
        %348 = vst [vmem:[%s347] sm:$0xff] 0.0
        %s349 = scalar_lea.vmem %s265, 16 [#allocation8]
        %350 = vst [vmem:[%s349] sm:$0xff] 0.0
        %s351 = scalar_lea.vmem %s265, 24 [#allocation8]
        %352 = vst [vmem:[%s351] sm:$0xff] 0.0
        %353 = vst [vmem:[%s269] sm:$0xff] 0.0
        %s354 = scalar_lea.vmem %s269, 8 [#allocation9]
        %355 = vst [vmem:[%s354] sm:$0xff] 0.0
        %s356 = scalar_lea.vmem %s269, 16 [#allocation9]
        %357 = vst [vmem:[%s356] sm:$0xff] 0.0
        %s358 = scalar_lea.vmem %s269, 24 [#allocation9]
        %359 = vst [vmem:[%s358] sm:$0xff] 0.0
        %s360 = smov %s257
        %v361 = vlaneseq
        %v362 = vand.u32 %v361, 127
        %v363 = vmov %v362
        %v364 = vlaneseq
        %v365 = vshrl.u32 %v364, 7
        %v366 = vmov %v365
        %v367 = vld [vmem:[%s360] sm:$0xff]
        %vm370 = vcmp.eq.s32.totalorder %v366, %v363
        %v371 = vsel %vm370, 1.0, %v367
        %372 = vst [vmem:[%s360] sm:$0xff] %v371
        %s373 = scalar_lea.vmem %s360, 8
        %v374 = vld [vmem:[%s373] sm:$0xff]
        %v376 = vadd.s32 %v366, 8
        %vm377 = vcmp.eq.s32.totalorder %v376, %v363
        %v378 = vsel %vm377, 1.0, %v374
        %379 = vst [vmem:[%s373] sm:$0xff] %v378
        %s380 = scalar_lea.vmem %s360, 16
        %v381 = vld [vmem:[%s380] sm:$0xff]
        %v383 = vadd.s32 %v366, 16
        %vm384 = vcmp.eq.s32.totalorder %v383, %v363
        %v385 = vsel %vm384, 1.0, %v381
        %386 = vst [vmem:[%s380] sm:$0xff] %v385
        %s387 = scalar_lea.vmem %s360, 24
        %v388 = vld [vmem:[%s387] sm:$0xff]
        %v390 = vadd.s32 %v366, 24
        %vm391 = vcmp.eq.s32.totalorder %v390, %v363
        %v392 = vsel %vm391, 1.0, %v388
        %393 = vst [vmem:[%s387] sm:$0xff] %v392
        %s394 = smov %s269
        %v395 = vlaneseq
        %v396 = vand.u32 %v395, 127
        %v397 = vmov %v396
        %v398 = vlaneseq
        %v399 = vshrl.u32 %v398, 7
        %v400 = vmov %v399
        %v401 = vld [vmem:[%s394] sm:$0xff]
        %vm404 = vcmp.eq.s32.totalorder %v400, %v397
        %v405 = vsel %vm404, 1.0, %v401
        %406 = vst [vmem:[%s394] sm:$0xff] %v405
        %s407 = scalar_lea.vmem %s394, 8
        %v408 = vld [vmem:[%s407] sm:$0xff]
        %v410 = vadd.s32 %v400, 8
        %vm411 = vcmp.eq.s32.totalorder %v410, %v397
        %v412 = vsel %vm411, 1.0, %v408
        %413 = vst [vmem:[%s407] sm:$0xff] %v412
        %s414 = scalar_lea.vmem %s394, 16
        %v415 = vld [vmem:[%s414] sm:$0xff]
        %v417 = vadd.s32 %v400, 16
        %vm418 = vcmp.eq.s32.totalorder %v417, %v397
        %v419 = vsel %vm418, 1.0, %v415
        %420 = vst [vmem:[%s414] sm:$0xff] %v419
        %s421 = scalar_lea.vmem %s394, 24
        %v422 = vld [vmem:[%s421] sm:$0xff]
        %v424 = vadd.s32 %v400, 24
        %vm425 = vcmp.eq.s32.totalorder %v424, %v397
        %v426 = vsel %vm425, 1.0, %v422
        %427 = vst [vmem:[%s421] sm:$0xff] %v426
        // While loop
        $region97: #{custom-call.2} parent=95 // loop_pre_header
          _
        $region98: #{custom-call.2} parent=95 // loop_header
          %s429 = sphi 0, %s2039
          %v430 = vlaneseq
          %v431 = vand.u32 %v430, 127
          %v432 = vmov %v431
          %v433 = vlaneseq
          %v434 = vshrl.u32 %v433, 7
          %v435 = vmov %v434
          %s436 = smov [#allocation10]
          %v437 = vlaneseq
          %v438 = vand.u32 %v437, 127
          %vm439 = vcmp.ge.s32.totalorder %v438, 0
          %vm440 = vcmp.lt.s32.totalorder %v438, 32
          %vm441 = vmand %vm439, %vm440
          %v442 = vld [vmem:[%s436] sm:$0xff]
          %v443 = vsel %vm441, %v442, 0.0
          %v444 = vmul.f32 %v443, %v443
          %vm447 = vcmp.eq.s32.totalorder %v435, %v432
          %v448 = vsel %vm447, 0.0, %v444
          %s449 = scalar_lea.vmem %s436, 8
          %v450 = vld [vmem:[%s449] sm:$0xff]
          %v451 = vsel %vm441, %v450, 0.0
          %v452 = vmul.f32 %v451, %v451
          %v454 = vadd.s32 %v435, 8
          %vm455 = vcmp.eq.s32.totalorder %v454, %v432
          %v456 = vsel %vm455, 0.0, %v452
          %v457 = vadd.f32 %v448, %v456
          %v458 = vadd.f32 %v444, %v452
          %s459 = scalar_lea.vmem %s436, 16
          %v460 = vld [vmem:[%s459] sm:$0xff]
          %v461 = vsel %vm441, %v460, 0.0
          %v462 = vmul.f32 %v461, %v461
          %v464 = vadd.s32 %v435, 16
          %vm465 = vcmp.eq.s32.totalorder %v464, %v432
          %v466 = vsel %vm465, 0.0, %v462
          %v467 = vadd.f32 %v457, %v466
          %v468 = vadd.f32 %v458, %v462
          %s469 = scalar_lea.vmem %s436, 24
          %v470 = vld [vmem:[%s469] sm:$0xff]
          %v471 = vsel %vm441, %v470, 0.0
          %v472 = vmul.f32 %v471, %v471
          %v474 = vadd.s32 %v435, 24
          %vm475 = vcmp.eq.s32.totalorder %v474, %v432
          %v476 = vsel %vm475, 0.0, %v472
          %v477 = vadd.f32 %v467, %v476
          %v478 = vadd.f32 %v468, %v472
          %v479 = vlaneseq
          %v480 = vand.u32 %v479, 127
          %v481 = vmov %v480
          %v482 = vlaneseq
          %v483 = vshrl.u32 %v482, 7
          %v484 = vmov %v483
          %s485 = smov [#allocation11]
          %v486 = vlaneseq
          %v487 = vand.u32 %v486, 127
          %vm488 = vcmp.ge.s32.totalorder %v487, 0
          %vm489 = vcmp.lt.s32.totalorder %v487, 32
          %vm490 = vmand %vm488, %vm489
          %v491 = vld [vmem:[%s485] sm:$0xff]
          %v492 = vsel %vm490, %v491, 0.0
          %v493 = vmul.f32 %v492, %v492
          %v494 = vadd.f32 %v477, %v493
          %v495 = vadd.f32 %v478, %v493
          %s496 = scalar_lea.vmem %s485, 8
          %v497 = vld [vmem:[%s496] sm:$0xff]
          %v498 = vsel %vm490, %v497, 0.0
          %v499 = vmul.f32 %v498, %v498
          %v500 = vadd.f32 %v494, %v499
          %v501 = vadd.f32 %v495, %v499
          %s502 = scalar_lea.vmem %s485, 16
          %v503 = vld [vmem:[%s502] sm:$0xff]
          %v504 = vsel %vm490, %v503, 0.0
          %v505 = vmul.f32 %v504, %v504
          %v506 = vadd.f32 %v500, %v505
          %v507 = vadd.f32 %v501, %v505
          %s508 = scalar_lea.vmem %s485, 24
          %v509 = vld [vmem:[%s508] sm:$0xff]
          %v510 = vsel %vm490, %v509, 0.0
          %v511 = vmul.f32 %v510, %v510
          %v512 = vadd.f32 %v506, %v511
          %v513 = vadd.f32 %v507, %v511
          %v514 = vlaneseq
          %v515 = vand.u32 %v514, 127
          %v516 = vmov %v515
          %v517 = vlaneseq
          %v518 = vshrl.u32 %v517, 7
          %v519 = vmov %v518
          %s520 = smov [#allocation12]
          %v521 = vlaneseq
          %v522 = vand.u32 %v521, 127
          %vm523 = vcmp.ge.s32.totalorder %v522, 0
          %vm524 = vcmp.lt.s32.totalorder %v522, 32
          %vm525 = vmand %vm523, %vm524
          %v526 = vld [vmem:[%s520] sm:$0xff]
          %v527 = vsel %vm525, %v526, 0.0
          %v528 = vmul.f32 %v527, %v527
          %v529 = vadd.f32 %v512, %v528
          %v530 = vadd.f32 %v513, %v528
          %s531 = scalar_lea.vmem %s520, 8
          %v532 = vld [vmem:[%s531] sm:$0xff]
          %v533 = vsel %vm525, %v532, 0.0
          %v534 = vmul.f32 %v533, %v533
          %v535 = vadd.f32 %v529, %v534
          %v536 = vadd.f32 %v530, %v534
          %s537 = scalar_lea.vmem %s520, 16
          %v538 = vld [vmem:[%s537] sm:$0xff]
          %v539 = vsel %vm525, %v538, 0.0
          %v540 = vmul.f32 %v539, %v539
          %v541 = vadd.f32 %v535, %v540
          %v542 = vadd.f32 %v536, %v540
          %s543 = scalar_lea.vmem %s520, 24
          %v544 = vld [vmem:[%s543] sm:$0xff]
          %v545 = vsel %vm525, %v544, 0.0
          %v546 = vmul.f32 %v545, %v545
          %v547 = vadd.f32 %v541, %v546
          %v548 = vadd.f32 %v542, %v546
          %v549 = vlaneseq
          %v550 = vand.u32 %v549, 127
          %v551 = vmov %v550
          %v552 = vlaneseq
          %v553 = vshrl.u32 %v552, 7
          %v554 = vmov %v553
          %s555 = smov [#allocation13]
          %v556 = vlaneseq
          %v557 = vand.u32 %v556, 127
          %vm558 = vcmp.ge.s32.totalorder %v557, 0
          %vm559 = vcmp.lt.s32.totalorder %v557, 32
          %vm560 = vmand %vm558, %vm559
          %v561 = vld [vmem:[%s555] sm:$0xff]
          %v562 = vsel %vm560, %v561, 0.0
          %v563 = vmul.f32 %v562, %v562
          %vm566 = vcmp.eq.s32.totalorder %v554, %v551
          %v567 = vsel %vm566, 0.0, %v563
          %v568 = vadd.f32 %v547, %v567
          %v569 = vadd.f32 %v548, %v563
          %s570 = scalar_lea.vmem %s555, 8
          %v571 = vld [vmem:[%s570] sm:$0xff]
          %v572 = vsel %vm560, %v571, 0.0
          %v573 = vmul.f32 %v572, %v572
          %v575 = vadd.s32 %v554, 8
          %vm576 = vcmp.eq.s32.totalorder %v575, %v551
          %v577 = vsel %vm576, 0.0, %v573
          %v578 = vadd.f32 %v568, %v577
          %v579 = vadd.f32 %v569, %v573
          %s580 = scalar_lea.vmem %s555, 16
          %v581 = vld [vmem:[%s580] sm:$0xff]
          %v582 = vsel %vm560, %v581, 0.0
          %v583 = vmul.f32 %v582, %v582
          %v585 = vadd.s32 %v554, 16
          %vm586 = vcmp.eq.s32.totalorder %v585, %v551
          %v587 = vsel %vm586, 0.0, %v583
          %v588 = vadd.f32 %v578, %v587
          %v589 = vadd.f32 %v579, %v583
          %s590 = scalar_lea.vmem %s555, 24
          %v591 = vld [vmem:[%s590] sm:$0xff]
          %v592 = vsel %vm560, %v591, 0.0
          %v593 = vmul.f32 %v592, %v592
          %v595 = vadd.s32 %v554, 24
          %vm596 = vcmp.eq.s32.totalorder %v595, %v551
          %v597 = vsel %vm596, 0.0, %v593
          %v598 = vadd.f32 %v588, %v597
          %v599 = vadd.f32 %v589, %v593
          %600 = vadd.xlane.f32.xlu0 %v599
          %v601 = vpop.xlane.xlu0 %600
          %v602 = vrot.slane %v601, 4
          %v603 = vadd.f32 %v601, %v602
          %v604 = vrot.slane %v603, 2
          %v605 = vadd.f32 %v603, %v604
          %v606 = vrot.slane %v605, 1
          %v607 = vadd.f32 %v605, %v606
          %608 = vadd.xlane.f32.xlu0 %v598
          %v609 = vpop.xlane.xlu0 %608
          %v610 = vrot.slane %v609, 4
          %v611 = vadd.f32 %v609, %v610
          %v612 = vrot.slane %v611, 2
          %v613 = vadd.f32 %v611, %v612
          %v614 = vrot.slane %v613, 1
          %v615 = vadd.f32 %v613, %v614
          %s616 = vtos %v615
          %s617 = vtos %v607
          %s618 = smul.f32 1e-10, %s617
          %p619 = scmp.le.f32.partialorder %s616, %s618
          %p620 = scmp.ge.s32.totalorder %s429, 15
          %p621 = por %p619, %p620
        $region99: #{custom-call.2} parent=95 // loop_header_branch
          %2041 = sbr.rel (%p621) target = $region103
        $region100: #{custom-call.2} parent=95 // loop_body
          loop: start=0, step=1, limit=63
          $region104: #{custom-call.2} parent=100 // loop_pre_header
            _
          $region105: #{custom-call.2} parent=100 // loop_header
            %s623 = sphi 0, %s627
            %p624 = scmp.ge.s32.totalorder %s623, 63
          $region106: #{custom-call.2} parent=100 // loop_header_branch
            %626 = sbr.rel (%p624) target = $region110
          $region107: #{custom-call.2} parent=100 // loop_body
            #allocation14 [shape = 'f32[1024]{0}', space=vmem, size = 0x1000, scoped, tag = 'a_tl_diag vmem']
            #allocation15 [shape = 'f32[1024]{0}', space=vmem, size = 0x1000, scoped, tag = 'a_tr_diag vmem']
            #allocation16 [shape = 'f32[1024]{0}', space=vmem, size = 0x1000, scoped, tag = 'a_br_diag vmem']
            #allocation17 [shape = 'f32[1024]{0}', space=vmem, size = 0x1000, scoped, tag = 'rt1 vmem']
            #allocation18 [shape = 'f32[1024]{0}', space=vmem, size = 0x1000, scoped, tag = 'rt2 vmem']
            #allocation19 [shape = 'f32[1024]{0}', space=vmem, size = 0x1000, scoped, tag = 'c vmem']
            #allocation20 [shape = 'f32[1024]{0}', space=vmem, size = 0x1000, scoped, tag = 's vmem']
            #allocation21 [shape = 'f32[16384]{0}', space=vmem, size = 0x10000, scoped, tag = 'c broadcast']
            #allocation22 [shape = 'f32[16384]{0}', space=vmem, size = 0x10000, scoped, tag = 's broadcast']
            %s628 = smov [#allocation10]
            %s629 = smov [#allocation14]
            %v630 = vlaneseq
            %v631 = vand.u32 %v630, 127
            %v632 = vmov %v631
            %v633 = vlaneseq
            %v634 = vshrl.u32 %v633, 7
            %v635 = vmov %v634
            %v636 = vld [vmem:[%s628] sm:$0xff]
            %vm639 = vcmp.eq.s32.totalorder %v635, %v632
            %v640 = vsel %vm639, %v636, 0.0
            %s641 = scalar_lea.vmem %s628, 8
            %v642 = vld [vmem:[%s641] sm:$0xff]
            %v644 = vadd.s32 %v635, 8
            %vm645 = vcmp.eq.s32.totalorder %v644, %v632
            %v646 = vsel %vm645, %v642, %v640
            %s647 = scalar_lea.vmem %s628, 16
            %v648 = vld [vmem:[%s647] sm:$0xff]
            %v650 = vadd.s32 %v635, 16
            %vm651 = vcmp.eq.s32.totalorder %v650, %v632
            %v652 = vsel %vm651, %v648, %v646
            %s653 = scalar_lea.vmem %s628, 24
            %v654 = vld [vmem:[%s653] sm:$0xff]
            %v656 = vadd.s32 %v635, 24
            %vm657 = vcmp.eq.s32.totalorder %v656, %v632
            %v658 = vsel %vm657, %v654, %v652
            %v659 = vrot.slane %v658, 4
            %v660 = vadd.f32 %v658, %v659
            %v661 = vrot.slane %v660, 2
            %v662 = vadd.f32 %v660, %v661
            %v663 = vrot.slane %v662, 1
            %v664 = vadd.f32 %v662, %v663
            %665 = vst [vmem:[%s629] sm:$0x1] %v664
            %s666 = smov [#allocation11]
            %s667 = smov [#allocation15]
            %v668 = vlaneseq
            %v669 = vand.u32 %v668, 127
            %v670 = vmov %v669
            %v671 = vlaneseq
            %v672 = vshrl.u32 %v671, 7
            %v673 = vmov %v672
            %v674 = vld [vmem:[%s666] sm:$0xff]
            %vm677 = vcmp.eq.s32.totalorder %v673, %v670
            %v678 = vsel %vm677, %v674, 0.0
            %s679 = scalar_lea.vmem %s666, 8
            %v680 = vld [vmem:[%s679] sm:$0xff]
            %v682 = vadd.s32 %v673, 8
            %vm683 = vcmp.eq.s32.totalorder %v682, %v670
            %v684 = vsel %vm683, %v680, %v678
            %s685 = scalar_lea.vmem %s666, 16
            %v686 = vld [vmem:[%s685] sm:$0xff]
            %v688 = vadd.s32 %v673, 16
            %vm689 = vcmp.eq.s32.totalorder %v688, %v670
            %v690 = vsel %vm689, %v686, %v684
            %s691 = scalar_lea.vmem %s666, 24
            %v692 = vld [vmem:[%s691] sm:$0xff]
            %v694 = vadd.s32 %v673, 24
            %vm695 = vcmp.eq.s32.totalorder %v694, %v670
            %v696 = vsel %vm695, %v692, %v690
            %v697 = vrot.slane %v696, 4
            %v698 = vadd.f32 %v696, %v697
            %v699 = vrot.slane %v698, 2
            %v700 = vadd.f32 %v698, %v699
            %v701 = vrot.slane %v700, 1
            %v702 = vadd.f32 %v700, %v701
            %703 = vst [vmem:[%s667] sm:$0x1] %v702
            %s704 = smov [#allocation13]
            %s705 = smov [#allocation16]
            %v706 = vlaneseq
            %v707 = vand.u32 %v706, 127
            %v708 = vmov %v707
            %v709 = vlaneseq
            %v710 = vshrl.u32 %v709, 7
            %v711 = vmov %v710
            %v712 = vld [vmem:[%s704] sm:$0xff]
            %vm715 = vcmp.eq.s32.totalorder %v711, %v708
            %v716 = vsel %vm715, %v712, 0.0
            %s717 = scalar_lea.vmem %s704, 8
            %v718 = vld [vmem:[%s717] sm:$0xff]
            %v720 = vadd.s32 %v711, 8
            %vm721 = vcmp.eq.s32.totalorder %v720, %v708
            %v722 = vsel %vm721, %v718, %v716
            %s723 = scalar_lea.vmem %s704, 16
            %v724 = vld [vmem:[%s723] sm:$0xff]
            %v726 = vadd.s32 %v711, 16
            %vm727 = vcmp.eq.s32.totalorder %v726, %v708
            %v728 = vsel %vm727, %v724, %v722
            %s729 = scalar_lea.vmem %s704, 24
            %v730 = vld [vmem:[%s729] sm:$0xff]
            %v732 = vadd.s32 %v711, 24
            %vm733 = vcmp.eq.s32.totalorder %v732, %v708
            %v734 = vsel %vm733, %v730, %v728
            %v735 = vrot.slane %v734, 4
            %v736 = vadd.f32 %v734, %v735
            %v737 = vrot.slane %v736, 2
            %v738 = vadd.f32 %v736, %v737
            %v739 = vrot.slane %v738, 1
            %v740 = vadd.f32 %v738, %v739
            %741 = vst [vmem:[%s705] sm:$0x1] %v740
            %s742 = smov [#allocation19]
            %s743 = smov [#allocation20]
            %s744 = smov [#allocation14]
            %v745 = vld [vmem:[%s744] sm:$0xff]
            %s746 = smov [#allocation15]
            %v747 = vld [vmem:[%s746] sm:$0xff]
            %s748 = smov [#allocation16]
            %v749 = vld [vmem:[%s748] sm:$0xff]
            %v750 = vsub.f32 %v749, %v745
            %v751 = vmul.f32 2.0, %v747
            %v752 = vrcp.pop %v751
            %v753 = vmul.f32 %v750, %v752
            %vm754 = vcmp.ge.f32.partialorder %v753, 0.0
            %v755 = vmul.f32 %v753, %v753
            %v756 = vadd.f32 1.0, %v755
            %v757 = vrsqrt.pop %v756
            %v758 = vmul.f32 %v756, %v757
            %vm759 = vcmp.eq.f32.partialorder %v756, inf
            %v760 = vsel %vm759, %v756, %v758
            %vm761 = vcmp.eq.f32.partialorder %v756, 0.0
            %v762 = vand.u32 %v756, 2147483648
            %v763 = vsel %vm761, %v762, %v760
            %v764 = vxor.u32 %v763, 2147483648
            %v765 = vsel %vm754, %v763, %v764
            %v766 = vadd.f32 %v753, %v765
            %v767 = vrcp.pop %v766
            %v768 = vand.u32 2147483647, %v745
            %v769 = vand.u32 2147483647, %v747
            %v770 = vand.u32 2147483647, %v749
            %v771 = vmin.f32 %v768, %v770
            %v772 = vmul.f32 1.1920929e-08, %v771
            %vm773 = vcmp.le.f32.partialorder %v769, %v772
            %v774 = vsel %vm773, 0.0, %v767
            %v775 = vmul.f32 %v774, %v774
            %v776 = vadd.f32 1.0, %v775
            %v777 = vrsqrt.pop %v776
            %v778 = vmul.f32 %v774, %v777
            %v779 = vmul.f32 %v774, %v747
            %v780 = vsub.f32 %v745, %v779
            %v781 = vmul.f32 %v774, %v747
            %v782 = vadd.f32 %v749, %v781
            %s783 = smov [#allocation17]
            %784 = vst [vmem:[%s783] sm:$0xff] %v780
            %s785 = smov [#allocation18]
            %786 = vst [vmem:[%s785] sm:$0xff] %v782
            %s787 = smov %s742
            %788 = vst [vmem:[%s787] sm:$0xff] %v777
            %s789 = smov %s743
            %790 = vst [vmem:[%s789] sm:$0xff] %v778
            %s791 = smov [#allocation19]
            %v792 = vld [vmem:[%s791] ss:$0 sm:$0xff]
            %v793 = vlaneseq
            %v794 = vand.u32 %v793, 127
            %v795 = vmov %v794
            %v796 = vlaneseq
            %v797 = vshrl.u32 %v796, 7
            %v798 = vmov %v797
            %vm800 = vcmp.eq.s32.totalorder %v798, %v795
            %v801 = vsel %vm800, %v792, 0.0
            %802 = vadd.xlane.f32.xlu0 %v801
            %v803 = vpop.xlane.xlu0 %802
            %s804 = smov [#allocation21]
            %805 = vst [vmem:[%s804] sm:$0xff] %v803
            %s806 = smov [#allocation19]
            %v807 = vld [vmem:[%s806] ss:$0 sm:$0xff]
            %v808 = vlaneseq
            %v809 = vand.u32 %v808, 127
            %v810 = vmov %v809
            %v811 = vlaneseq
            %v812 = vshrl.u32 %v811, 7
            %v813 = vmov %v812
            %v814 = vadd.s32 %v813, 8
            %vm815 = vcmp.eq.s32.totalorder %v814, %v810
            %v816 = vsel %vm815, %v807, 0.0
            %817 = vadd.xlane.f32.xlu0 %v816
            %v818 = vpop.xlane.xlu0 %817
            %s819 = smov [#allocation21]
            %s820 = scalar_lea.vmem %s819, 8
            %821 = vst [vmem:[%s820] sm:$0xff] %v818
            %s822 = smov [#allocation19]
            %v823 = vld [vmem:[%s822] ss:$0 sm:$0xff]
            %v824 = vlaneseq
            %v825 = vand.u32 %v824, 127
            %v826 = vmov %v825
            %v827 = vlaneseq
            %v828 = vshrl.u32 %v827, 7
            %v829 = vmov %v828
            %v830 = vadd.s32 %v829, 16
            %vm831 = vcmp.eq.s32.totalorder %v830, %v826
            %v832 = vsel %vm831, %v823, 0.0
            %833 = vadd.xlane.f32.xlu0 %v832
            %v834 = vpop.xlane.xlu0 %833
            %s835 = smov [#allocation21]
            %s836 = scalar_lea.vmem %s835, 16
            %837 = vst [vmem:[%s836] sm:$0xff] %v834
            %s838 = smov [#allocation19]
            %v839 = vld [vmem:[%s838] ss:$0 sm:$0xff]
            %v840 = vlaneseq
            %v841 = vand.u32 %v840, 127
            %v842 = vmov %v841
            %v843 = vlaneseq
            %v844 = vshrl.u32 %v843, 7
            %v845 = vmov %v844
            %v846 = vadd.s32 %v845, 24
            %vm847 = vcmp.eq.s32.totalorder %v846, %v842
            %v848 = vsel %vm847, %v839, 0.0
            %849 = vadd.xlane.f32.xlu0 %v848
            %v850 = vpop.xlane.xlu0 %849
            %s851 = smov [#allocation21]
            %s852 = scalar_lea.vmem %s851, 24
            %853 = vst [vmem:[%s852] sm:$0xff] %v850
            %s854 = smov [#allocation20]
            %v855 = vld [vmem:[%s854] ss:$0 sm:$0xff]
            %v856 = vlaneseq
            %v857 = vand.u32 %v856, 127
            %v858 = vmov %v857
            %v859 = vlaneseq
            %v860 = vshrl.u32 %v859, 7
            %v861 = vmov %v860
            %vm863 = vcmp.eq.s32.totalorder %v861, %v858
            %v864 = vsel %vm863, %v855, 0.0
            %865 = vadd.xlane.f32.xlu0 %v864
            %v866 = vpop.xlane.xlu0 %865
            %s867 = smov [#allocation22]
            %868 = vst [vmem:[%s867] sm:$0xff] %v866
            %s869 = smov [#allocation20]
            %v870 = vld [vmem:[%s869] ss:$0 sm:$0xff]
            %v871 = vlaneseq
            %v872 = vand.u32 %v871, 127
            %v873 = vmov %v872
            %v874 = vlaneseq
            %v875 = vshrl.u32 %v874, 7
            %v876 = vmov %v875
            %v877 = vadd.s32 %v876, 8
            %vm878 = vcmp.eq.s32.totalorder %v877, %v873
            %v879 = vsel %vm878, %v870, 0.0
            %880 = vadd.xlane.f32.xlu0 %v879
            %v881 = vpop.xlane.xlu0 %880
            %s882 = smov [#allocation22]
            %s883 = scalar_lea.vmem %s882, 8
            %884 = vst [vmem:[%s883] sm:$0xff] %v881
            %s885 = smov [#allocation20]
            %v886 = vld [vmem:[%s885] ss:$0 sm:$0xff]
            %v887 = vlaneseq
            %v888 = vand.u32 %v887, 127
            %v889 = vmov %v888
            %v890 = vlaneseq
            %v891 = vshrl.u32 %v890, 7
            %v892 = vmov %v891
            %v893 = vadd.s32 %v892, 16
            %vm894 = vcmp.eq.s32.totalorder %v893, %v889
            %v895 = vsel %vm894, %v886, 0.0
            %896 = vadd.xlane.f32.xlu0 %v895
            %v897 = vpop.xlane.xlu0 %896
            %s898 = smov [#allocation22]
            %s899 = scalar_lea.vmem %s898, 16
            %900 = vst [vmem:[%s899] sm:$0xff] %v897
            %s901 = smov [#allocation20]
            %v902 = vld [vmem:[%s901] ss:$0 sm:$0xff]
            %v903 = vlaneseq
            %v904 = vand.u32 %v903, 127
            %v905 = vmov %v904
            %v906 = vlaneseq
            %v907 = vshrl.u32 %v906, 7
            %v908 = vmov %v907
            %v909 = vadd.s32 %v908, 24
            %vm910 = vcmp.eq.s32.totalorder %v909, %v905
            %v911 = vsel %vm910, %v902, 0.0
            %912 = vadd.xlane.f32.xlu0 %v911
            %v913 = vpop.xlane.xlu0 %912
            %s914 = smov [#allocation22]
            %s915 = scalar_lea.vmem %s914, 24
            %916 = vst [vmem:[%s915] sm:$0xff] %v913
            %s917 = smov [#allocation21]
            %v918 = vld [vmem:[%s917] sm:$0xff]
            %s919 = smov [#allocation22]
            %v920 = vld [vmem:[%s919] sm:$0xff]
            %s921 = smov [#allocation10]
            %s922 = smov [#allocation11]
            %s923 = smov [#allocation12]
            %s924 = smov [#allocation13]
            %v925 = vld [vmem:[%s921] sm:$0xff]
            %v926 = vld [vmem:[%s922] sm:$0xff]
            %v927 = vld [vmem:[%s923] sm:$0xff]
            %v928 = vld [vmem:[%s924] sm:$0xff]
            %v929 = vmul.f32 %v918, %v925
            %v930 = vmul.f32 %v920, %v927
            %v931 = vsub.f32 %v929, %v930
            %v932 = vmul.f32 %v918, %v926
            %v933 = vmul.f32 %v920, %v928
            %v934 = vsub.f32 %v932, %v933
            %v935 = vmul.f32 %v920, %v925
            %v936 = vmul.f32 %v918, %v927
            %v937 = vadd.f32 %v935, %v936
            %v938 = vmul.f32 %v920, %v926
            %v939 = vmul.f32 %v918, %v928
            %v940 = vadd.f32 %v938, %v939
            %941 = vst [vmem:[%s921] sm:$0xff] %v931
            %942 = vst [vmem:[%s922] sm:$0xff] %v934
            %943 = vst [vmem:[%s923] sm:$0xff] %v937
            %944 = vst [vmem:[%s924] sm:$0xff] %v940
            %s945 = smov [#allocation21]
            %s946 = scalar_lea.vmem %s945, 8
            %v947 = vld [vmem:[%s946] sm:$0xff]
            %s948 = smov [#allocation22]
            %s949 = scalar_lea.vmem %s948, 8
            %v950 = vld [vmem:[%s949] sm:$0xff]
            %s951 = smov [#allocation10]
            %s952 = scalar_lea.vmem %s951, 8
            %s953 = smov [#allocation11]
            %s954 = scalar_lea.vmem %s953, 8
            %s955 = smov [#allocation12]
            %s956 = scalar_lea.vmem %s955, 8
            %s957 = smov [#allocation13]
            %s958 = scalar_lea.vmem %s957, 8
            %v959 = vld [vmem:[%s952] sm:$0xff]
            %v960 = vld [vmem:[%s954] sm:$0xff]
            %v961 = vld [vmem:[%s956] sm:$0xff]
            %v962 = vld [vmem:[%s958] sm:$0xff]
            %v963 = vmul.f32 %v947, %v959
            %v964 = vmul.f32 %v950, %v961
            %v965 = vsub.f32 %v963, %v964
            %v966 = vmul.f32 %v947, %v960
            %v967 = vmul.f32 %v950, %v962
            %v968 = vsub.f32 %v966, %v967
            %v969 = vmul.f32 %v950, %v959
            %v970 = vmul.f32 %v947, %v961
            %v971 = vadd.f32 %v969, %v970
            %v972 = vmul.f32 %v950, %v960
            %v973 = vmul.f32 %v947, %v962
            %v974 = vadd.f32 %v972, %v973
            %975 = vst [vmem:[%s952] sm:$0xff] %v965
            %976 = vst [vmem:[%s954] sm:$0xff] %v968
            %977 = vst [vmem:[%s956] sm:$0xff] %v971
            %978 = vst [vmem:[%s958] sm:$0xff] %v974
            %s979 = smov [#allocation21]
            %s980 = scalar_lea.vmem %s979, 16
            %v981 = vld [vmem:[%s980] sm:$0xff]
            %s982 = smov [#allocation22]
            %s983 = scalar_lea.vmem %s982, 16
            %v984 = vld [vmem:[%s983] sm:$0xff]
            %s985 = smov [#allocation10]
            %s986 = scalar_lea.vmem %s985, 16
            %s987 = smov [#allocation11]
            %s988 = scalar_lea.vmem %s987, 16
            %s989 = smov [#allocation12]
            %s990 = scalar_lea.vmem %s989, 16
            %s991 = smov [#allocation13]
            %s992 = scalar_lea.vmem %s991, 16
            %v993 = vld [vmem:[%s986] sm:$0xff]
            %v994 = vld [vmem:[%s988] sm:$0xff]
            %v995 = vld [vmem:[%s990] sm:$0xff]
            %v996 = vld [vmem:[%s992] sm:$0xff]
            %v997 = vmul.f32 %v981, %v993
            %v998 = vmul.f32 %v984, %v995
            %v999 = vsub.f32 %v997, %v998
            %v1000 = vmul.f32 %v981, %v994
            %v1001 = vmul.f32 %v984, %v996
            %v1002 = vsub.f32 %v1000, %v1001
            %v1003 = vmul.f32 %v984, %v993
            %v1004 = vmul.f32 %v981, %v995
            %v1005 = vadd.f32 %v1003, %v1004
            %v1006 = vmul.f32 %v984, %v994
            %v1007 = vmul.f32 %v981, %v996
            %v1008 = vadd.f32 %v1006, %v1007
            %1009 = vst [vmem:[%s986] sm:$0xff] %v999
            %1010 = vst [vmem:[%s988] sm:$0xff] %v1002
            %1011 = vst [vmem:[%s990] sm:$0xff] %v1005
            %1012 = vst [vmem:[%s992] sm:$0xff] %v1008
            %s1013 = smov [#allocation21]
            %s1014 = scalar_lea.vmem %s1013, 24
            %v1015 = vld [vmem:[%s1014] sm:$0xff]
            %s1016 = smov [#allocation22]
            %s1017 = scalar_lea.vmem %s1016, 24
            %v1018 = vld [vmem:[%s1017] sm:$0xff]
            %s1019 = smov [#allocation10]
            %s1020 = scalar_lea.vmem %s1019, 24
            %s1021 = smov [#allocation11]
            %s1022 = scalar_lea.vmem %s1021, 24
            %s1023 = smov [#allocation12]
            %s1024 = scalar_lea.vmem %s1023, 24
            %s1025 = smov [#allocation13]
            %s1026 = scalar_lea.vmem %s1025, 24
            %v1027 = vld [vmem:[%s1020] sm:$0xff]
            %v1028 = vld [vmem:[%s1022] sm:$0xff]
            %v1029 = vld [vmem:[%s1024] sm:$0xff]
            %v1030 = vld [vmem:[%s1026] sm:$0xff]
            %v1031 = vmul.f32 %v1015, %v1027
            %v1032 = vmul.f32 %v1018, %v1029
            %v1033 = vsub.f32 %v1031, %v1032
            %v1034 = vmul.f32 %v1015, %v1028
            %v1035 = vmul.f32 %v1018, %v1030
            %v1036 = vsub.f32 %v1034, %v1035
            %v1037 = vmul.f32 %v1018, %v1027
            %v1038 = vmul.f32 %v1015, %v1029
            %v1039 = vadd.f32 %v1037, %v1038
            %v1040 = vmul.f32 %v1018, %v1028
            %v1041 = vmul.f32 %v1015, %v1030
            %v1042 = vadd.f32 %v1040, %v1041
            %1043 = vst [vmem:[%s1020] sm:$0xff] %v1033
            %1044 = vst [vmem:[%s1022] sm:$0xff] %v1036
            %1045 = vst [vmem:[%s1024] sm:$0xff] %v1039
            %1046 = vst [vmem:[%s1026] sm:$0xff] %v1042
            %s1047 = smov [#allocation19]
            %v1048 = vld [vmem:[%s1047] ss:$0 sm:$0xff]
            %s1049 = smov [#allocation20]
            %v1050 = vld [vmem:[%s1049] ss:$0 sm:$0xff]
            %s1051 = smov [#allocation10]
            %s1052 = smov [#allocation11]
            %s1053 = smov [#allocation12]
            %s1054 = smov [#allocation13]
            %v1055 = vld [vmem:[%s1051] sm:$0xff]
            %v1056 = vld [vmem:[%s1052] sm:$0xff]
            %v1057 = vld [vmem:[%s1053] sm:$0xff]
            %v1058 = vld [vmem:[%s1054] sm:$0xff]
            %v1059 = vmul.f32 %v1048, %v1055
            %v1060 = vmul.f32 %v1050, %v1056
            %v1061 = vsub.f32 %v1059, %v1060
            %v1062 = vmul.f32 %v1050, %v1055
            %v1063 = vmul.f32 %v1048, %v1056
            %v1064 = vadd.f32 %v1062, %v1063
            %v1065 = vmul.f32 %v1048, %v1057
            %v1066 = vmul.f32 %v1050, %v1058
            %v1067 = vsub.f32 %v1065, %v1066
            %v1068 = vmul.f32 %v1050, %v1057
            %v1069 = vmul.f32 %v1048, %v1058
            %v1070 = vadd.f32 %v1068, %v1069
            %1071 = vst [vmem:[%s1051] sm:$0xff] %v1061
            %1072 = vst [vmem:[%s1052] sm:$0xff] %v1064
            %1073 = vst [vmem:[%s1053] sm:$0xff] %v1067
            %1074 = vst [vmem:[%s1054] sm:$0xff] %v1070
            %s1075 = smov [#allocation10]
            %s1076 = scalar_lea.vmem %s1075, 8
            %s1077 = smov [#allocation11]
            %s1078 = scalar_lea.vmem %s1077, 8
            %s1079 = smov [#allocation12]
            %s1080 = scalar_lea.vmem %s1079, 8
            %s1081 = smov [#allocation13]
            %s1082 = scalar_lea.vmem %s1081, 8
            %v1083 = vld [vmem:[%s1076] sm:$0xff]
            %v1084 = vld [vmem:[%s1078] sm:$0xff]
            %v1085 = vld [vmem:[%s1080] sm:$0xff]
            %v1086 = vld [vmem:[%s1082] sm:$0xff]
            %v1087 = vmul.f32 %v1048, %v1083
            %v1088 = vmul.f32 %v1050, %v1084
            %v1089 = vsub.f32 %v1087, %v1088
            %v1090 = vmul.f32 %v1050, %v1083
            %v1091 = vmul.f32 %v1048, %v1084
            %v1092 = vadd.f32 %v1090, %v1091
            %v1093 = vmul.f32 %v1048, %v1085
            %v1094 = vmul.f32 %v1050, %v1086
            %v1095 = vsub.f32 %v1093, %v1094
            %v1096 = vmul.f32 %v1050, %v1085
            %v1097 = vmul.f32 %v1048, %v1086
            %v1098 = vadd.f32 %v1096, %v1097
            %1099 = vst [vmem:[%s1076] sm:$0xff] %v1089
            %1100 = vst [vmem:[%s1078] sm:$0xff] %v1092
            %1101 = vst [vmem:[%s1080] sm:$0xff] %v1095
            %1102 = vst [vmem:[%s1082] sm:$0xff] %v1098
            %s1103 = smov [#allocation10]
            %s1104 = scalar_lea.vmem %s1103, 16
            %s1105 = smov [#allocation11]
            %s1106 = scalar_lea.vmem %s1105, 16
            %s1107 = smov [#allocation12]
            %s1108 = scalar_lea.vmem %s1107, 16
            %s1109 = smov [#allocation13]
            %s1110 = scalar_lea.vmem %s1109, 16
            %v1111 = vld [vmem:[%s1104] sm:$0xff]
            %v1112 = vld [vmem:[%s1106] sm:$0xff]
            %v1113 = vld [vmem:[%s1108] sm:$0xff]
            %v1114 = vld [vmem:[%s1110] sm:$0xff]
            %v1115 = vmul.f32 %v1048, %v1111
            %v1116 = vmul.f32 %v1050, %v1112
            %v1117 = vsub.f32 %v1115, %v1116
            %v1118 = vmul.f32 %v1050, %v1111
            %v1119 = vmul.f32 %v1048, %v1112
            %v1120 = vadd.f32 %v1118, %v1119
            %v1121 = vmul.f32 %v1048, %v1113
            %v1122 = vmul.f32 %v1050, %v1114
            %v1123 = vsub.f32 %v1121, %v1122
            %v1124 = vmul.f32 %v1050, %v1113
            %v1125 = vmul.f32 %v1048, %v1114
            %v1126 = vadd.f32 %v1124, %v1125
            %1127 = vst [vmem:[%s1104] sm:$0xff] %v1117
            %1128 = vst [vmem:[%s1106] sm:$0xff] %v1120
            %1129 = vst [vmem:[%s1108] sm:$0xff] %v1123
            %1130 = vst [vmem:[%s1110] sm:$0xff] %v1126
            %s1131 = smov [#allocation10]
            %s1132 = scalar_lea.vmem %s1131, 24
            %s1133 = smov [#allocation11]
            %s1134 = scalar_lea.vmem %s1133, 24
            %s1135 = smov [#allocation12]
            %s1136 = scalar_lea.vmem %s1135, 24
            %s1137 = smov [#allocation13]
            %s1138 = scalar_lea.vmem %s1137, 24
            %v1139 = vld [vmem:[%s1132] sm:$0xff]
            %v1140 = vld [vmem:[%s1134] sm:$0xff]
            %v1141 = vld [vmem:[%s1136] sm:$0xff]
            %v1142 = vld [vmem:[%s1138] sm:$0xff]
            %v1143 = vmul.f32 %v1048, %v1139
            %v1144 = vmul.f32 %v1050, %v1140
            %v1145 = vsub.f32 %v1143, %v1144
            %v1146 = vmul.f32 %v1050, %v1139
            %v1147 = vmul.f32 %v1048, %v1140
            %v1148 = vadd.f32 %v1146, %v1147
            %v1149 = vmul.f32 %v1048, %v1141
            %v1150 = vmul.f32 %v1050, %v1142
            %v1151 = vsub.f32 %v1149, %v1150
            %v1152 = vmul.f32 %v1050, %v1141
            %v1153 = vmul.f32 %v1048, %v1142
            %v1154 = vadd.f32 %v1152, %v1153
            %1155 = vst [vmem:[%s1132] sm:$0xff] %v1145
            %1156 = vst [vmem:[%s1134] sm:$0xff] %v1148
            %1157 = vst [vmem:[%s1136] sm:$0xff] %v1151
            %1158 = vst [vmem:[%s1138] sm:$0xff] %v1154
            %s1159 = smov [#allocation10]
            %s1160 = smov [#allocation17]
            %v1161 = vlaneseq
            %v1162 = vand.u32 %v1161, 127
            %v1163 = vmov %v1162
            %v1164 = vlaneseq
            %v1165 = vshrl.u32 %v1164, 7
            %v1166 = vmov %v1165
            %v1167 = vld [vmem:[%s1160] ss:$0 sm:$0xff]
            %v1168 = vld [vmem:[%s1159] sm:$0xff]
            %vm1171 = vcmp.eq.s32.totalorder %v1166, %v1163
            %v1172 = vsel %vm1171, %v1167, %v1168
            %1173 = vst [vmem:[%s1159] sm:$0xff] %v1172
            %v1174 = vld [vmem:[%s1160] ss:$0 sm:$0xff]
            %s1175 = scalar_lea.vmem %s1159, 8
            %v1176 = vld [vmem:[%s1175] sm:$0xff]
            %v1178 = vadd.s32 %v1166, 8
            %vm1179 = vcmp.eq.s32.totalorder %v1178, %v1163
            %v1180 = vsel %vm1179, %v1174, %v1176
            %1181 = vst [vmem:[%s1175] sm:$0xff] %v1180
            %v1182 = vld [vmem:[%s1160] ss:$0 sm:$0xff]
            %s1183 = scalar_lea.vmem %s1159, 16
            %v1184 = vld [vmem:[%s1183] sm:$0xff]
            %v1186 = vadd.s32 %v1166, 16
            %vm1187 = vcmp.eq.s32.totalorder %v1186, %v1163
            %v1188 = vsel %vm1187, %v1182, %v1184
            %1189 = vst [vmem:[%s1183] sm:$0xff] %v1188
            %v1190 = vld [vmem:[%s1160] ss:$0 sm:$0xff]
            %s1191 = scalar_lea.vmem %s1159, 24
            %v1192 = vld [vmem:[%s1191] sm:$0xff]
            %v1194 = vadd.s32 %v1166, 24
            %vm1195 = vcmp.eq.s32.totalorder %v1194, %v1163
            %v1196 = vsel %vm1195, %v1190, %v1192
            %1197 = vst [vmem:[%s1191] sm:$0xff] %v1196
            %s1198 = smov [#allocation11]
            %v1199 = vlaneseq
            %v1200 = vand.u32 %v1199, 127
            %v1201 = vmov %v1200
            %v1202 = vlaneseq
            %v1203 = vshrl.u32 %v1202, 7
            %v1204 = vmov %v1203
            %v1205 = vld [vmem:[%s1198] sm:$0xff]
            %vm1208 = vcmp.eq.s32.totalorder %v1204, %v1201
            %v1209 = vsel %vm1208, 0.0, %v1205
            %1210 = vst [vmem:[%s1198] sm:$0xff] %v1209
            %s1211 = scalar_lea.vmem %s1198, 8
            %v1212 = vld [vmem:[%s1211] sm:$0xff]
            %v1214 = vadd.s32 %v1204, 8
            %vm1215 = vcmp.eq.s32.totalorder %v1214, %v1201
            %v1216 = vsel %vm1215, 0.0, %v1212
            %1217 = vst [vmem:[%s1211] sm:$0xff] %v1216
            %s1218 = scalar_lea.vmem %s1198, 16
            %v1219 = vld [vmem:[%s1218] sm:$0xff]
            %v1221 = vadd.s32 %v1204, 16
            %vm1222 = vcmp.eq.s32.totalorder %v1221, %v1201
            %v1223 = vsel %vm1222, 0.0, %v1219
            %1224 = vst [vmem:[%s1218] sm:$0xff] %v1223
            %s1225 = scalar_lea.vmem %s1198, 24
            %v1226 = vld [vmem:[%s1225] sm:$0xff]
            %v1228 = vadd.s32 %v1204, 24
            %vm1229 = vcmp.eq.s32.totalorder %v1228, %v1201
            %v1230 = vsel %vm1229, 0.0, %v1226
            %1231 = vst [vmem:[%s1225] sm:$0xff] %v1230
            %s1232 = smov [#allocation12]
            %v1233 = vlaneseq
            %v1234 = vand.u32 %v1233, 127
            %v1235 = vmov %v1234
            %v1236 = vlaneseq
            %v1237 = vshrl.u32 %v1236, 7
            %v1238 = vmov %v1237
            %v1239 = vld [vmem:[%s1232] sm:$0xff]
            %vm1242 = vcmp.eq.s32.totalorder %v1238, %v1235
            %v1243 = vsel %vm1242, 0.0, %v1239
            %1244 = vst [vmem:[%s1232] sm:$0xff] %v1243
            %s1245 = scalar_lea.vmem %s1232, 8
            %v1246 = vld [vmem:[%s1245] sm:$0xff]
            %v1248 = vadd.s32 %v1238, 8
            %vm1249 = vcmp.eq.s32.totalorder %v1248, %v1235
            %v1250 = vsel %vm1249, 0.0, %v1246
            %1251 = vst [vmem:[%s1245] sm:$0xff] %v1250
            %s1252 = scalar_lea.vmem %s1232, 16
            %v1253 = vld [vmem:[%s1252] sm:$0xff]
            %v1255 = vadd.s32 %v1238, 16
            %vm1256 = vcmp.eq.s32.totalorder %v1255, %v1235
            %v1257 = vsel %vm1256, 0.0, %v1253
            %1258 = vst [vmem:[%s1252] sm:$0xff] %v1257
            %s1259 = scalar_lea.vmem %s1232, 24
            %v1260 = vld [vmem:[%s1259] sm:$0xff]
            %v1262 = vadd.s32 %v1238, 24
            %vm1263 = vcmp.eq.s32.totalorder %v1262, %v1235
            %v1264 = vsel %vm1263, 0.0, %v1260
            %1265 = vst [vmem:[%s1259] sm:$0xff] %v1264
            %s1266 = smov [#allocation13]
            %s1267 = smov [#allocation18]
            %v1268 = vlaneseq
            %v1269 = vand.u32 %v1268, 127
            %v1270 = vmov %v1269
            %v1271 = vlaneseq
            %v1272 = vshrl.u32 %v1271, 7
            %v1273 = vmov %v1272
            %v1274 = vld [vmem:[%s1267] ss:$0 sm:$0xff]
            %v1275 = vld [vmem:[%s1266] sm:$0xff]
            %vm1278 = vcmp.eq.s32.totalorder %v1273, %v1270
            %v1279 = vsel %vm1278, %v1274, %v1275
            %1280 = vst [vmem:[%s1266] sm:$0xff] %v1279
            %v1281 = vld [vmem:[%s1267] ss:$0 sm:$0xff]
            %s1282 = scalar_lea.vmem %s1266, 8
            %v1283 = vld [vmem:[%s1282] sm:$0xff]
            %v1285 = vadd.s32 %v1273, 8
            %vm1286 = vcmp.eq.s32.totalorder %v1285, %v1270
            %v1287 = vsel %vm1286, %v1281, %v1283
            %1288 = vst [vmem:[%s1282] sm:$0xff] %v1287
            %v1289 = vld [vmem:[%s1267] ss:$0 sm:$0xff]
            %s1290 = scalar_lea.vmem %s1266, 16
            %v1291 = vld [vmem:[%s1290] sm:$0xff]
            %v1293 = vadd.s32 %v1273, 16
            %vm1294 = vcmp.eq.s32.totalorder %v1293, %v1270
            %v1295 = vsel %vm1294, %v1289, %v1291
            %1296 = vst [vmem:[%s1290] sm:$0xff] %v1295
            %v1297 = vld [vmem:[%s1267] ss:$0 sm:$0xff]
            %s1298 = scalar_lea.vmem %s1266, 24
            %v1299 = vld [vmem:[%s1298] sm:$0xff]
            %v1301 = vadd.s32 %v1273, 24
            %vm1302 = vcmp.eq.s32.totalorder %v1301, %v1270
            %v1303 = vsel %vm1302, %v1297, %v1299
            %1304 = vst [vmem:[%s1298] sm:$0xff] %v1303
            %s1305 = smov [#allocation10]
            %s1306 = smov [#allocation11]
            %v1307 = vld [vmem:[%s1306] sm:$0xff]
            %1308 = vrot.lane.b32.xlu0 %v1307, 1
            %v1309 = vpop.permute.xlu0 %1308
            %v1310 = vld [vmem:[%s1305] sm:$0xff]
            %v1311 = vld [vmem:[%s1305] sm:$0xff]
            %1312 = vrot.lane.b32.xlu0 %v1311, 1
            %v1313 = vpop.permute.xlu0 %1312
            %v1314 = vlaneseq
            %v1315 = vand.u32 %v1314, 127
            %vm1316 = vcmp.eq.s32.totalorder %v1315, 0
            %v1317 = vsel %vm1316, %v1311, %v1313
            %v1318 = vlaneseq
            %v1319 = vand.u32 %v1318, 127
            %vm1320 = vcmp.eq.s32.totalorder %v1319, 1
            %v1321 = vsel %vm1320, %v1309, %v1317
            %v1322 = vlaneseq
            %v1323 = vand.u32 %v1322, 127
            %vm1324 = vcmp.ge.s32.totalorder %v1323, 0
            %vm1325 = vcmp.lt.s32.totalorder %v1323, 32
            %vm1326 = vmand %vm1324, %vm1325
            %v1327 = vsel %vm1326, %v1321, 0.0
            %v1328 = vld [vmem:[%s1306] sm:$0xff]
            %1329 = vrot.lane.b32.xlu0 %v1328, 127
            %v1330 = vpop.permute.xlu0 %1329
            %v1331 = vlaneseq
            %v1332 = vand.u32 %v1331, 127
            %vm1333 = vcmp.eq.s32.totalorder %v1332, 31
            %v1334 = vsel %vm1333, %v1310, %v1330
            %s1335 = smov [#allocation10]
            %s1336 = scalar_lea.vmem %s1335, 8
            %s1337 = smov [#allocation11]
            %s1338 = scalar_lea.vmem %s1337, 8
            %v1339 = vld [vmem:[%s1338] sm:$0xff]
            %1340 = vrot.lane.b32.xlu0 %v1339, 1
            %v1341 = vpop.permute.xlu0 %1340
            %v1342 = vld [vmem:[%s1336] sm:$0xff]
            %v1343 = vld [vmem:[%s1336] sm:$0xff]
            %1344 = vrot.lane.b32.xlu0 %v1343, 1
            %v1345 = vpop.permute.xlu0 %1344
            %v1346 = vlaneseq
            %v1347 = vand.u32 %v1346, 127
            %vm1348 = vcmp.eq.s32.totalorder %v1347, 0
            %v1349 = vsel %vm1348, %v1343, %v1345
            %v1350 = vlaneseq
            %v1351 = vand.u32 %v1350, 127
            %vm1352 = vcmp.eq.s32.totalorder %v1351, 1
            %v1353 = vsel %vm1352, %v1341, %v1349
            %v1354 = vlaneseq
            %v1355 = vand.u32 %v1354, 127
            %vm1356 = vcmp.ge.s32.totalorder %v1355, 0
            %vm1357 = vcmp.lt.s32.totalorder %v1355, 32
            %vm1358 = vmand %vm1356, %vm1357
            %v1359 = vsel %vm1358, %v1353, 0.0
            %v1360 = vld [vmem:[%s1338] sm:$0xff]
            %1361 = vrot.lane.b32.xlu0 %v1360, 127
            %v1362 = vpop.permute.xlu0 %1361
            %v1363 = vlaneseq
            %v1364 = vand.u32 %v1363, 127
            %vm1365 = vcmp.eq.s32.totalorder %v1364, 31
            %v1366 = vsel %vm1365, %v1342, %v1362
            %s1367 = smov [#allocation10]
            %s1368 = scalar_lea.vmem %s1367, 16
            %s1369 = smov [#allocation11]
            %s1370 = scalar_lea.vmem %s1369, 16
            %v1371 = vld [vmem:[%s1370] sm:$0xff]
            %1372 = vrot.lane.b32.xlu0 %v1371, 1
            %v1373 = vpop.permute.xlu0 %1372
            %v1374 = vld [vmem:[%s1368] sm:$0xff]
            %v1375 = vld [vmem:[%s1368] sm:$0xff]
            %1376 = vrot.lane.b32.xlu0 %v1375, 1
            %v1377 = vpop.permute.xlu0 %1376
            %v1378 = vlaneseq
            %v1379 = vand.u32 %v1378, 127
            %vm1380 = vcmp.eq.s32.totalorder %v1379, 0
            %v1381 = vsel %vm1380, %v1375, %v1377
            %v1382 = vlaneseq
            %v1383 = vand.u32 %v1382, 127
            %vm1384 = vcmp.eq.s32.totalorder %v1383, 1
            %v1385 = vsel %vm1384, %v1373, %v1381
            %v1386 = vlaneseq
            %v1387 = vand.u32 %v1386, 127
            %vm1388 = vcmp.ge.s32.totalorder %v1387, 0
            %vm1389 = vcmp.lt.s32.totalorder %v1387, 32
            %vm1390 = vmand %vm1388, %vm1389
            %v1391 = vsel %vm1390, %v1385, 0.0
            %v1392 = vld [vmem:[%s1370] sm:$0xff]
            %1393 = vrot.lane.b32.xlu0 %v1392, 127
            %v1394 = vpop.permute.xlu0 %1393
            %v1395 = vlaneseq
            %v1396 = vand.u32 %v1395, 127
            %vm1397 = vcmp.eq.s32.totalorder %v1396, 31
            %v1398 = vsel %vm1397, %v1374, %v1394
            %s1399 = smov [#allocation10]
            %s1400 = scalar_lea.vmem %s1399, 24
            %s1401 = smov [#allocation11]
            %s1402 = scalar_lea.vmem %s1401, 24
            %v1403 = vld [vmem:[%s1402] sm:$0xff]
            %1404 = vrot.lane.b32.xlu0 %v1403, 1
            %v1405 = vpop.permute.xlu0 %1404
            %v1406 = vld [vmem:[%s1400] sm:$0xff]
            %v1407 = vld [vmem:[%s1400] sm:$0xff]
            %1408 = vrot.lane.b32.xlu0 %v1407, 1
            %v1409 = vpop.permute.xlu0 %1408
            %v1410 = vlaneseq
            %v1411 = vand.u32 %v1410, 127
            %vm1412 = vcmp.eq.s32.totalorder %v1411, 0
            %v1413 = vsel %vm1412, %v1407, %v1409
            %v1414 = vlaneseq
            %v1415 = vand.u32 %v1414, 127
            %vm1416 = vcmp.eq.s32.totalorder %v1415, 1
            %v1417 = vsel %vm1416, %v1405, %v1413
            %v1418 = vlaneseq
            %v1419 = vand.u32 %v1418, 127
            %vm1420 = vcmp.ge.s32.totalorder %v1419, 0
            %vm1421 = vcmp.lt.s32.totalorder %v1419, 32
            %vm1422 = vmand %vm1420, %vm1421
            %v1423 = vsel %vm1422, %v1417, 0.0
            %v1424 = vld [vmem:[%s1402] sm:$0xff]
            %1425 = vrot.lane.b32.xlu0 %v1424, 127
            %v1426 = vpop.permute.xlu0 %1425
            %v1427 = vlaneseq
            %v1428 = vand.u32 %v1427, 127
            %vm1429 = vcmp.eq.s32.totalorder %v1428, 31
            %v1430 = vsel %vm1429, %v1406, %v1426
            %1431 = vst [vmem:[%s1305] sm:$0xff] %v1327
            %1432 = vst [vmem:[%s1306] sm:$0xff] %v1334
            %1433 = vst [vmem:[%s1336] sm:$0xff] %v1359
            %1434 = vst [vmem:[%s1338] sm:$0xff] %v1366
            %1435 = vst [vmem:[%s1368] sm:$0xff] %v1391
            %1436 = vst [vmem:[%s1370] sm:$0xff] %v1398
            %1437 = vst [vmem:[%s1400] sm:$0xff] %v1423
            %1438 = vst [vmem:[%s1402] sm:$0xff] %v1430
            %s1439 = smov [#allocation12]
            %s1440 = smov [#allocation13]
            %v1441 = vld [vmem:[%s1440] sm:$0xff]
            %1442 = vrot.lane.b32.xlu0 %v1441, 1
            %v1443 = vpop.permute.xlu0 %1442
            %v1444 = vld [vmem:[%s1439] sm:$0xff]
            %v1445 = vld [vmem:[%s1439] sm:$0xff]
            %1446 = vrot.lane.b32.xlu0 %v1445, 1
            %v1447 = vpop.permute.xlu0 %1446
            %v1448 = vlaneseq
            %v1449 = vand.u32 %v1448, 127
            %vm1450 = vcmp.eq.s32.totalorder %v1449, 0
            %v1451 = vsel %vm1450, %v1445, %v1447
            %v1452 = vlaneseq
            %v1453 = vand.u32 %v1452, 127
            %vm1454 = vcmp.eq.s32.totalorder %v1453, 1
            %v1455 = vsel %vm1454, %v1443, %v1451
            %v1456 = vlaneseq
            %v1457 = vand.u32 %v1456, 127
            %vm1458 = vcmp.ge.s32.totalorder %v1457, 0
            %vm1459 = vcmp.lt.s32.totalorder %v1457, 32
            %vm1460 = vmand %vm1458, %vm1459
            %v1461 = vsel %vm1460, %v1455, 0.0
            %v1462 = vld [vmem:[%s1440] sm:$0xff]
            %1463 = vrot.lane.b32.xlu0 %v1462, 127
            %v1464 = vpop.permute.xlu0 %1463
            %v1465 = vlaneseq
            %v1466 = vand.u32 %v1465, 127
            %vm1467 = vcmp.eq.s32.totalorder %v1466, 31
            %v1468 = vsel %vm1467, %v1444, %v1464
            %s1469 = smov [#allocation12]
            %s1470 = scalar_lea.vmem %s1469, 8
            %s1471 = smov [#allocation13]
            %s1472 = scalar_lea.vmem %s1471, 8
            %v1473 = vld [vmem:[%s1472] sm:$0xff]
            %1474 = vrot.lane.b32.xlu0 %v1473, 1
            %v1475 = vpop.permute.xlu0 %1474
            %v1476 = vld [vmem:[%s1470] sm:$0xff]
            %v1477 = vld [vmem:[%s1470] sm:$0xff]
            %1478 = vrot.lane.b32.xlu0 %v1477, 1
            %v1479 = vpop.permute.xlu0 %1478
            %v1480 = vlaneseq
            %v1481 = vand.u32 %v1480, 127
            %vm1482 = vcmp.eq.s32.totalorder %v1481, 0
            %v1483 = vsel %vm1482, %v1477, %v1479
            %v1484 = vlaneseq
            %v1485 = vand.u32 %v1484, 127
            %vm1486 = vcmp.eq.s32.totalorder %v1485, 1
            %v1487 = vsel %vm1486, %v1475, %v1483
            %v1488 = vlaneseq
            %v1489 = vand.u32 %v1488, 127
            %vm1490 = vcmp.ge.s32.totalorder %v1489, 0
            %vm1491 = vcmp.lt.s32.totalorder %v1489, 32
            %vm1492 = vmand %vm1490, %vm1491
            %v1493 = vsel %vm1492, %v1487, 0.0
            %v1494 = vld [vmem:[%s1472] sm:$0xff]
            %1495 = vrot.lane.b32.xlu0 %v1494, 127
            %v1496 = vpop.permute.xlu0 %1495
            %v1497 = vlaneseq
            %v1498 = vand.u32 %v1497, 127
            %vm1499 = vcmp.eq.s32.totalorder %v1498, 31
            %v1500 = vsel %vm1499, %v1476, %v1496
            %s1501 = smov [#allocation12]
            %s1502 = scalar_lea.vmem %s1501, 16
            %s1503 = smov [#allocation13]
            %s1504 = scalar_lea.vmem %s1503, 16
            %v1505 = vld [vmem:[%s1504] sm:$0xff]
            %1506 = vrot.lane.b32.xlu0 %v1505, 1
            %v1507 = vpop.permute.xlu0 %1506
            %v1508 = vld [vmem:[%s1502] sm:$0xff]
            %v1509 = vld [vmem:[%s1502] sm:$0xff]
            %1510 = vrot.lane.b32.xlu0 %v1509, 1
            %v1511 = vpop.permute.xlu0 %1510
            %v1512 = vlaneseq
            %v1513 = vand.u32 %v1512, 127
            %vm1514 = vcmp.eq.s32.totalorder %v1513, 0
            %v1515 = vsel %vm1514, %v1509, %v1511
            %v1516 = vlaneseq
            %v1517 = vand.u32 %v1516, 127
            %vm1518 = vcmp.eq.s32.totalorder %v1517, 1
            %v1519 = vsel %vm1518, %v1507, %v1515
            %v1520 = vlaneseq
            %v1521 = vand.u32 %v1520, 127
            %vm1522 = vcmp.ge.s32.totalorder %v1521, 0
            %vm1523 = vcmp.lt.s32.totalorder %v1521, 32
            %vm1524 = vmand %vm1522, %vm1523
            %v1525 = vsel %vm1524, %v1519, 0.0
            %v1526 = vld [vmem:[%s1504] sm:$0xff]
            %1527 = vrot.lane.b32.xlu0 %v1526, 127
            %v1528 = vpop.permute.xlu0 %1527
            %v1529 = vlaneseq
            %v1530 = vand.u32 %v1529, 127
            %vm1531 = vcmp.eq.s32.totalorder %v1530, 31
            %v1532 = vsel %vm1531, %v1508, %v1528
            %s1533 = smov [#allocation12]
            %s1534 = scalar_lea.vmem %s1533, 24
            %s1535 = smov [#allocation13]
            %s1536 = scalar_lea.vmem %s1535, 24
            %v1537 = vld [vmem:[%s1536] sm:$0xff]
            %1538 = vrot.lane.b32.xlu0 %v1537, 1
            %v1539 = vpop.permute.xlu0 %1538
            %v1540 = vld [vmem:[%s1534] sm:$0xff]
            %v1541 = vld [vmem:[%s1534] sm:$0xff]
            %1542 = vrot.lane.b32.xlu0 %v1541, 1
            %v1543 = vpop.permute.xlu0 %1542
            %v1544 = vlaneseq
            %v1545 = vand.u32 %v1544, 127
            %vm1546 = vcmp.eq.s32.totalorder %v1545, 0
            %v1547 = vsel %vm1546, %v1541, %v1543
            %v1548 = vlaneseq
            %v1549 = vand.u32 %v1548, 127
            %vm1550 = vcmp.eq.s32.totalorder %v1549, 1
            %v1551 = vsel %vm1550, %v1539, %v1547
            %v1552 = vlaneseq
            %v1553 = vand.u32 %v1552, 127
            %vm1554 = vcmp.ge.s32.totalorder %v1553, 0
            %vm1555 = vcmp.lt.s32.totalorder %v1553, 32
            %vm1556 = vmand %vm1554, %vm1555
            %v1557 = vsel %vm1556, %v1551, 0.0
            %v1558 = vld [vmem:[%s1536] sm:$0xff]
            %1559 = vrot.lane.b32.xlu0 %v1558, 127
            %v1560 = vpop.permute.xlu0 %1559
            %v1561 = vlaneseq
            %v1562 = vand.u32 %v1561, 127
            %vm1563 = vcmp.eq.s32.totalorder %v1562, 31
            %v1564 = vsel %vm1563, %v1540, %v1560
            %1565 = vst [vmem:[%s1439] sm:$0xff] %v1461
            %1566 = vst [vmem:[%s1440] sm:$0xff] %v1468
            %1567 = vst [vmem:[%s1470] sm:$0xff] %v1493
            %1568 = vst [vmem:[%s1472] sm:$0xff] %v1500
            %1569 = vst [vmem:[%s1502] sm:$0xff] %v1525
            %1570 = vst [vmem:[%s1504] sm:$0xff] %v1532
            %1571 = vst [vmem:[%s1534] sm:$0xff] %v1557
            %1572 = vst [vmem:[%s1536] sm:$0xff] %v1564
            %s1573 = smov [#allocation10]
            %s1574 = smov [#allocation12]
            %v1575 = vld [vmem:[%s1573] ss:$0 sm:$0xff]
            %s1577 = scalar_lea.vmem %s1573, 4294967295
            %v1578 = vld [vmem:[%s1577] sm:$0xfe]
            %v1579 = vlaneseq
            %v1580 = vshrl.u32 %v1579, 7
            %vm1581 = vcmp.eq.s32.totalorder %v1580, 0
            %v1582 = vsel %vm1581, %v1575, %v1578
            %s1583 = scalar_lea.vmem %s1573, 7
            %v1584 = vld [vmem:[%s1583] ss:$0 sm:$0xff]
            %1585 = vst [vmem:[%s1573] sm:$0xff] %v1582
            %s1586 = scalar_lea.vmem %s1573, 8
            %s1588 = scalar_lea.vmem %s1586, 4294967295
            %v1589 = vld [vmem:[%s1588] sm:$0xfe]
            %v1590 = vlaneseq
            %v1591 = vshrl.u32 %v1590, 7
            %vm1592 = vcmp.eq.s32.totalorder %v1591, 0
            %v1593 = vsel %vm1592, %v1584, %v1589
            %s1594 = scalar_lea.vmem %s1586, 7
            %v1595 = vld [vmem:[%s1594] ss:$0 sm:$0xff]
            %1596 = vst [vmem:[%s1586] sm:$0xff] %v1593
            %s1597 = scalar_lea.vmem %s1573, 16
            %s1599 = scalar_lea.vmem %s1597, 4294967295
            %v1600 = vld [vmem:[%s1599] sm:$0xfe]
            %v1601 = vlaneseq
            %v1602 = vshrl.u32 %v1601, 7
            %vm1603 = vcmp.eq.s32.totalorder %v1602, 0
            %v1604 = vsel %vm1603, %v1595, %v1600
            %s1605 = scalar_lea.vmem %s1597, 7
            %v1606 = vld [vmem:[%s1605] ss:$0 sm:$0xff]
            %1607 = vst [vmem:[%s1597] sm:$0xff] %v1604
            %s1608 = scalar_lea.vmem %s1573, 24
            %s1610 = scalar_lea.vmem %s1608, 4294967295
            %v1611 = vld [vmem:[%s1610] sm:$0xfe]
            %v1612 = vlaneseq
            %v1613 = vshrl.u32 %v1612, 7
            %vm1614 = vcmp.eq.s32.totalorder %v1613, 0
            %v1615 = vsel %vm1614, %v1606, %v1611
            %s1616 = scalar_lea.vmem %s1608, 7
            %v1617 = vld [vmem:[%s1616] ss:$0 sm:$0xff]
            %1618 = vst [vmem:[%s1608] sm:$0xff] %v1615
            %v1619 = vld [vmem:[%s1574] ss:$0 sm:$0xff]
            %s1620 = scalar_lea.vmem %s1573, 1
            %1621 = vst [vmem:[%s1620] sm:$0x1] %v1619
            %s1622 = scalar_lea.vmem %s1574, 24
            %s1623 = scalar_lea.vmem %s1622, 1
            %v1624 = vld [vmem:[%s1623] sm:$0x7f]
            %v1625 = vlaneseq
            %v1626 = vshrl.u32 %v1625, 7
            %vm1627 = vcmp.eq.s32.totalorder %v1626, 7
            %v1628 = vsel %vm1627, %v1617, %v1624
            %v1629 = vld [vmem:[%s1622] ss:$0 sm:$0xff]
            %1630 = vst [vmem:[%s1622] sm:$0xff] %v1628
            %s1631 = scalar_lea.vmem %s1574, 16
            %s1632 = scalar_lea.vmem %s1631, 1
            %v1633 = vld [vmem:[%s1632] sm:$0x7f]
            %v1634 = vlaneseq
            %v1635 = vshrl.u32 %v1634, 7
            %vm1636 = vcmp.eq.s32.totalorder %v1635, 7
            %v1637 = vsel %vm1636, %v1629, %v1633
            %v1638 = vld [vmem:[%s1631] ss:$0 sm:$0xff]
            %1639 = vst [vmem:[%s1631] sm:$0xff] %v1637
            %s1640 = scalar_lea.vmem %s1574, 8
            %s1641 = scalar_lea.vmem %s1640, 1
            %v1642 = vld [vmem:[%s1641] sm:$0x7f]
            %v1643 = vlaneseq
            %v1644 = vshrl.u32 %v1643, 7
            %vm1645 = vcmp.eq.s32.totalorder %v1644, 7
            %v1646 = vsel %vm1645, %v1638, %v1642
            %v1647 = vld [vmem:[%s1640] ss:$0 sm:$0xff]
            %1648 = vst [vmem:[%s1640] sm:$0xff] %v1646
            %s1649 = scalar_lea.vmem %s1574, 1
            %v1650 = vld [vmem:[%s1649] sm:$0x7f]
            %v1651 = vlaneseq
            %v1652 = vshrl.u32 %v1651, 7
            %vm1653 = vcmp.eq.s32.totalorder %v1652, 7
            %v1654 = vsel %vm1653, %v1647, %v1650
            %v1655 = vld [vmem:[%s1574] ss:$0 sm:$0xff]
            %1656 = vst [vmem:[%s1574] sm:$0xff] %v1654
            %s1657 = smov [#allocation11]
            %s1658 = smov [#allocation13]
            %v1659 = vld [vmem:[%s1657] ss:$0 sm:$0xff]
            %s1661 = scalar_lea.vmem %s1657, 4294967295
            %v1662 = vld [vmem:[%s1661] sm:$0xfe]
            %v1663 = vlaneseq
            %v1664 = vshrl.u32 %v1663, 7
            %vm1665 = vcmp.eq.s32.totalorder %v1664, 0
            %v1666 = vsel %vm1665, %v1659, %v1662
            %s1667 = scalar_lea.vmem %s1657, 7
            %v1668 = vld [vmem:[%s1667] ss:$0 sm:$0xff]
            %1669 = vst [vmem:[%s1657] sm:$0xff] %v1666
            %s1670 = scalar_lea.vmem %s1657, 8
            %s1672 = scalar_lea.vmem %s1670, 4294967295
            %v1673 = vld [vmem:[%s1672] sm:$0xfe]
            %v1674 = vlaneseq
            %v1675 = vshrl.u32 %v1674, 7
            %vm1676 = vcmp.eq.s32.totalorder %v1675, 0
            %v1677 = vsel %vm1676, %v1668, %v1673
            %s1678 = scalar_lea.vmem %s1670, 7
            %v1679 = vld [vmem:[%s1678] ss:$0 sm:$0xff]
            %1680 = vst [vmem:[%s1670] sm:$0xff] %v1677
            %s1681 = scalar_lea.vmem %s1657, 16
            %s1683 = scalar_lea.vmem %s1681, 4294967295
            %v1684 = vld [vmem:[%s1683] sm:$0xfe]
            %v1685 = vlaneseq
            %v1686 = vshrl.u32 %v1685, 7
            %vm1687 = vcmp.eq.s32.totalorder %v1686, 0
            %v1688 = vsel %vm1687, %v1679, %v1684
            %s1689 = scalar_lea.vmem %s1681, 7
            %v1690 = vld [vmem:[%s1689] ss:$0 sm:$0xff]
            %1691 = vst [vmem:[%s1681] sm:$0xff] %v1688
            %s1692 = scalar_lea.vmem %s1657, 24
            %s1694 = scalar_lea.vmem %s1692, 4294967295
            %v1695 = vld [vmem:[%s1694] sm:$0xfe]
            %v1696 = vlaneseq
            %v1697 = vshrl.u32 %v1696, 7
            %vm1698 = vcmp.eq.s32.totalorder %v1697, 0
            %v1699 = vsel %vm1698, %v1690, %v1695
            %s1700 = scalar_lea.vmem %s1692, 7
            %v1701 = vld [vmem:[%s1700] ss:$0 sm:$0xff]
            %1702 = vst [vmem:[%s1692] sm:$0xff] %v1699
            %v1703 = vld [vmem:[%s1658] ss:$0 sm:$0xff]
            %s1704 = scalar_lea.vmem %s1657, 1
            %1705 = vst [vmem:[%s1704] sm:$0x1] %v1703
            %s1706 = scalar_lea.vmem %s1658, 24
            %s1707 = scalar_lea.vmem %s1706, 1
            %v1708 = vld [vmem:[%s1707] sm:$0x7f]
            %v1709 = vlaneseq
            %v1710 = vshrl.u32 %v1709, 7
            %vm1711 = vcmp.eq.s32.totalorder %v1710, 7
            %v1712 = vsel %vm1711, %v1701, %v1708
            %v1713 = vld [vmem:[%s1706] ss:$0 sm:$0xff]
            %1714 = vst [vmem:[%s1706] sm:$0xff] %v1712
            %s1715 = scalar_lea.vmem %s1658, 16
            %s1716 = scalar_lea.vmem %s1715, 1
            %v1717 = vld [vmem:[%s1716] sm:$0x7f]
            %v1718 = vlaneseq
            %v1719 = vshrl.u32 %v1718, 7
            %vm1720 = vcmp.eq.s32.totalorder %v1719, 7
            %v1721 = vsel %vm1720, %v1713, %v1717
            %v1722 = vld [vmem:[%s1715] ss:$0 sm:$0xff]
            %1723 = vst [vmem:[%s1715] sm:$0xff] %v1721
            %s1724 = scalar_lea.vmem %s1658, 8
            %s1725 = scalar_lea.vmem %s1724, 1
            %v1726 = vld [vmem:[%s1725] sm:$0x7f]
            %v1727 = vlaneseq
            %v1728 = vshrl.u32 %v1727, 7
            %vm1729 = vcmp.eq.s32.totalorder %v1728, 7
            %v1730 = vsel %vm1729, %v1722, %v1726
            %v1731 = vld [vmem:[%s1724] ss:$0 sm:$0xff]
            %1732 = vst [vmem:[%s1724] sm:$0xff] %v1730
            %s1733 = scalar_lea.vmem %s1658, 1
            %v1734 = vld [vmem:[%s1733] sm:$0x7f]
            %v1735 = vlaneseq
            %v1736 = vshrl.u32 %v1735, 7
            %vm1737 = vcmp.eq.s32.totalorder %v1736, 7
            %v1738 = vsel %vm1737, %v1731, %v1734
            %v1739 = vld [vmem:[%s1658] ss:$0 sm:$0xff]
            %1740 = vst [vmem:[%s1658] sm:$0xff] %v1738
            %s1741 = smov [#allocation21]
            %v1742 = vld [vmem:[%s1741] sm:$0xff]
            %s1743 = smov [#allocation22]
            %v1744 = vld [vmem:[%s1743] sm:$0xff]
            %s1745 = smov %s257
            %s1746 = smov %s261
            %s1747 = smov %s265
            %s1748 = smov %s269
            %v1749 = vld [vmem:[%s1745] sm:$0xff]
            %v1750 = vld [vmem:[%s1746] sm:$0xff]
            %v1751 = vld [vmem:[%s1747] sm:$0xff]
            %v1752 = vld [vmem:[%s1748] sm:$0xff]
            %v1753 = vmul.f32 %v1742, %v1749
            %v1754 = vmul.f32 %v1744, %v1751
            %v1755 = vsub.f32 %v1753, %v1754
            %v1756 = vmul.f32 %v1742, %v1750
            %v1757 = vmul.f32 %v1744, %v1752
            %v1758 = vsub.f32 %v1756, %v1757
            %v1759 = vmul.f32 %v1744, %v1749
            %v1760 = vmul.f32 %v1742, %v1751
            %v1761 = vadd.f32 %v1759, %v1760
            %v1762 = vmul.f32 %v1744, %v1750
            %v1763 = vmul.f32 %v1742, %v1752
            %v1764 = vadd.f32 %v1762, %v1763
            %1765 = vst [vmem:[%s1745] sm:$0xff] %v1755
            %1766 = vst [vmem:[%s1746] sm:$0xff] %v1758
            %1767 = vst [vmem:[%s1747] sm:$0xff] %v1761
            %1768 = vst [vmem:[%s1748] sm:$0xff] %v1764
            %s1769 = smov [#allocation21]
            %s1770 = scalar_lea.vmem %s1769, 8
            %v1771 = vld [vmem:[%s1770] sm:$0xff]
            %s1772 = smov [#allocation22]
            %s1773 = scalar_lea.vmem %s1772, 8
            %v1774 = vld [vmem:[%s1773] sm:$0xff]
            %s1775 = smov %s257
            %s1776 = scalar_lea.vmem %s1775, 8
            %s1777 = smov %s261
            %s1778 = scalar_lea.vmem %s1777, 8
            %s1779 = smov %s265
            %s1780 = scalar_lea.vmem %s1779, 8
            %s1781 = smov %s269
            %s1782 = scalar_lea.vmem %s1781, 8
            %v1783 = vld [vmem:[%s1776] sm:$0xff]
            %v1784 = vld [vmem:[%s1778] sm:$0xff]
            %v1785 = vld [vmem:[%s1780] sm:$0xff]
            %v1786 = vld [vmem:[%s1782] sm:$0xff]
            %v1787 = vmul.f32 %v1771, %v1783
            %v1788 = vmul.f32 %v1774, %v1785
            %v1789 = vsub.f32 %v1787, %v1788
            %v1790 = vmul.f32 %v1771, %v1784
            %v1791 = vmul.f32 %v1774, %v1786
            %v1792 = vsub.f32 %v1790, %v1791
            %v1793 = vmul.f32 %v1774, %v1783
            %v1794 = vmul.f32 %v1771, %v1785
            %v1795 = vadd.f32 %v1793, %v1794
            %v1796 = vmul.f32 %v1774, %v1784
            %v1797 = vmul.f32 %v1771, %v1786
            %v1798 = vadd.f32 %v1796, %v1797
            %1799 = vst [vmem:[%s1776] sm:$0xff] %v1789
            %1800 = vst [vmem:[%s1778] sm:$0xff] %v1792
            %1801 = vst [vmem:[%s1780] sm:$0xff] %v1795
            %1802 = vst [vmem:[%s1782] sm:$0xff] %v1798
            %s1803 = smov [#allocation21]
            %s1804 = scalar_lea.vmem %s1803, 16
            %v1805 = vld [vmem:[%s1804] sm:$0xff]
            %s1806 = smov [#allocation22]
            %s1807 = scalar_lea.vmem %s1806, 16
            %v1808 = vld [vmem:[%s1807] sm:$0xff]
            %s1809 = smov %s257
            %s1810 = scalar_lea.vmem %s1809, 16
            %s1811 = smov %s261
            %s1812 = scalar_lea.vmem %s1811, 16
            %s1813 = smov %s265
            %s1814 = scalar_lea.vmem %s1813, 16
            %s1815 = smov %s269
            %s1816 = scalar_lea.vmem %s1815, 16
            %v1817 = vld [vmem:[%s1810] sm:$0xff]
            %v1818 = vld [vmem:[%s1812] sm:$0xff]
            %v1819 = vld [vmem:[%s1814] sm:$0xff]
            %v1820 = vld [vmem:[%s1816] sm:$0xff]
            %v1821 = vmul.f32 %v1805, %v1817
            %v1822 = vmul.f32 %v1808, %v1819
            %v1823 = vsub.f32 %v1821, %v1822
            %v1824 = vmul.f32 %v1805, %v1818
            %v1825 = vmul.f32 %v1808, %v1820
            %v1826 = vsub.f32 %v1824, %v1825
            %v1827 = vmul.f32 %v1808, %v1817
            %v1828 = vmul.f32 %v1805, %v1819
            %v1829 = vadd.f32 %v1827, %v1828
            %v1830 = vmul.f32 %v1808, %v1818
            %v1831 = vmul.f32 %v1805, %v1820
            %v1832 = vadd.f32 %v1830, %v1831
            %1833 = vst [vmem:[%s1810] sm:$0xff] %v1823
            %1834 = vst [vmem:[%s1812] sm:$0xff] %v1826
            %1835 = vst [vmem:[%s1814] sm:$0xff] %v1829
            %1836 = vst [vmem:[%s1816] sm:$0xff] %v1832
            %s1837 = smov [#allocation21]
            %s1838 = scalar_lea.vmem %s1837, 24
            %v1839 = vld [vmem:[%s1838] sm:$0xff]
            %s1840 = smov [#allocation22]
            %s1841 = scalar_lea.vmem %s1840, 24
            %v1842 = vld [vmem:[%s1841] sm:$0xff]
            %s1843 = smov %s257
            %s1844 = scalar_lea.vmem %s1843, 24
            %s1845 = smov %s261
            %s1846 = scalar_lea.vmem %s1845, 24
            %s1847 = smov %s265
            %s1848 = scalar_lea.vmem %s1847, 24
            %s1849 = smov %s269
            %s1850 = scalar_lea.vmem %s1849, 24
            %v1851 = vld [vmem:[%s1844] sm:$0xff]
            %v1852 = vld [vmem:[%s1846] sm:$0xff]
            %v1853 = vld [vmem:[%s1848] sm:$0xff]
            %v1854 = vld [vmem:[%s1850] sm:$0xff]
            %v1855 = vmul.f32 %v1839, %v1851
            %v1856 = vmul.f32 %v1842, %v1853
            %v1857 = vsub.f32 %v1855, %v1856
            %v1858 = vmul.f32 %v1839, %v1852
            %v1859 = vmul.f32 %v1842, %v1854
            %v1860 = vsub.f32 %v1858, %v1859
            %v1861 = vmul.f32 %v1842, %v1851
            %v1862 = vmul.f32 %v1839, %v1853
            %v1863 = vadd.f32 %v1861, %v1862
            %v1864 = vmul.f32 %v1842, %v1852
            %v1865 = vmul.f32 %v1839, %v1854
            %v1866 = vadd.f32 %v1864, %v1865
            %1867 = vst [vmem:[%s1844] sm:$0xff] %v1857
            %1868 = vst [vmem:[%s1846] sm:$0xff] %v1860
            %1869 = vst [vmem:[%s1848] sm:$0xff] %v1863
            %1870 = vst [vmem:[%s1850] sm:$0xff] %v1866
            %s1871 = smov %s257
            %s1872 = smov %s265
            %v1873 = vld [vmem:[%s1871] ss:$0 sm:$0xff]
            %s1875 = scalar_lea.vmem %s1871, 4294967295
            %v1876 = vld [vmem:[%s1875] sm:$0xfe]
            %v1877 = vlaneseq
            %v1878 = vshrl.u32 %v1877, 7
            %vm1879 = vcmp.eq.s32.totalorder %v1878, 0
            %v1880 = vsel %vm1879, %v1873, %v1876
            %s1881 = scalar_lea.vmem %s1871, 7
            %v1882 = vld [vmem:[%s1881] ss:$0 sm:$0xff]
            %1883 = vst [vmem:[%s1871] sm:$0xff] %v1880
            %s1884 = scalar_lea.vmem %s1871, 8
            %s1886 = scalar_lea.vmem %s1884, 4294967295
            %v1887 = vld [vmem:[%s1886] sm:$0xfe]
            %v1888 = vlaneseq
            %v1889 = vshrl.u32 %v1888, 7
            %vm1890 = vcmp.eq.s32.totalorder %v1889, 0
            %v1891 = vsel %vm1890, %v1882, %v1887
            %s1892 = scalar_lea.vmem %s1884, 7
            %v1893 = vld [vmem:[%s1892] ss:$0 sm:$0xff]
            %1894 = vst [vmem:[%s1884] sm:$0xff] %v1891
            %s1895 = scalar_lea.vmem %s1871, 16
            %s1897 = scalar_lea.vmem %s1895, 4294967295
            %v1898 = vld [vmem:[%s1897] sm:$0xfe]
            %v1899 = vlaneseq
            %v1900 = vshrl.u32 %v1899, 7
            %vm1901 = vcmp.eq.s32.totalorder %v1900, 0
            %v1902 = vsel %vm1901, %v1893, %v1898
            %s1903 = scalar_lea.vmem %s1895, 7
            %v1904 = vld [vmem:[%s1903] ss:$0 sm:$0xff]
            %1905 = vst [vmem:[%s1895] sm:$0xff] %v1902
            %s1906 = scalar_lea.vmem %s1871, 24
            %s1908 = scalar_lea.vmem %s1906, 4294967295
            %v1909 = vld [vmem:[%s1908] sm:$0xfe]
            %v1910 = vlaneseq
            %v1911 = vshrl.u32 %v1910, 7
            %vm1912 = vcmp.eq.s32.totalorder %v1911, 0
            %v1913 = vsel %vm1912, %v1904, %v1909
            %s1914 = scalar_lea.vmem %s1906, 7
            %v1915 = vld [vmem:[%s1914] ss:$0 sm:$0xff]
            %1916 = vst [vmem:[%s1906] sm:$0xff] %v1913
            %v1917 = vld [vmem:[%s1872] ss:$0 sm:$0xff]
            %s1918 = scalar_lea.vmem %s1871, 1
            %1919 = vst [vmem:[%s1918] sm:$0x1] %v1917
            %s1920 = scalar_lea.vmem %s1872, 24
            %s1921 = scalar_lea.vmem %s1920, 1
            %v1922 = vld [vmem:[%s1921] sm:$0x7f]
            %v1923 = vlaneseq
            %v1924 = vshrl.u32 %v1923, 7
            %vm1925 = vcmp.eq.s32.totalorder %v1924, 7
            %v1926 = vsel %vm1925, %v1915, %v1922
            %v1927 = vld [vmem:[%s1920] ss:$0 sm:$0xff]
            %1928 = vst [vmem:[%s1920] sm:$0xff] %v1926
            %s1929 = scalar_lea.vmem %s1872, 16
            %s1930 = scalar_lea.vmem %s1929, 1
            %v1931 = vld [vmem:[%s1930] sm:$0x7f]
            %v1932 = vlaneseq
            %v1933 = vshrl.u32 %v1932, 7
            %vm1934 = vcmp.eq.s32.totalorder %v1933, 7
            %v1935 = vsel %vm1934, %v1927, %v1931
            %v1936 = vld [vmem:[%s1929] ss:$0 sm:$0xff]
            %1937 = vst [vmem:[%s1929] sm:$0xff] %v1935
            %s1938 = scalar_lea.vmem %s1872, 8
            %s1939 = scalar_lea.vmem %s1938, 1
            %v1940 = vld [vmem:[%s1939] sm:$0x7f]
            %v1941 = vlaneseq
            %v1942 = vshrl.u32 %v1941, 7
            %vm1943 = vcmp.eq.s32.totalorder %v1942, 7
            %v1944 = vsel %vm1943, %v1936, %v1940
            %v1945 = vld [vmem:[%s1938] ss:$0 sm:$0xff]
            %1946 = vst [vmem:[%s1938] sm:$0xff] %v1944
            %s1947 = scalar_lea.vmem %s1872, 1
            %v1948 = vld [vmem:[%s1947] sm:$0x7f]
            %v1949 = vlaneseq
            %v1950 = vshrl.u32 %v1949, 7
            %vm1951 = vcmp.eq.s32.totalorder %v1950, 7
            %v1952 = vsel %vm1951, %v1945, %v1948
            %v1953 = vld [vmem:[%s1872] ss:$0 sm:$0xff]
            %1954 = vst [vmem:[%s1872] sm:$0xff] %v1952
            %s1955 = smov %s261
            %s1956 = smov %s269
            %v1957 = vld [vmem:[%s1955] ss:$0 sm:$0xff]
            %s1959 = scalar_lea.vmem %s1955, 4294967295
            %v1960 = vld [vmem:[%s1959] sm:$0xfe]
            %v1961 = vlaneseq
            %v1962 = vshrl.u32 %v1961, 7
            %vm1963 = vcmp.eq.s32.totalorder %v1962, 0
            %v1964 = vsel %vm1963, %v1957, %v1960
            %s1965 = scalar_lea.vmem %s1955, 7
            %v1966 = vld [vmem:[%s1965] ss:$0 sm:$0xff]
            %1967 = vst [vmem:[%s1955] sm:$0xff] %v1964
            %s1968 = scalar_lea.vmem %s1955, 8
            %s1970 = scalar_lea.vmem %s1968, 4294967295
            %v1971 = vld [vmem:[%s1970] sm:$0xfe]
            %v1972 = vlaneseq
            %v1973 = vshrl.u32 %v1972, 7
            %vm1974 = vcmp.eq.s32.totalorder %v1973, 0
            %v1975 = vsel %vm1974, %v1966, %v1971
            %s1976 = scalar_lea.vmem %s1968, 7
            %v1977 = vld [vmem:[%s1976] ss:$0 sm:$0xff]
            %1978 = vst [vmem:[%s1968] sm:$0xff] %v1975
            %s1979 = scalar_lea.vmem %s1955, 16
            %s1981 = scalar_lea.vmem %s1979, 4294967295
            %v1982 = vld [vmem:[%s1981] sm:$0xfe]
            %v1983 = vlaneseq
            %v1984 = vshrl.u32 %v1983, 7
            %vm1985 = vcmp.eq.s32.totalorder %v1984, 0
            %v1986 = vsel %vm1985, %v1977, %v1982
            %s1987 = scalar_lea.vmem %s1979, 7
            %v1988 = vld [vmem:[%s1987] ss:$0 sm:$0xff]
            %1989 = vst [vmem:[%s1979] sm:$0xff] %v1986
            %s1990 = scalar_lea.vmem %s1955, 24
            %s1992 = scalar_lea.vmem %s1990, 4294967295
            %v1993 = vld [vmem:[%s1992] sm:$0xfe]
            %v1994 = vlaneseq
            %v1995 = vshrl.u32 %v1994, 7
            %vm1996 = vcmp.eq.s32.totalorder %v1995, 0
            %v1997 = vsel %vm1996, %v1988, %v1993
            %s1998 = scalar_lea.vmem %s1990, 7
            %v1999 = vld [vmem:[%s1998] ss:$0 sm:$0xff]
            %2000 = vst [vmem:[%s1990] sm:$0xff] %v1997
            %v2001 = vld [vmem:[%s1956] ss:$0 sm:$0xff]
            %s2002 = scalar_lea.vmem %s1955, 1
            %2003 = vst [vmem:[%s2002] sm:$0x1] %v2001
            %s2004 = scalar_lea.vmem %s1956, 24
            %s2005 = scalar_lea.vmem %s2004, 1
            %v2006 = vld [vmem:[%s2005] sm:$0x7f]
            %v2007 = vlaneseq
            %v2008 = vshrl.u32 %v2007, 7
            %vm2009 = vcmp.eq.s32.totalorder %v2008, 7
            %v2010 = vsel %vm2009, %v1999, %v2006
            %v2011 = vld [vmem:[%s2004] ss:$0 sm:$0xff]
            %2012 = vst [vmem:[%s2004] sm:$0xff] %v2010
            %s2013 = scalar_lea.vmem %s1956, 16
            %s2014 = scalar_lea.vmem %s2013, 1
            %v2015 = vld [vmem:[%s2014] sm:$0x7f]
            %v2016 = vlaneseq
            %v2017 = vshrl.u32 %v2016, 7
            %vm2018 = vcmp.eq.s32.totalorder %v2017, 7
            %v2019 = vsel %vm2018, %v2011, %v2015
            %v2020 = vld [vmem:[%s2013] ss:$0 sm:$0xff]
            %2021 = vst [vmem:[%s2013] sm:$0xff] %v2019
            %s2022 = scalar_lea.vmem %s1956, 8
            %s2023 = scalar_lea.vmem %s2022, 1
            %v2024 = vld [vmem:[%s2023] sm:$0x7f]
            %v2025 = vlaneseq
            %v2026 = vshrl.u32 %v2025, 7
            %vm2027 = vcmp.eq.s32.totalorder %v2026, 7
            %v2028 = vsel %vm2027, %v2020, %v2024
            %v2029 = vld [vmem:[%s2022] ss:$0 sm:$0xff]
            %2030 = vst [vmem:[%s2022] sm:$0xff] %v2028
            %s2031 = scalar_lea.vmem %s1956, 1
            %v2032 = vld [vmem:[%s2031] sm:$0x7f]
            %v2033 = vlaneseq
            %v2034 = vshrl.u32 %v2033, 7
            %vm2035 = vcmp.eq.s32.totalorder %v2034, 7
            %v2036 = vsel %vm2035, %v2029, %v2032
            %v2037 = vld [vmem:[%s1956] ss:$0 sm:$0xff]
            %2038 = vst [vmem:[%s1956] sm:$0xff] %v2036
          $region108: #{custom-call.2} parent=100 // loop_footer
            %s627 = sadd.s32 1, %s623
          $region109: #{custom-call.2} parent=100 // loop_footer_branch
            %622 = sbr.rel target = $region105
          $region110: #{custom-call.2} parent=100 // loop_exit
            _
          %s2039 = sadd.s32 %s429, 1
        $region101: #{custom-call.2} parent=95 // loop_footer
          _
        $region102: #{custom-call.2} parent=95 // loop_footer_branch
          %428 = sbr.rel target = $region98
        $region103: #{custom-call.2} parent=95 // loop_exit
          _
        %s2042 = sand.u32 %s17, 7
        %s2043 = scalar_lea.vmem %s247, %s2042 [#allocation4]
        %s2044 = sand.u32 %s17, 7
        %s2045 = scalar_lea.vmem %s253, %s2044 [#allocation5]
        %s2046 = smov [#allocation10]
        %s2047 = smov %s2043
        %v2048 = vlaneseq
        %v2049 = vand.u32 %v2048, 127
        %v2050 = vmov %v2049
        %v2051 = vlaneseq
        %v2052 = vshrl.u32 %v2051, 7
        %v2053 = vmov %v2052
        %v2054 = vld [vmem:[%s2046] sm:$0xff]
        %vm2057 = vcmp.eq.s32.totalorder %v2053, %v2050
        %v2058 = vsel %vm2057, %v2054, 0.0
        %s2059 = scalar_lea.vmem %s2046, 8
        %v2060 = vld [vmem:[%s2059] sm:$0xff]
        %v2062 = vadd.s32 %v2053, 8
        %vm2063 = vcmp.eq.s32.totalorder %v2062, %v2050
        %v2064 = vsel %vm2063, %v2060, %v2058
        %s2065 = scalar_lea.vmem %s2046, 16
        %v2066 = vld [vmem:[%s2065] sm:$0xff]
        %v2068 = vadd.s32 %v2053, 16
        %vm2069 = vcmp.eq.s32.totalorder %v2068, %v2050
        %v2070 = vsel %vm2069, %v2066, %v2064
        %s2071 = scalar_lea.vmem %s2046, 24
        %v2072 = vld [vmem:[%s2071] sm:$0xff]
        %v2074 = vadd.s32 %v2053, 24
        %vm2075 = vcmp.eq.s32.totalorder %v2074, %v2050
        %v2076 = vsel %vm2075, %v2072, %v2070
        %v2077 = vrot.slane %v2076, 4
        %v2078 = vadd.f32 %v2076, %v2077
        %v2079 = vrot.slane %v2078, 2
        %v2080 = vadd.f32 %v2078, %v2079
        %v2081 = vrot.slane %v2080, 1
        %v2082 = vadd.f32 %v2080, %v2081
        %2083 = vst [vmem:[%s2047] sm:$0x1] %v2082
        %s2084 = smov [#allocation13]
        %s2085 = smov %s2045
        %v2086 = vlaneseq
        %v2087 = vand.u32 %v2086, 127
        %v2088 = vmov %v2087
        %v2089 = vlaneseq
        %v2090 = vshrl.u32 %v2089, 7
        %v2091 = vmov %v2090
        %v2092 = vld [vmem:[%s2084] sm:$0xff]
        %vm2095 = vcmp.eq.s32.totalorder %v2091, %v2088
        %v2096 = vsel %vm2095, %v2092, 0.0
        %s2097 = scalar_lea.vmem %s2084, 8
        %v2098 = vld [vmem:[%s2097] sm:$0xff]
        %v2100 = vadd.s32 %v2091, 8
        %vm2101 = vcmp.eq.s32.totalorder %v2100, %v2088
        %v2102 = vsel %vm2101, %v2098, %v2096
        %s2103 = scalar_lea.vmem %s2084, 16
        %v2104 = vld [vmem:[%s2103] sm:$0xff]
        %v2106 = vadd.s32 %v2091, 16
        %vm2107 = vcmp.eq.s32.totalorder %v2106, %v2088
        %v2108 = vsel %vm2107, %v2104, %v2102
        %s2109 = scalar_lea.vmem %s2084, 24
        %v2110 = vld [vmem:[%s2109] sm:$0xff]
        %v2112 = vadd.s32 %v2091, 24
        %vm2113 = vcmp.eq.s32.totalorder %v2112, %v2088
        %v2114 = vsel %vm2113, %v2110, %v2108
        %v2115 = vrot.slane %v2114, 4
        %v2116 = vadd.f32 %v2114, %v2115
        %v2117 = vrot.slane %v2116, 2
        %v2118 = vadd.f32 %v2116, %v2117
        %v2119 = vrot.slane %v2118, 1
        %v2120 = vadd.f32 %v2118, %v2119
        %2121 = vst [vmem:[%s2085] sm:$0x1] %v2120
        %s2122 = sand.u32 %s27, 1
        %s2123 = sand.u32 %s27, 1
        %s2124 = smul.addr %s2123, 8
        %s2125 = scalar_lea.vmem [#allocation4], %s2124
        %s2126 = sand.u32 %s55, 1
        %s2127 = sand.u32 %s55, 1
        %s2128 = smul.addr %s2127, 8
        %s2129 = scalar_lea.vmem [#allocation5], %s2128
        %s2130 = sand.u32 %s17, 1
        %s2131 = sand.u32 %s17, 1
        %s2132 = smul.addr %s2131, 32
        %s2133 = scalar_lea.vmem [#allocation6], %s2132
        %s2134 = sand.u32 %s17, 1
        %s2135 = sand.u32 %s17, 1
        %s2136 = smul.addr %s2135, 32
        %s2137 = scalar_lea.vmem [#allocation7], %s2136
        %s2138 = sand.u32 %s17, 1
        %s2139 = sand.u32 %s17, 1
        %s2140 = smul.addr %s2139, 32
        %s2141 = scalar_lea.vmem [#allocation8], %s2140
        %s2142 = sand.u32 %s17, 1
        %s2143 = sand.u32 %s17, 1
        %s2144 = smul.addr %s2143, 32
        %s2145 = scalar_lea.vmem [#allocation9], %s2144
        // Predicated region
        $region111: #{custom-call.2} parent=95 // pred_check
          %p2146 = pneg %p37
        $region112: #{custom-call.2} parent=95 // pred_check_branch
          %2148 = sbr.rel (%p2146) target = $region114
        $region113: #{custom-call.2} parent=95 // pred_region
          %s2149 = sshrl.u32 %s17, 3
          %s2150 = smul.addr %s2149, 8
          %s2151 = scalar_lea.vmem %s4, %s2150
          // Predicated region
          $region115: #{custom-call.2} parent=113 // pred_check
            _
          $region116: #{custom-call.2} parent=113 // pred_check_branch
            %2153 = sbr.rel (0) target = $region118
          $region117: #{custom-call.2} parent=113 // pred_region
            // Predicated region
            $region119: #{custom-call.2} parent=117 // pred_check
              _
            $region120: #{custom-call.2} parent=117 // pred_check_branch
              %2155 = sbr.rel (0) target = $region122
            $region121: #{custom-call.2} parent=117 // pred_region
              // Predicated region
              $region134: #{custom-call.2} parent=121 // pred_check
                _
              $region135: #{custom-call.2} parent=121 // pred_check_branch
                %2171 = sbr.rel (0) target = $region137
              $region136: #{custom-call.2} parent=121 // pred_region
                loop: start=0, step=1, limit=1
                $region138: #{custom-call.2} parent=136 // loop_pre_header
                  _
                $region139: #{custom-call.2} parent=136 // loop_header
                  %s2173 = sphi 0, %s2177
                  %p2174 = scmp.ge.s32.totalorder %s2173, 1
                  %s2178 = sphi %s2125, %s2125
                  %s2179 = sphi %s2151, %s2151
                $region140: #{custom-call.2} parent=136 // loop_header_branch
                  %2176 = sbr.rel (%p2174) target = $region144
                $region141: #{custom-call.2} parent=136 // loop_body
                  %v2180 = vld [vmem:[%s2178] sm:$0xff]
                  %2181 = vst [vmem:[%s2179] sm:$0xff] %v2180
                $region142: #{custom-call.2} parent=136 // loop_footer
                  %s2177 = sadd.s32 1, %s2173
                $region143: #{custom-call.2} parent=136 // loop_footer_branch
                  %2172 = sbr.rel target = $region139
                $region144: #{custom-call.2} parent=136 // loop_exit
                  _
              $region137: #{custom-call.2} parent=121 // pred_fallthru
                _
              // Predicated region
              $region145: #{custom-call.2} parent=121 // pred_check
                _
              $region146: #{custom-call.2} parent=121 // pred_check_branch
                %2183 = sbr.rel target = $region148
              $region147: #{custom-call.2} parent=121 // pred_region
                _
              $region148: #{custom-call.2} parent=121 // pred_fallthru
                _
            $region122: #{custom-call.2} parent=117 // pred_fallthru
              _
            // Predicated region
            $region123: #{custom-call.2} parent=117 // pred_check
              _
            $region124: #{custom-call.2} parent=117 // pred_check_branch
              %2157 = sbr.rel target = $region126
            $region125: #{custom-call.2} parent=117 // pred_region
              %s2159 = ssub.s32 256, 1
              loop: start=0, step=1, limit=1
              $region127: #{custom-call.2} parent=125 // loop_pre_header
                _
              $region128: #{custom-call.2} parent=125 // loop_header
                %s2161 = sphi 0, %s2165
                %p2162 = scmp.ge.s32.totalorder %s2161, 1
                %s2166 = sphi %s2125, %s2125
                %s2167 = sphi %s2151, %s2151
              $region129: #{custom-call.2} parent=125 // loop_header_branch
                %2164 = sbr.rel (%p2162) target = $region133
              $region130: #{custom-call.2} parent=125 // loop_body
                %v2168 = vld [vmem:[%s2166] sm:%s2159]
                %2169 = vst [vmem:[%s2167] sm:%s2159] %v2168
              $region131: #{custom-call.2} parent=125 // loop_footer
                %s2165 = sadd.s32 1, %s2161
              $region132: #{custom-call.2} parent=125 // loop_footer_branch
                %2160 = sbr.rel target = $region128
              $region133: #{custom-call.2} parent=125 // loop_exit
                _
            $region126: #{custom-call.2} parent=117 // pred_fallthru
              _
          $region118: #{custom-call.2} parent=113 // pred_fallthru
            _
          %2184 = vnop
        $region114: #{custom-call.2} parent=95 // pred_fallthru
          _
        // Predicated region
        $region149: #{custom-call.2} parent=95 // pred_check
          %p2185 = pneg %p65
        $region150: #{custom-call.2} parent=95 // pred_check_branch
          %2187 = sbr.rel (%p2185) target = $region152
        $region151: #{custom-call.2} parent=95 // pred_region
          %s2188 = sshrl.u32 %s17, 3
          %s2189 = smul.addr %s2188, 8
          %s2190 = scalar_lea.vmem %s5, %s2189
          // Predicated region
          $region153: #{custom-call.2} parent=151 // pred_check
            _
          $region154: #{custom-call.2} parent=151 // pred_check_branch
            %2192 = sbr.rel (0) target = $region156
          $region155: #{custom-call.2} parent=151 // pred_region
            // Predicated region
            $region157: #{custom-call.2} parent=155 // pred_check
              _
            $region158: #{custom-call.2} parent=155 // pred_check_branch
              %2194 = sbr.rel (0) target = $region160
            $region159: #{custom-call.2} parent=155 // pred_region
              // Predicated region
              $region172: #{custom-call.2} parent=159 // pred_check
                _
              $region173: #{custom-call.2} parent=159 // pred_check_branch
                %2210 = sbr.rel (0) target = $region175
              $region174: #{custom-call.2} parent=159 // pred_region
                loop: start=0, step=1, limit=1
                $region176: #{custom-call.2} parent=174 // loop_pre_header
                  _
                $region177: #{custom-call.2} parent=174 // loop_header
                  %s2212 = sphi 0, %s2216
                  %p2213 = scmp.ge.s32.totalorder %s2212, 1
                  %s2217 = sphi %s2129, %s2129
                  %s2218 = sphi %s2190, %s2190
                $region178: #{custom-call.2} parent=174 // loop_header_branch
                  %2215 = sbr.rel (%p2213) target = $region182
                $region179: #{custom-call.2} parent=174 // loop_body
                  %v2219 = vld [vmem:[%s2217] sm:$0xff]
                  %2220 = vst [vmem:[%s2218] sm:$0xff] %v2219
                $region180: #{custom-call.2} parent=174 // loop_footer
                  %s2216 = sadd.s32 1, %s2212
                $region181: #{custom-call.2} parent=174 // loop_footer_branch
                  %2211 = sbr.rel target = $region177
                $region182: #{custom-call.2} parent=174 // loop_exit
                  _
              $region175: #{custom-call.2} parent=159 // pred_fallthru
                _
              // Predicated region
              $region183: #{custom-call.2} parent=159 // pred_check
                _
              $region184: #{custom-call.2} parent=159 // pred_check_branch
                %2222 = sbr.rel target = $region186
              $region185: #{custom-call.2} parent=159 // pred_region
                _
              $region186: #{custom-call.2} parent=159 // pred_fallthru
                _
            $region160: #{custom-call.2} parent=155 // pred_fallthru
              _
            // Predicated region
            $region161: #{custom-call.2} parent=155 // pred_check
              _
            $region162: #{custom-call.2} parent=155 // pred_check_branch
              %2196 = sbr.rel target = $region164
            $region163: #{custom-call.2} parent=155 // pred_region
              %s2198 = ssub.s32 256, 1
              loop: start=0, step=1, limit=1
              $region165: #{custom-call.2} parent=163 // loop_pre_header
                _
              $region166: #{custom-call.2} parent=163 // loop_header
                %s2200 = sphi 0, %s2204
                %p2201 = scmp.ge.s32.totalorder %s2200, 1
                %s2205 = sphi %s2129, %s2129
                %s2206 = sphi %s2190, %s2190
              $region167: #{custom-call.2} parent=163 // loop_header_branch
                %2203 = sbr.rel (%p2201) target = $region171
              $region168: #{custom-call.2} parent=163 // loop_body
                %v2207 = vld [vmem:[%s2205] sm:%s2198]
                %2208 = vst [vmem:[%s2206] sm:%s2198] %v2207
              $region169: #{custom-call.2} parent=163 // loop_footer
                %s2204 = sadd.s32 1, %s2200
              $region170: #{custom-call.2} parent=163 // loop_footer_branch
                %2199 = sbr.rel target = $region166
              $region171: #{custom-call.2} parent=163 // loop_exit
                _
            $region164: #{custom-call.2} parent=155 // pred_fallthru
              _
          $region156: #{custom-call.2} parent=151 // pred_fallthru
            _
          %2223 = vnop
        $region152: #{custom-call.2} parent=95 // pred_fallthru
          _
        %s2224 = smul.addr %s17, 32
        %s2225 = scalar_lea.vmem %s6, %s2224
        // Predicated region
        $region187: #{custom-call.2} parent=95 // pred_check
          _
        $region188: #{custom-call.2} parent=95 // pred_check_branch
          %2227 = sbr.rel (0) target = $region190
        $region189: #{custom-call.2} parent=95 // pred_region
          // Predicated region
          $region191: #{custom-call.2} parent=189 // pred_check
            _
          $region192: #{custom-call.2} parent=189 // pred_check_branch
            %2229 = sbr.rel (0) target = $region194
          $region193: #{custom-call.2} parent=189 // pred_region
            loop: start=0, step=1, limit=1
            $region195: #{custom-call.2} parent=193 // loop_pre_header
              _
            $region196: #{custom-call.2} parent=193 // loop_header
              %s2231 = sphi 0, %s2235
              %p2232 = scmp.ge.s32.totalorder %s2231, 1
              %s2236 = sphi %s2133, %s2133
              %s2237 = sphi %s2225, %s2225
            $region197: #{custom-call.2} parent=193 // loop_header_branch
              %2234 = sbr.rel (%p2232) target = $region201
            $region198: #{custom-call.2} parent=193 // loop_body
              %v2238 = vld [vmem:[%s2236] sm:$0xff]
              %2239 = vst [vmem:[%s2237] sm:$0xff] %v2238
              %v2240 = vld [vmem:[%s2236 + $0x8] sm:$0xff]
              %2241 = vst [vmem:[%s2237 + $0x8] sm:$0xff] %v2240
              %v2242 = vld [vmem:[%s2236 + $0x10] sm:$0xff]
              %2243 = vst [vmem:[%s2237 + $0x10] sm:$0xff] %v2242
              %v2244 = vld [vmem:[%s2236 + $0x18] sm:$0xff]
              %2245 = vst [vmem:[%s2237 + $0x18] sm:$0xff] %v2244
            $region199: #{custom-call.2} parent=193 // loop_footer
              %s2235 = sadd.s32 1, %s2231
            $region200: #{custom-call.2} parent=193 // loop_footer_branch
              %2230 = sbr.rel target = $region196
            $region201: #{custom-call.2} parent=193 // loop_exit
              _
          $region194: #{custom-call.2} parent=189 // pred_fallthru
            _
          // Predicated region
          $region202: #{custom-call.2} parent=189 // pred_check
            _
          $region203: #{custom-call.2} parent=189 // pred_check_branch
            %2247 = sbr.rel target = $region205
          $region204: #{custom-call.2} parent=189 // pred_region
            _
          $region205: #{custom-call.2} parent=189 // pred_fallthru
            _
        $region190: #{custom-call.2} parent=95 // pred_fallthru
          _
        %2248 = vnop
        %s2249 = smul.addr %s17, 32
        %s2250 = scalar_lea.vmem %s7, %s2249
        // Predicated region
        $region206: #{custom-call.2} parent=95 // pred_check
          _
        $region207: #{custom-call.2} parent=95 // pred_check_branch
          %2252 = sbr.rel (0) target = $region209
        $region208: #{custom-call.2} parent=95 // pred_region
          // Predicated region
          $region210: #{custom-call.2} parent=208 // pred_check
            _
          $region211: #{custom-call.2} parent=208 // pred_check_branch
            %2254 = sbr.rel (0) target = $region213
          $region212: #{custom-call.2} parent=208 // pred_region
            loop: start=0, step=1, limit=1
            $region214: #{custom-call.2} parent=212 // loop_pre_header
              _
            $region215: #{custom-call.2} parent=212 // loop_header
              %s2256 = sphi 0, %s2260
              %p2257 = scmp.ge.s32.totalorder %s2256, 1
              %s2261 = sphi %s2137, %s2137
              %s2262 = sphi %s2250, %s2250
            $region216: #{custom-call.2} parent=212 // loop_header_branch
              %2259 = sbr.rel (%p2257) target = $region220
            $region217: #{custom-call.2} parent=212 // loop_body
              %v2263 = vld [vmem:[%s2261] sm:$0xff]
              %2264 = vst [vmem:[%s2262] sm:$0xff] %v2263
              %v2265 = vld [vmem:[%s2261 + $0x8] sm:$0xff]
              %2266 = vst [vmem:[%s2262 + $0x8] sm:$0xff] %v2265
              %v2267 = vld [vmem:[%s2261 + $0x10] sm:$0xff]
              %2268 = vst [vmem:[%s2262 + $0x10] sm:$0xff] %v2267
              %v2269 = vld [vmem:[%s2261 + $0x18] sm:$0xff]
              %2270 = vst [vmem:[%s2262 + $0x18] sm:$0xff] %v2269
            $region218: #{custom-call.2} parent=212 // loop_footer
              %s2260 = sadd.s32 1, %s2256
            $region219: #{custom-call.2} parent=212 // loop_footer_branch
              %2255 = sbr.rel target = $region215
            $region220: #{custom-call.2} parent=212 // loop_exit
              _
          $region213: #{custom-call.2} parent=208 // pred_fallthru
            _
          // Predicated region
          $region221: #{custom-call.2} parent=208 // pred_check
            _
          $region222: #{custom-call.2} parent=208 // pred_check_branch
            %2272 = sbr.rel target = $region224
          $region223: #{custom-call.2} parent=208 // pred_region
            _
          $region224: #{custom-call.2} parent=208 // pred_fallthru
            _
        $region209: #{custom-call.2} parent=95 // pred_fallthru
          _
        %2273 = vnop
        %s2274 = smul.addr %s17, 32
        %s2275 = scalar_lea.vmem %s8, %s2274
        // Predicated region
        $region225: #{custom-call.2} parent=95 // pred_check
          _
        $region226: #{custom-call.2} parent=95 // pred_check_branch
          %2277 = sbr.rel (0) target = $region228
        $region227: #{custom-call.2} parent=95 // pred_region
          // Predicated region
          $region229: #{custom-call.2} parent=227 // pred_check
            _
          $region230: #{custom-call.2} parent=227 // pred_check_branch
            %2279 = sbr.rel (0) target = $region232
          $region231: #{custom-call.2} parent=227 // pred_region
            loop: start=0, step=1, limit=1
            $region233: #{custom-call.2} parent=231 // loop_pre_header
              _
            $region234: #{custom-call.2} parent=231 // loop_header
              %s2281 = sphi 0, %s2285
              %p2282 = scmp.ge.s32.totalorder %s2281, 1
              %s2286 = sphi %s2141, %s2141
              %s2287 = sphi %s2275, %s2275
            $region235: #{custom-call.2} parent=231 // loop_header_branch
              %2284 = sbr.rel (%p2282) target = $region239
            $region236: #{custom-call.2} parent=231 // loop_body
              %v2288 = vld [vmem:[%s2286] sm:$0xff]
              %2289 = vst [vmem:[%s2287] sm:$0xff] %v2288
              %v2290 = vld [vmem:[%s2286 + $0x8] sm:$0xff]
              %2291 = vst [vmem:[%s2287 + $0x8] sm:$0xff] %v2290
              %v2292 = vld [vmem:[%s2286 + $0x10] sm:$0xff]
              %2293 = vst [vmem:[%s2287 + $0x10] sm:$0xff] %v2292
              %v2294 = vld [vmem:[%s2286 + $0x18] sm:$0xff]
              %2295 = vst [vmem:[%s2287 + $0x18] sm:$0xff] %v2294
            $region237: #{custom-call.2} parent=231 // loop_footer
              %s2285 = sadd.s32 1, %s2281
            $region238: #{custom-call.2} parent=231 // loop_footer_branch
              %2280 = sbr.rel target = $region234
            $region239: #{custom-call.2} parent=231 // loop_exit
              _
          $region232: #{custom-call.2} parent=227 // pred_fallthru
            _
          // Predicated region
          $region240: #{custom-call.2} parent=227 // pred_check
            _
          $region241: #{custom-call.2} parent=227 // pred_check_branch
            %2297 = sbr.rel target = $region243
          $region242: #{custom-call.2} parent=227 // pred_region
            _
          $region243: #{custom-call.2} parent=227 // pred_fallthru
            _
        $region228: #{custom-call.2} parent=95 // pred_fallthru
          _
        %2298 = vnop
        %s2299 = smul.addr %s17, 32
        %s2300 = scalar_lea.vmem %s9, %s2299
        // Predicated region
        $region244: #{custom-call.2} parent=95 // pred_check
          _
        $region245: #{custom-call.2} parent=95 // pred_check_branch
          %2302 = sbr.rel (0) target = $region247
        $region246: #{custom-call.2} parent=95 // pred_region
          // Predicated region
          $region248: #{custom-call.2} parent=246 // pred_check
            _
          $region249: #{custom-call.2} parent=246 // pred_check_branch
            %2304 = sbr.rel (0) target = $region251
          $region250: #{custom-call.2} parent=246 // pred_region
            loop: start=0, step=1, limit=1
            $region252: #{custom-call.2} parent=250 // loop_pre_header
              _
            $region253: #{custom-call.2} parent=250 // loop_header
              %s2306 = sphi 0, %s2310
              %p2307 = scmp.ge.s32.totalorder %s2306, 1
              %s2311 = sphi %s2145, %s2145
              %s2312 = sphi %s2300, %s2300
            $region254: #{custom-call.2} parent=250 // loop_header_branch
              %2309 = sbr.rel (%p2307) target = $region258
            $region255: #{custom-call.2} parent=250 // loop_body
              %v2313 = vld [vmem:[%s2311] sm:$0xff]
              %2314 = vst [vmem:[%s2312] sm:$0xff] %v2313
              %v2315 = vld [vmem:[%s2311 + $0x8] sm:$0xff]
              %2316 = vst [vmem:[%s2312 + $0x8] sm:$0xff] %v2315
              %v2317 = vld [vmem:[%s2311 + $0x10] sm:$0xff]
              %2318 = vst [vmem:[%s2312 + $0x10] sm:$0xff] %v2317
              %v2319 = vld [vmem:[%s2311 + $0x18] sm:$0xff]
              %2320 = vst [vmem:[%s2312 + $0x18] sm:$0xff] %v2319
            $region256: #{custom-call.2} parent=250 // loop_footer
              %s2310 = sadd.s32 1, %s2306
            $region257: #{custom-call.2} parent=250 // loop_footer_branch
              %2305 = sbr.rel target = $region253
            $region258: #{custom-call.2} parent=250 // loop_exit
              _
          $region251: #{custom-call.2} parent=246 // pred_fallthru
            _
          // Predicated region
          $region259: #{custom-call.2} parent=246 // pred_check
            _
          $region260: #{custom-call.2} parent=246 // pred_check_branch
            %2322 = sbr.rel target = $region262
          $region261: #{custom-call.2} parent=246 // pred_region
            _
          $region262: #{custom-call.2} parent=246 // pred_fallthru
            _
        $region247: #{custom-call.2} parent=95 // pred_fallthru
          _
        %2323 = vnop
      $region96: #{custom-call.2} parent=5 // pred_fallthru
        _
      %p2324 = scmp.le.s32.totalorder 2, %s12
      // Predicated region
      $region263: #{custom-call.2} parent=5 // pred_check
        %p2325 = pneg %p2324
      $region264: #{custom-call.2} parent=5 // pred_check_branch
        %2327 = sbr.rel (%p2325) target = $region266
      $region265: #{custom-call.2} parent=5 // pred_region
        %s2328 = ssub.s32 %s12, 2
        // Predicated region
        $region267: #{custom-call.2} parent=265 // pred_check
          %p2329 = pneg %p43
        $region268: #{custom-call.2} parent=265 // pred_check_branch
          %2331 = sbr.rel (%p2329) target = $region270
        $region269: #{custom-call.2} parent=265 // pred_region
          %s2332 = sand.u32 %s28, 1
          %s2333 = sand.u32 %s28, 1
          %s2334 = smul.addr %s2333, 8
          %s2335 = scalar_lea.vmem [#allocation4], %s2334
        $region270: #{custom-call.2} parent=265 // pred_fallthru
          _
        // Predicated region
        $region271: #{custom-call.2} parent=265 // pred_check
          %p2336 = pneg %p71
        $region272: #{custom-call.2} parent=265 // pred_check_branch
          %2338 = sbr.rel (%p2336) target = $region274
        $region273: #{custom-call.2} parent=265 // pred_region
          %s2339 = sand.u32 %s56, 1
          %s2340 = sand.u32 %s56, 1
          %s2341 = smul.addr %s2340, 8
          %s2342 = scalar_lea.vmem [#allocation5], %s2341
        $region274: #{custom-call.2} parent=265 // pred_fallthru
          _
        %s2343 = sand.u32 %s18, 1
        %s2344 = sand.u32 %s18, 1
        %s2345 = smul.addr %s2344, 32
        %s2346 = scalar_lea.vmem [#allocation6], %s2345
        %s2347 = sand.u32 %s18, 1
        %s2348 = sand.u32 %s18, 1
        %s2349 = smul.addr %s2348, 32
        %s2350 = scalar_lea.vmem [#allocation7], %s2349
        %s2351 = sand.u32 %s18, 1
        %s2352 = sand.u32 %s18, 1
        %s2353 = smul.addr %s2352, 32
        %s2354 = scalar_lea.vmem [#allocation8], %s2353
        %s2355 = sand.u32 %s18, 1
        %s2356 = sand.u32 %s18, 1
        %s2357 = smul.addr %s2356, 32
        %s2358 = scalar_lea.vmem [#allocation9], %s2357
      $region266: #{custom-call.2} parent=5 // pred_fallthru
        _
    $region6: #{custom-call.2} parent=1 // loop_footer
      %s16 = sadd.s32 1, %s12
    $region7: #{custom-call.2} parent=1 // loop_footer_branch
      %11 = sbr.rel target = $region3
    $region8: #{custom-call.2} parent=1 // loop_exit
      _

// kernel: forward.3
$region0: #{forward.3}
  #allocation0 [shape = 'u32[]', space=smem, size = 0x4, offset = 0x4, fixed_abs, tag = 'smem constant byte address 0x4 - core index']
  #allocation1 [shape = 'u32[144,128]{1,0:T(1,128)}', space=vmem, size = 0x12000, scoped, tag = 'internal scratch']
  %s0 = inlined_call_operand.vmem [shape: f32[8,64,64], index: 0, kind: input, shape index: {}]
  %s1 = inlined_call_operand.vmem [shape: f32[8,1,64], index: 1, kind: input, shape index: {}]
  %s2 = inlined_call_operand.vmem [shape: f32[8,32,32], index: 2, kind: input, shape index: {}]
  %s3 = inlined_call_operand.vmem [shape: f32[8,32,32], index: 3, kind: input, shape index: {}]
  %s4 = inlined_call_operand.vmem [shape: f32[8,1,1], index: 4, kind: output, shape index: {}]
  %s5 = sld [smem:[#allocation0]]
  $region49: #{forward.3} parent=0
    _
  %s7 = ssub.s32 1, %s5
  %s8 = scalar_select 0, %s7, %s5
  loop: start=0, step=1, limit=10
  $region2: #{forward.3} parent=0 // loop_pre_header
    _
  $region3: #{forward.3} parent=0 // loop_header
    %s10 = sphi 0, %s14
    %p11 = scmp.ge.s32.totalorder %s10, 10
    %s20 = sphi 0, %s22
    %s23 = sphi 0, %s20
    %s24 = sphi 0, %s23
    %s40 = sphi 0, %s24
    %s46 = sphi 0, %s48
    %s49 = sphi 0, %s46
    %s50 = sphi 0, %s49
    %s66 = sphi 0, %s50
    %s72 = sphi 0, %s74
    %s75 = sphi 0, %s72
    %s76 = sphi 0, %s75
    %s92 = sphi 0, %s76
    %s98 = sphi 0, %s100
    %s101 = sphi 0, %s98
    %s102 = sphi 0, %s101
    %s118 = sphi 0, %s102
    %s124 = sphi 0, %s126
    %s127 = sphi 0, %s124
    %s128 = sphi 0, %s127
    %s144 = sphi 0, %s128
  $region4: #{forward.3} parent=0 // loop_header_branch
    %13 = sbr.rel (%p11) target = $region8
  $region5: #{forward.3} parent=0 // loop_body
    %s15 = ssub.s32 %s10, 1
    %s16 = ssub.s32 %s10, 2
    %s17 = sadd.s32 %s10, 1
    %s18 = ssub.s32 %s10, %s17
    %p19 = scmp.eq.s32.totalorder %s18, 0
    %s21 = sadd.s32 %s20, 1
    %s22 = scalar_select %p19, %s20, %s21
    %p25 = pneg %p19
    %p26 = scmp.eq.s32.totalorder %s10, 7
    %p27 = por %p25, %p26
    %p28 = scmp.ne.s32.totalorder %s20, %s23
    %p29 = scmp.eq.s32.totalorder %s10, 0
    %p30 = por %p28, %p29
    %p31 = scmp.ne.s32.totalorder %s20, %s23
    %p32 = scmp.eq.s32.totalorder %s15, 7
    %p33 = por %p31, %p32
    %p34 = scmp.ne.s32.totalorder %s23, %s24
    %p35 = scmp.eq.s32.totalorder %s15, 0
    %p36 = por %p34, %p35
    %p37 = scmp.ne.s32.totalorder %s23, %s24
    %p38 = scmp.eq.s32.totalorder %s16, 7
    %p39 = por %p37, %p38
    %p41 = scmp.ne.s32.totalorder %s24, %s40
    %p42 = scmp.eq.s32.totalorder %s16, 0
    %p43 = por %p41, %p42
    %s44 = ssub.s32 %s10, %s17
    %p45 = scmp.eq.s32.totalorder %s44, 0
    %s47 = sadd.s32 %s46, 1
    %s48 = scalar_select %p45, %s46, %s47
    %p51 = pneg %p45
    %p52 = scmp.eq.s32.totalorder %s10, 7
    %p53 = por %p51, %p52
    %p54 = scmp.ne.s32.totalorder %s46, %s49
    %p55 = scmp.eq.s32.totalorder %s10, 0
    %p56 = por %p54, %p55
    %p57 = scmp.ne.s32.totalorder %s46, %s49
    %p58 = scmp.eq.s32.totalorder %s15, 7
    %p59 = por %p57, %p58
    %p60 = scmp.ne.s32.totalorder %s49, %s50
    %p61 = scmp.eq.s32.totalorder %s15, 0
    %p62 = por %p60, %p61
    %p63 = scmp.ne.s32.totalorder %s49, %s50
    %p64 = scmp.eq.s32.totalorder %s16, 7
    %p65 = por %p63, %p64
    %p67 = scmp.ne.s32.totalorder %s50, %s66
    %p68 = scmp.eq.s32.totalorder %s16, 0
    %p69 = por %p67, %p68
    %s70 = ssub.s32 %s10, %s17
    %p71 = scmp.eq.s32.totalorder %s70, 0
    %s73 = sadd.s32 %s72, 1
    %s74 = scalar_select %p71, %s72, %s73
    %p77 = pneg %p71
    %p78 = scmp.eq.s32.totalorder %s10, 7
    %p79 = por %p77, %p78
    %p80 = scmp.ne.s32.totalorder %s72, %s75
    %p81 = scmp.eq.s32.totalorder %s10, 0
    %p82 = por %p80, %p81
    %p83 = scmp.ne.s32.totalorder %s72, %s75
    %p84 = scmp.eq.s32.totalorder %s15, 7
    %p85 = por %p83, %p84
    %p86 = scmp.ne.s32.totalorder %s75, %s76
    %p87 = scmp.eq.s32.totalorder %s15, 0
    %p88 = por %p86, %p87
    %p89 = scmp.ne.s32.totalorder %s75, %s76
    %p90 = scmp.eq.s32.totalorder %s16, 7
    %p91 = por %p89, %p90
    %p93 = scmp.ne.s32.totalorder %s76, %s92
    %p94 = scmp.eq.s32.totalorder %s16, 0
    %p95 = por %p93, %p94
    %s96 = ssub.s32 %s10, %s17
    %p97 = scmp.eq.s32.totalorder %s96, 0
    %s99 = sadd.s32 %s98, 1
    %s100 = scalar_select %p97, %s98, %s99
    %p103 = pneg %p97
    %p104 = scmp.eq.s32.totalorder %s10, 7
    %p105 = por %p103, %p104
    %p106 = scmp.ne.s32.totalorder %s98, %s101
    %p107 = scmp.eq.s32.totalorder %s10, 0
    %p108 = por %p106, %p107
    %p109 = scmp.ne.s32.totalorder %s98, %s101
    %p110 = scmp.eq.s32.totalorder %s15, 7
    %p111 = por %p109, %p110
    %p112 = scmp.ne.s32.totalorder %s101, %s102
    %p113 = scmp.eq.s32.totalorder %s15, 0
    %p114 = por %p112, %p113
    %p115 = scmp.ne.s32.totalorder %s101, %s102
    %p116 = scmp.eq.s32.totalorder %s16, 7
    %p117 = por %p115, %p116
    %p119 = scmp.ne.s32.totalorder %s102, %s118
    %p120 = scmp.eq.s32.totalorder %s16, 0
    %p121 = por %p119, %p120
    %s122 = ssub.s32 %s10, %s17
    %p123 = scmp.eq.s32.totalorder %s122, 0
    %s125 = sadd.s32 %s124, 1
    %s126 = scalar_select %p123, %s124, %s125
    %p129 = pneg %p123
    %p130 = scmp.eq.s32.totalorder %s10, 7
    %p131 = por %p129, %p130
    %p132 = scmp.ne.s32.totalorder %s124, %s127
    %p133 = scmp.eq.s32.totalorder %s10, 0
    %p134 = por %p132, %p133
    %p135 = scmp.ne.s32.totalorder %s124, %s127
    %p136 = scmp.eq.s32.totalorder %s15, 7
    %p137 = por %p135, %p136
    %p138 = scmp.ne.s32.totalorder %s127, %s128
    %p139 = scmp.eq.s32.totalorder %s15, 0
    %p140 = por %p138, %p139
    %p141 = scmp.ne.s32.totalorder %s127, %s128
    %p142 = scmp.eq.s32.totalorder %s16, 7
    %p143 = por %p141, %p142
    %p145 = scmp.ne.s32.totalorder %s128, %s144
    %p146 = scmp.eq.s32.totalorder %s16, 0
    %p147 = por %p145, %p146
    %p148 = scmp.le.s32.totalorder 1, %s10
    %p149 = scmp.lt.s32.totalorder %s10, 9
    %p150 = pnand %p148, %p149
    %p151 = pneg %p150
    // Predicated region
    $region9: #{forward.3} parent=5 // pred_check
      _
    $region10: #{forward.3} parent=5 // pred_check_branch
      %153 = sbr.rel (%p150) target = $region12
    $region11: #{forward.3} parent=5 // pred_region
      %s154 = ssub.s32 %s10, 1
    $region12: #{forward.3} parent=5 // pred_fallthru
      _
    %p155 = scmp.lt.s32.totalorder %s10, 8
    // Predicated region
    $region13: #{forward.3} parent=5 // pred_check
      %p156 = pneg %p155
    $region14: #{forward.3} parent=5 // pred_check_branch
      %158 = sbr.rel (%p156) target = $region16
    $region15: #{forward.3} parent=5 // pred_region
      // Predicated region
      $region17: #{forward.3} parent=15 // pred_check
        %p159 = pneg %p30
      $region18: #{forward.3} parent=15 // pred_check_branch
        %161 = sbr.rel (%p159) target = $region20
      $region19: #{forward.3} parent=15 // pred_region
        %p162 = scmp.lt.s32.totalorder %s10, 7
        %s163 = scalar_select %p162, %s10, 7
        %s164 = smul.addr %s163, 8
        %s165 = smul.addr %s164, 8
        %s166 = scalar_lea.vmem %s0, %s165
      $region20: #{forward.3} parent=15 // pred_fallthru
        _
      // Predicated region
      $region21: #{forward.3} parent=15 // pred_check
        %p167 = pneg %p56
      $region22: #{forward.3} parent=15 // pred_check_branch
        %169 = sbr.rel (%p167) target = $region24
      $region23: #{forward.3} parent=15 // pred_region
        %p170 = scmp.lt.s32.totalorder %s10, 7
        %s171 = scalar_select %p170, %s10, 7
        %s172 = scalar_lea.vmem %s1, %s171
      $region24: #{forward.3} parent=15 // pred_fallthru
        _
      // Predicated region
      $region25: #{forward.3} parent=15 // pred_check
        %p173 = pneg %p82
      $region26: #{forward.3} parent=15 // pred_check_branch
        %175 = sbr.rel (%p173) target = $region28
      $region27: #{forward.3} parent=15 // pred_region
        %p176 = scmp.lt.s32.totalorder %s10, 7
        %s177 = scalar_select %p176, %s10, 7
        %s178 = smul.addr %s177, 4
        %s179 = smul.addr %s178, 8
        %s180 = scalar_lea.vmem %s2, %s179
      $region28: #{forward.3} parent=15 // pred_fallthru
        _
      // Predicated region
      $region29: #{forward.3} parent=15 // pred_check
        %p181 = pneg %p108
      $region30: #{forward.3} parent=15 // pred_check_branch
        %183 = sbr.rel (%p181) target = $region32
      $region31: #{forward.3} parent=15 // pred_region
        %p184 = scmp.lt.s32.totalorder %s10, 7
        %s185 = scalar_select %p184, %s10, 7
        %s186 = smul.addr %s185, 4
        %s187 = smul.addr %s186, 8
        %s188 = scalar_lea.vmem %s3, %s187
      $region32: #{forward.3} parent=15 // pred_fallthru
        _
    $region16: #{forward.3} parent=5 // pred_fallthru
      _
    %p189 = scmp.le.s32.totalorder 1, %s10
    %p190 = scmp.lt.s32.totalorder %s10, 9
    %p191 = pnand %p189, %p190
    %p192 = pneg %p191
    // Predicated region
    $region33: #{forward.3} parent=5 // pred_check
      _
    $region34: #{forward.3} parent=5 // pred_check_branch
      %194 = sbr.rel (%p191) target = $region36
    $region35: #{forward.3} parent=5 // pred_region
      %s195 = ssub.s32 %s10, 1
      %p196 = scmp.lt.s32.totalorder %s15, 7
      %s197 = scalar_select %p196, %s15, 7
      %s198 = smul.addr %s197, 8
      %s199 = smul.addr %s198, 8
      %s200 = scalar_lea.vmem %s0, %s199
      %p201 = pneg %p36
      %p202 = pneg %p33
      %p203 = scmp.lt.s32.totalorder %s15, 7
      %s204 = scalar_select %p203, %s15, 7
      %s205 = scalar_lea.vmem %s1, %s204
      %p206 = pneg %p62
      %p207 = pneg %p59
      %p208 = scmp.lt.s32.totalorder %s15, 7
      %s209 = scalar_select %p208, %s15, 7
      %s210 = smul.addr %s209, 4
      %s211 = smul.addr %s210, 8
      %s212 = scalar_lea.vmem %s2, %s211
      %p213 = pneg %p88
      %p214 = pneg %p85
      %p215 = scmp.lt.s32.totalorder %s15, 7
      %s216 = scalar_select %p215, %s15, 7
      %s217 = smul.addr %s216, 4
      %s218 = smul.addr %s217, 8
      %s219 = scalar_lea.vmem %s3, %s218
      %p220 = pneg %p114
      %p221 = pneg %p111
      %p222 = pneg %p140
      %p223 = pneg %p137
      %p224 = scmp.lt.s32.totalorder %s15, 7
      %s225 = scalar_select %p224, %s15, 7
      %s226 = scalar_lea.vmem %s4, %s225
      %p227 = scmp.lt.s32.totalorder %s15, 7
      %s228 = scalar_select %p227, %s15, 7
      %s229 = smul.addr %s228, 8
      %s230 = smul.addr %s229, 8
      %s231 = scalar_lea.vmem %s0, %s230
      %p232 = scmp.lt.s32.totalorder %s15, 7
      %s233 = scalar_select %p232, %s15, 7
      %s234 = scalar_lea.vmem %s1, %s233
      %p235 = scmp.lt.s32.totalorder %s15, 7
      %s236 = scalar_select %p235, %s15, 7
      %s237 = smul.addr %s236, 4
      %s238 = smul.addr %s237, 8
      %s239 = scalar_lea.vmem %s2, %s238
      %p240 = scmp.lt.s32.totalorder %s15, 7
      %s241 = scalar_select %p240, %s15, 7
      %s242 = smul.addr %s241, 4
      %s243 = smul.addr %s242, 8
      %s244 = scalar_lea.vmem %s3, %s243
      %p245 = scmp.lt.s32.totalorder %s15, 7
      %s246 = scalar_select %p245, %s15, 7
      %s247 = scalar_lea.vmem %s4, %s246
      %v248 = vld [vmem:[%s231] sm:$0xff]
      %v249 = vld [vmem:[%s231 + $0x8] sm:$0xff]
      %v250 = vld [vmem:[%s231 + $0x10] sm:$0xff]
      %v251 = vld [vmem:[%s231 + $0x18] sm:$0xff]
      %v252 = vld [vmem:[%s231 + $0x20] sm:$0xff]
      %v253 = vld [vmem:[%s231 + $0x28] sm:$0xff]
      %v254 = vld [vmem:[%s231 + $0x30] sm:$0xff]
      %v255 = vld [vmem:[%s231 + $0x38] sm:$0xff]
      %v256 = vld [vmem:[%s234] sm:$0x1]
      %v258 = vlaneseq
      %v259 = vshrl.u32 %v258, 7
      %v260 = vsub.s32 0, %v259
      %v261 = vrot.slane %v256, %v260
      %v263 = vmul.f32 %v248, %v261
      %v264 = vmul.f32 %v249, %v261
      %v265 = vmul.f32 %v250, %v261
      %v266 = vmul.f32 %v251, %v261
      %v267 = vmul.f32 %v252, %v261
      %v268 = vmul.f32 %v253, %v261
      %v269 = vmul.f32 %v254, %v261
      %v270 = vmul.f32 %v255, %v261
      %vm271 = vcmask 523264
      %v273 = vsel %vm271, %v263, 0
      %v276 = vsel %vm271, %v264, 0
      %v279 = vsel %vm271, %v265, 0
      %v282 = vsel %vm271, %v266, 0
      %v285 = vsel %vm271, %v267, 0
      %v288 = vsel %vm271, %v268, 0
      %v291 = vsel %vm271, %v269, 0
      %v294 = vsel %vm271, %v270, 0
      %v297 = vsel %vm271, %v248, 0
      %v300 = vsel %vm271, %v249, 0
      %v303 = vsel %vm271, %v250, 0
      %v306 = vsel %vm271, %v251, 0
      %308 = vmatprep.subr.mxu0 0.0
      %309 = vmatpush1.xpose.msra.mxu0 0.0
      %310 = vmatprep.subr.mxu0 0.0
      %311 = vmatpush1.xpose.msra.mxu0 0.0
      %312 = vmatprep.subr.mxu0 0.0
      %313 = vmatpush1.xpose.msra.mxu0 0.0
      %314 = vmatprep.subr.mxu0 0.0
      %315 = vmatpush1.xpose.msra.mxu0 0.0
      %316 = vmatprep.subr.mxu0 0.0
      %317 = vmatpush1.xpose.msra.mxu0 0.0
      %318 = vmatprep.subr.mxu0 0.0
      %319 = vmatpush1.xpose.msra.mxu0 0.0
      %320 = vmatprep.subr.mxu0 0.0
      %321 = vmatpush1.xpose.msra.mxu0 0.0
      %322 = vmatprep.subr.mxu0 0.0
      %323 = vmatpush1.xpose.msra.mxu0 0.0
      %324 = vmatprep.subr.mxu0 0.0
      %325 = vmatpush1.xpose.msra.mxu0 0.0
      %326 = vmatprep.subr.mxu0 0.0
      %327 = vmatpush1.xpose.msra.mxu0 0.0
      %328 = vmatprep.subr.mxu0 0.0
      %329 = vmatpush1.xpose.msra.mxu0 0.0
      %330 = vmatprep.subr.mxu0 0.0
      %331 = vmatpush1.xpose.msra.mxu0 0.0
      %332 = vmatprep.subr.mxu0 0.0
      %333 = vmatpush1.xpose.msra.mxu0 %v306
      %334 = vmatprep.subr.mxu0 0.0
      %335 = vmatpush1.xpose.msra.mxu0 %v303
      %336 = vmatprep.subr.mxu0 0.0
      %337 = vmatpush1.xpose.msra.mxu0 %v300
      %338 = vmatprep.subr.mxu0 0.0
      %339 = vmatpush1.xpose.msra.mxu0 %v297
      %340 = vmatprep.subr.mxu0 0.0
      %341 = vmatpush2.xpose.msra.mxu0 0.0
      %342 = vmatprep.subr.mxu0 0.0
      %343 = vmatpush2.xpose.msra.mxu0 0.0
      %344 = vmatprep.subr.mxu0 0.0
      %345 = vmatpush2.xpose.msra.mxu0 0.0
      %346 = vmatprep.subr.mxu0 0.0
      %347 = vmatpush2.xpose.msra.mxu0 0.0
      %348 = vmatprep.subr.mxu0 0.0
      %349 = vmatpush2.xpose.msra.mxu0 0.0
      %350 = vmatprep.subr.mxu0 0.0
      %351 = vmatpush2.xpose.msra.mxu0 0.0
      %352 = vmatprep.subr.mxu0 0.0
      %353 = vmatpush2.xpose.msra.mxu0 0.0
      %354 = vmatprep.subr.mxu0 0.0
      %355 = vmatpush2.xpose.msra.mxu0 0.0
      %356 = vmatprep.subr.mxu0 0.0
      %357 = vmatpush2.xpose.msra.mxu0 0.0
      %358 = vmatprep.subr.mxu0 0.0
      %359 = vmatpush2.xpose.msra.mxu0 0.0
      %360 = vmatprep.subr.mxu0 0.0
      %361 = vmatpush2.xpose.msra.mxu0 0.0
      %362 = vmatprep.subr.mxu0 0.0
      %363 = vmatpush2.xpose.msra.mxu0 0.0
      %364 = vmatprep.subr.mxu0 0.0
      %365 = vmatpush2.xpose.msra.mxu0 0.0
      %366 = vmatprep.subr.mxu0 0.0
      %367 = vmatpush2.xpose.msra.mxu0 0.0
      %368 = vmatprep.subr.mxu0 0.0
      %369 = vmatpush2.xpose.msra.mxu0 0.0
      %370 = vmatprep.subr.mxu0 0.0
      %371 = vmatpush2.xpose.msra.mxu0 0.0
      %372 = vmatprep.mubr.f32.mxu0 0.0
      %373 = vmatmul.mubr.f32.gmra.mxu0 %v273
      %v374 = vpop.f32.mrf.mxu0
      %v375 = vadd.f32 0.0, %v374
      %v376 = vpop.f32.mrf.mxu0
      %377 = vmatprep.mubr.f32.mxu0 0.0
      %378 = vmatmul.mubr.f32.gmra.mxu0 %v276
      %v379 = vpop.f32.mrf.mxu0
      %v380 = vadd.f32 0.0, %v379
      %v381 = vpop.f32.mrf.mxu0
      %382 = vmatprep.mubr.f32.mxu0 0.0
      %383 = vmatmul.mubr.f32.gmra.mxu0 %v279
      %v384 = vpop.f32.mrf.mxu0
      %v385 = vadd.f32 0.0, %v384
      %v386 = vpop.f32.mrf.mxu0
      %387 = vmatprep.mubr.f32.mxu0 0.0
      %388 = vmatmul.mubr.f32.gmra.mxu0 %v282
      %v389 = vpop.f32.mrf.mxu0
      %v390 = vadd.f32 0.0, %v389
      %v391 = vpop.f32.mrf.mxu0
      %392 = vmatprep.mubr.f32.mxu0 0.0
      %393 = vmatmul.mubr.f32.gmra.mxu0 %v285
      %v394 = vpop.f32.mrf.mxu0
      %v395 = vadd.f32 0.0, %v394
      %v396 = vpop.f32.mrf.mxu0
      %397 = vmatprep.mubr.f32.mxu0 0.0
      %398 = vmatmul.mubr.f32.gmra.mxu0 %v288
      %v399 = vpop.f32.mrf.mxu0
      %v400 = vadd.f32 0.0, %v399
      %v401 = vpop.f32.mrf.mxu0
      %402 = vmatprep.mubr.f32.mxu0 0.0
      %403 = vmatmul.mubr.f32.gmra.mxu0 %v291
      %v404 = vpop.f32.mrf.mxu0
      %v405 = vadd.f32 0.0, %v404
      %v406 = vpop.f32.mrf.mxu0
      %407 = vmatprep.mubr.f32.mxu0 0.0
      %408 = vmatmul.mubr.f32.gmra.mxu0 %v294
      %v409 = vpop.f32.mrf.mxu0
      %v410 = vadd.f32 0.0, %v409
      %v411 = vpop.f32.mrf.mxu0
      %412 = vdwg.mxu0
      %v413 = vld [vmem:[%s239] sm:$0xff]
      %v414 = vld [vmem:[%s239 + $0x8] sm:$0xff]
      %v415 = vld [vmem:[%s239 + $0x10] sm:$0xff]
      %v416 = vld [vmem:[%s239 + $0x18] sm:$0xff]
      %v417 = vmul.f32 %v375, %v413
      %v418 = vmul.f32 %v380, %v414
      %v419 = vmul.f32 %v385, %v415
      %v420 = vmul.f32 %v390, %v416
      %v421 = vld [vmem:[%s244] sm:$0xff]
      %v422 = vld [vmem:[%s244 + $0x8] sm:$0xff]
      %v423 = vld [vmem:[%s244 + $0x10] sm:$0xff]
      %v424 = vld [vmem:[%s244 + $0x18] sm:$0xff]
      %v425 = vmul.f32 %v395, %v421
      %v426 = vmul.f32 %v400, %v422
      %v427 = vmul.f32 %v405, %v423
      %v428 = vmul.f32 %v410, %v424
      %v429 = vadd.f32 %v417, %v425
      %v430 = vadd.f32 %v418, %v426
      %v431 = vadd.f32 %v419, %v427
      %v432 = vadd.f32 %v420, %v428
      %vm433 = vcmask 261120
      %v434 = vsel %vm433, %v429, 0.0
      %435 = vadd.xlane.f32.xlu0 %v434
      %v436 = vpop.xlane.xlu0 %435
      %v437 = vsel %vm433, %v430, 0.0
      %438 = vadd.xlane.f32.xlu0 %v437
      %v439 = vpop.xlane.xlu0 %438
      %v440 = vsel %vm433, %v431, 0.0
      %441 = vadd.xlane.f32.xlu0 %v440
      %v442 = vpop.xlane.xlu0 %441
      %v443 = vsel %vm433, %v432, 0.0
      %444 = vadd.xlane.f32.xlu0 %v443
      %v445 = vpop.xlane.xlu0 %444
      %v446 = vadd.f32 %v436, %v439
      %v447 = vadd.f32 %v446, %v442
      %v448 = vadd.f32 %v447, %v445
      %v449 = vrot.slane %v448, 4
      %v450 = vadd.f32 %v448, %v449
      %v451 = vrot.slane %v450, 2
      %v452 = vadd.f32 %v450, %v451
      %v453 = vrot.slane %v452, 1
      %v454 = vadd.f32 %v452, %v453
      %vm455 = vcmask 0
      %456 = vst.msk [vmem:[%s247] sm:$0x1] %vm455, %v454
      %p457 = scmp.lt.s32.totalorder %s15, 7
      %s458 = scalar_select %p457, %s15, 7
      %s459 = scalar_lea.vmem %s4, %s458
      // Predicated region
      $region37: #{forward.3} parent=35 // pred_check
        %p460 = pneg %p137
      $region38: #{forward.3} parent=35 // pred_check_branch
        %462 = sbr.rel (%p460) target = $region40
      $region39: #{forward.3} parent=35 // pred_region
        _
      $region40: #{forward.3} parent=35 // pred_fallthru
        _
    $region36: #{forward.3} parent=5 // pred_fallthru
      _
    %p463 = scmp.le.s32.totalorder 2, %s10
    // Predicated region
    $region41: #{forward.3} parent=5 // pred_check
      %p464 = pneg %p463
    $region42: #{forward.3} parent=5 // pred_check_branch
      %466 = sbr.rel (%p464) target = $region44
    $region43: #{forward.3} parent=5 // pred_region
      %s467 = ssub.s32 %s10, 2
      // Predicated region
      $region45: #{forward.3} parent=43 // pred_check
        %p468 = pneg %p143
      $region46: #{forward.3} parent=43 // pred_check_branch
        %470 = sbr.rel (%p468) target = $region48
      $region47: #{forward.3} parent=43 // pred_region
        %p471 = scmp.lt.s32.totalorder %s16, 7
        %s472 = scalar_select %p471, %s16, 7
        %s473 = scalar_lea.vmem %s4, %s472
      $region48: #{forward.3} parent=43 // pred_fallthru
        _
    $region44: #{forward.3} parent=5 // pred_fallthru
      _
  $region6: #{forward.3} parent=0 // loop_footer
    %s14 = sadd.s32 1, %s10
  $region7: #{forward.3} parent=0 // loop_footer_branch
    %9 = sbr.rel target = $region3
  $region8: #{forward.3} parent=0 // loop_exit
    _

</llo_original>
